<compile_context>
chip_gen: v7x
topology: tpu7x:2x2x1
jax: 0.10.0
libtpu: 0.0.40
codegen_flags: <defaults>
</compile_context>

<pallas_src>
import math
import functools

import jax
import jax.numpy as jnp
from jax.experimental import pallas as pl
from jax.experimental.pallas import tpu as pltpu


def _layernorm(x, gamma, beta, eps):
    mean = jnp.mean(x, axis=-1, keepdims=True)
    var = jnp.mean((x - mean) ** 2, axis=-1, keepdims=True)
    return (x - mean) * jax.lax.rsqrt(var + eps) * gamma + beta


def _kernel(x_ref, t_ref, m_ref,
            wq_ref, bq_ref, wkv_ref, bkv_ref,
            wo_ref, bo_ref,
            g1_ref, be1_ref, g2_ref, be2_ref,
            w1_ref, b1_ref, w2_ref, b2_ref,
            o_ref, *, n_heads, eps):
    Bt, Lq, D = x_ref.shape
    _, Lkp, _ = t_ref.shape
    H = n_heads
    hd = D // H
    G = Bt * H

    x = x_ref[...].reshape(Bt * Lq, D)          # f32, kept for residual path
    t = t_ref[...].reshape(Bt * Lkp, D)
    m = m_ref[...]                               # (Bt, 1, Lkp) additive f32 mask

    x_bf = x.astype(jnp.bfloat16)
    t_bf = t.astype(jnp.bfloat16)

    # In-projections. Weights pre-transposed to (in, out), bf16; f32 accumulate.
    # Wq / bq are pre-scaled by 1/sqrt(hd) in the wrapper; K/V are fused.
    q = jnp.dot(x_bf, wq_ref[...], preferred_element_type=jnp.float32) + bq_ref[...]
    kv = jnp.dot(t_bf, wkv_ref[...], preferred_element_type=jnp.float32) + bkv_ref[...]
    k = kv[:, :D]
    v = kv[:, D:]

    # Head split: (Bt*L, H*hd) -> (Bt*H, L, hd); minor (lane) dim unchanged.
    def to_heads(a, L):
        a = a.astype(jnp.bfloat16).reshape(Bt, L, H, hd)
        return jnp.transpose(a, (0, 2, 1, 3)).reshape(G, L, hd)

    qh = to_heads(q, Lq)
    kh = to_heads(k, Lkp)
    vh = to_heads(v, Lkp)

    # Scaled dot-product attention batched over (batch * heads).
    s = jnp.einsum('gqd,gkd->gqk', qh, kh,
                   preferred_element_type=jnp.float32)              # (G, Lq, Lkp)
    s = s.reshape(Bt, H * Lq, Lkp) + m                               # fold key mask
    s_max = jnp.max(s, axis=-1, keepdims=True)
    e = jnp.exp(s - s_max)
    denom = jnp.sum(e, axis=-1, keepdims=True)
    p = (e * pl.reciprocal(denom, approx=True)).reshape(G, Lq, Lkp)
    ah = jnp.einsum('gqk,gkd->gqd', p.astype(jnp.bfloat16), vh,
                    preferred_element_type=jnp.float32)              # (G, Lq, hd)

    # Merge heads back: (Bt*H, Lq, hd) -> (Bt*Lq, D).
    attn = jnp.transpose(ah.reshape(Bt, H, Lq, hd), (0, 2, 1, 3)).reshape(Bt * Lq, D)

    # Output projection.
    attn = jnp.dot(attn.astype(jnp.bfloat16), wo_ref[...],
                   preferred_element_type=jnp.float32) + bo_ref[...]

    # Residual + LayerNorm 1 (f32).
    x1 = _layernorm(x + attn, g1_ref[...], be1_ref[...], eps)

    # FFN: linear1 -> relu -> linear2 (bf16 matmuls, f32 accumulate).
    h1 = jnp.dot(x1.astype(jnp.bfloat16), w1_ref[...],
                 preferred_element_type=jnp.float32) + b1_ref[...]
    h1 = jnp.maximum(h1, 0.0)
    ffn = jnp.dot(h1.astype(jnp.bfloat16), w2_ref[...],
                  preferred_element_type=jnp.float32) + b2_ref[...]

    # Residual + LayerNorm 2.
    x2 = _layernorm(x1 + ffn, g2_ref[...], be2_ref[...], eps)

    o_ref[...] = x2.reshape(Bt, Lq, D).astype(o_ref.dtype)


def cross_attention_encoder_layer(video, text, mask, params, *, n_heads,
                                  eps=1e-5, block_b=1):
    B, Lq, D = video.shape
    _, Lk, _ = text.shape
    F = params["w1"].shape[0]
    assert D % n_heads == 0
    assert B % block_b == 0
    hd = D // n_heads
    scale = 1.0 / math.sqrt(hd)

    # Pad keys to a lane-dense multiple of 128 and fold the Lk padding plus the
    # user key-padding mask into one additive mask tensor.
    Lkp = max(128, ((Lk + 127) // 128) * 128)
    pad = Lkp - Lk
    text_p = jnp.pad(text, ((0, 0), (0, pad), (0, 0)))
    mask_p = jnp.pad(mask.astype(jnp.float32), ((0, 0), (0, pad)),
                     constant_values=-1e9).reshape(B, 1, Lkp)

    # Pre-transpose weights (PyTorch Linear stores W as (out, in)) and cast the
    # matmul operands to bf16 (MXU-native); biases / LN params stay f32.
    bf = lambda a: jnp.asarray(a).T.astype(jnp.bfloat16)
    r1 = lambda a: jnp.asarray(a).reshape(1, -1).astype(jnp.float32)
    # Fold the attention scale into the Q projection (free, wrapper-side).
    wq_t = (jnp.asarray(params["wq"]).T * scale).astype(jnp.bfloat16)
    bq_s = (jnp.asarray(params["bq"]) * scale).reshape(1, -1).astype(jnp.float32)
    # Fuse K and V projections into one (D, 2D) matmul.
    wkv_t = jnp.concatenate(
        [jnp.asarray(params["wk"]).T, jnp.asarray(params["wv"]).T],
        axis=1).astype(jnp.bfloat16)                                  # (D, 2D)
    bkv = jnp.concatenate(
        [jnp.asarray(params["bk"]), jnp.asarray(params["bv"])]).reshape(1, -1
        ).astype(jnp.float32)                                         # (1, 2D)
    wo_t = bf(params["wo"])
    w1_t = bf(params["w1"])   # (D, F)
    w2_t = bf(params["w2"])   # (F, D)

    def rep(shape):
        return pl.BlockSpec(shape, lambda b: (0,) * len(shape))

    in_specs = [
        pl.BlockSpec((block_b, Lq, D), lambda b: (b, 0, 0)),    # video
        pl.BlockSpec((block_b, Lkp, D), lambda b: (b, 0, 0)),   # text (padded)
        pl.BlockSpec((block_b, 1, Lkp), lambda b: (b, 0, 0)),   # additive mask
        rep((D, D)), rep((1, D)),                               # wq^T*scale, bq*scale
        rep((D, 2 * D)), rep((1, 2 * D)),                       # [wk|wv]^T, [bk|bv]
        rep((D, D)), rep((1, D)),                               # wo^T, bo
        rep((1, D)), rep((1, D)),                               # norm1 gamma/beta
        rep((1, D)), rep((1, D)),                               # norm2 gamma/beta
        rep((D, F)), rep((1, F)),                               # linear1 w^T / b
        rep((F, D)), rep((1, D)),                               # linear2 w^T / b
    ]
    out_spec = pl.BlockSpec((block_b, Lq, D), lambda b: (b, 0, 0))

    kernel = functools.partial(_kernel, n_heads=n_heads, eps=eps)

    call = pl.pallas_call(
        kernel,
        out_shape=jax.ShapeDtypeStruct((B, Lq, D), video.dtype),
        grid_spec=pltpu.PrefetchScalarGridSpec(
            num_scalar_prefetch=0,
            grid=(B // block_b,),
            in_specs=in_specs,
            out_specs=out_spec,
        ),
        compiler_params=pltpu.CompilerParams(
            dimension_semantics=("parallel",),
            # Explicit scoped-VMEM cap; relevant once D/F grow (v7x: 64 MiB/TC).
            vmem_limit_bytes=48 * 1024 * 1024,
        ),
    )

    return call(
        video, text_p, mask_p,
        wq_t, bq_s,
        wkv_t, bkv,
        wo_t, r1(params["bo"]),
        r1(params["g1"]), r1(params["be1"]),
        r1(params["g2"]), r1(params["be2"]),
        w1_t, r1(params["b1"]),
        w2_t, r1(params["b2"]),
    )


def reference(video, text, mask, p, *, n_heads, eps=1e-5):
    """Pure-JAX (f32) reference matching PyTorch eval-mode semantics."""
    B, Lq, D = video.shape
    _, Lk, _ = text.shape
    hd = D // n_heads
    q = video @ p["wq"].T + p["bq"]
    k = text @ p["wk"].T + p["bk"]
    v = text @ p["wv"].T + p["bv"]
    q = q.reshape(B, Lq, n_heads, hd)
    k = k.reshape(B, Lk, n_heads, hd)
    v = v.reshape(B, Lk, n_heads, hd)
    s = jnp.einsum("bqhd,bkhd->bhqk", q, k) / math.sqrt(hd)
    s = s + mask[:, None, None, :]
    pmat = jax.nn.softmax(s, axis=-1)
    attn = jnp.einsum("bhqk,bkhd->bqhd", pmat, v).reshape(B, Lq, D)
    attn = attn @ p["wo"].T + p["bo"]

    def ln(x, g, b):
        mu = jnp.mean(x, axis=-1, keepdims=True)
        var = jnp.mean((x - mu) ** 2, axis=-1, keepdims=True)
        return (x - mu) / jnp.sqrt(var + eps) * g + b

    x1 = ln(video + attn, p["g1"], p["be1"])
    h1 = jax.nn.relu(x1 @ p["w1"].T + p["b1"])
    ffn = h1 @ p["w2"].T + p["b2"]
    return ln(x1 + ffn, p["g2"], p["be2"])


def init_params(key, d_model, n_heads, dim_feedforward):
    ks = jax.random.split(key, 12)
    s = 0.05
    return {
        "wq": jax.random.normal(ks[0], (d_model, d_model), jnp.float32) * s,
        "wk": jax.random.normal(ks[1], (d_model, d_model), jnp.float32) * s,
        "wv": jax.random.normal(ks[2], (d_model, d_model), jnp.float32) * s,
        "bq": jax.random.normal(ks[3], (d_model,), jnp.float32) * s,
        "bk": jax.random.normal(ks[4], (d_model,), jnp.float32) * s,
        "bv": jax.random.normal(ks[5], (d_model,), jnp.float32) * s,
        "wo": jax.random.normal(ks[6], (d_model, d_model), jnp.float32) * s,
        "bo": jax.random.normal(ks[7], (d_model,), jnp.float32) * s,
        "g1": jnp.ones((d_model,), jnp.float32),
        "be1": jnp.zeros((d_model,), jnp.float32),
        "g2": jnp.ones((d_model,), jnp.float32),
        "be2": jnp.zeros((d_model,), jnp.float32),
        "w1": jax.random.normal(ks[8], (dim_feedforward, d_model), jnp.float32) * s,
        "b1": jax.random.normal(ks[9], (dim_feedforward,), jnp.float32) * s,
        "w2": jax.random.normal(ks[10], (d_model, dim_feedforward), jnp.float32) * s,
        "b2": jax.random.normal(ks[11], (d_model,), jnp.float32) * s,
    }


if __name__ == "__main__":
    # Small but lane-dense demo shapes (D and F multiples of 128 -> unmasked
    # vector stores on the output path; D=256 is the real QD-DETR width).
    B, Lq, Lk = 2, 8, 8
    d_model, n_heads, dim_ff = 128, 4, 256

    key = jax.random.PRNGKey(0)
    k_v, k_t, k_p = jax.random.split(key, 3)

    video = jax.random.normal(k_v, (B, Lq, d_model), jnp.float32)
    text = jax.random.normal(k_t, (B, Lk, d_model), jnp.float32)
    # float key-padding mask: 0 = attend, large negative = masked
    mask = jnp.zeros((B, Lk), jnp.float32)
    mask = mask.at[1, -2:].set(-1e9)

    params = init_params(k_p, d_model, n_heads, dim_ff)

    out = cross_attention_encoder_layer(video, text, mask, params, n_heads=n_heads)
    out = jax.block_until_ready(out)

    ref = reference(video, text, mask, params, n_heads=n_heads)
    assert out.shape == (B, Lq, d_model)
    # bf16 matmuls + approx reciprocal in the kernel vs. f32 reference.
    assert jnp.allclose(out, ref, rtol=3e-2, atol=3e-2), "mismatch vs pure-JAX reference"

    print("KERNEL_OK")
</pallas_src>

<mosaic_0001>
module attributes {stable_mosaic.version = 11 : i64} {
  func.func @_kernel(%arg0: i32, %arg1: memref<1x8x128xf32, #tpu.memory_space<vmem>>, %arg2: memref<1x128x128xf32, #tpu.memory_space<vmem>>, %arg3: memref<1x1x128xf32, #tpu.memory_space<vmem>>, %arg4: memref<128x128xbf16, #tpu.memory_space<vmem>>, %arg5: memref<1x128xf32, #tpu.memory_space<vmem>>, %arg6: memref<128x256xbf16, #tpu.memory_space<vmem>>, %arg7: memref<1x256xf32, #tpu.memory_space<vmem>>, %arg8: memref<128x128xbf16, #tpu.memory_space<vmem>>, %arg9: memref<1x128xf32, #tpu.memory_space<vmem>>, %arg10: memref<1x128xf32, #tpu.memory_space<vmem>>, %arg11: memref<1x128xf32, #tpu.memory_space<vmem>>, %arg12: memref<1x128xf32, #tpu.memory_space<vmem>>, %arg13: memref<1x128xf32, #tpu.memory_space<vmem>>, %arg14: memref<128x256xbf16, #tpu.memory_space<vmem>>, %arg15: memref<1x256xf32, #tpu.memory_space<vmem>>, %arg16: memref<256x128xbf16, #tpu.memory_space<vmem>>, %arg17: memref<1x128xf32, #tpu.memory_space<vmem>>, %arg18: memref<1x8x128xf32, #tpu.memory_space<vmem>>) attributes {dimension_semantics = [#tpu.dimension_semantics<parallel>], iteration_bounds = array<i64: 2>, scalar_prefetch = 0 : i64, scratch_operands = 0 : i64, tpu.core_type = #tpu.core_type<tc>, window_params = [{transform_indices = @transform_0, window_bounds = array<i64: 1, 8, 128>}, {transform_indices = @transform_1, window_bounds = array<i64: 1, 128, 128>}, {transform_indices = @transform_2, window_bounds = array<i64: 1, 1, 128>}, {pipeline_mode = #tpu.pipeline_mode<synchronous>, transform_indices = @transform_3, window_bounds = array<i64: 128, 128>}, {pipeline_mode = #tpu.pipeline_mode<synchronous>, transform_indices = @transform_4, window_bounds = array<i64: 1, 128>}, {pipeline_mode = #tpu.pipeline_mode<synchronous>, transform_indices = @transform_5, window_bounds = array<i64: 128, 256>}, {pipeline_mode = #tpu.pipeline_mode<synchronous>, transform_indices = @transform_6, window_bounds = array<i64: 1, 256>}, {pipeline_mode = #tpu.pipeline_mode<synchronous>, transform_indices = @transform_7, window_bounds = array<i64: 128, 128>}, {pipeline_mode = #tpu.pipeline_mode<synchronous>, transform_indices = @transform_8, window_bounds = array<i64: 1, 128>}, {pipeline_mode = #tpu.pipeline_mode<synchronous>, transform_indices = @transform_9, window_bounds = array<i64: 1, 128>}, {pipeline_mode = #tpu.pipeline_mode<synchronous>, transform_indices = @transform_10, window_bounds = array<i64: 1, 128>}, {pipeline_mode = #tpu.pipeline_mode<synchronous>, transform_indices = @transform_11, window_bounds = array<i64: 1, 128>}, {pipeline_mode = #tpu.pipeline_mode<synchronous>, transform_indices = @transform_12, window_bounds = array<i64: 1, 128>}, {pipeline_mode = #tpu.pipeline_mode<synchronous>, transform_indices = @transform_13, window_bounds = array<i64: 128, 256>}, {pipeline_mode = #tpu.pipeline_mode<synchronous>, transform_indices = @transform_14, window_bounds = array<i64: 1, 256>}, {pipeline_mode = #tpu.pipeline_mode<synchronous>, transform_indices = @transform_15, window_bounds = array<i64: 256, 128>}, {pipeline_mode = #tpu.pipeline_mode<synchronous>, transform_indices = @transform_16, window_bounds = array<i64: 1, 128>}, {transform_indices = @transform_17, window_bounds = array<i64: 1, 8, 128>}]} {
    %c0 = arith.constant 0 : index
    %c0_0 = arith.constant 0 : index
    %c0_1 = arith.constant 0 : index
    %0 = vector.load %arg1[%c0, %c0_0, %c0_1] : memref<1x8x128xf32, #tpu.memory_space<vmem>>, vector<1x8x128xf32>
    %1 = vector.shape_cast %0 : vector<1x8x128xf32> to vector<8x128xf32>
    %c0_2 = arith.constant 0 : index
    %c0_3 = arith.constant 0 : index
    %c0_4 = arith.constant 0 : index
    %2 = vector.load %arg2[%c0_2, %c0_3, %c0_4] : memref<1x128x128xf32, #tpu.memory_space<vmem>>, vector<1x128x128xf32>
    %3 = vector.shape_cast %2 : vector<1x128x128xf32> to vector<128x128xf32>
    %c0_5 = arith.constant 0 : index
    %c0_6 = arith.constant 0 : index
    %c0_7 = arith.constant 0 : index
    %4 = vector.load %arg3[%c0_5, %c0_6, %c0_7] : memref<1x1x128xf32, #tpu.memory_space<vmem>>, vector<1x1x128xf32>
    %5 = arith.truncf %1 : vector<8x128xf32> to vector<8x128xbf16>
    %6 = arith.truncf %3 : vector<128x128xf32> to vector<128x128xbf16>
    %c0_8 = arith.constant 0 : index
    %c0_9 = arith.constant 0 : index
    %7 = vector.load %arg4[%c0_8, %c0_9] : memref<128x128xbf16, #tpu.memory_space<vmem>>, vector<128x128xbf16>
    %cst = arith.constant dense<0.000000e+00> : vector<8x128xf32>
    %8 = tpu.matmul %5, %7, %cst {dimension_numbers = #tpu.dot_dimension_numbers<[1], [0], [0], [1], [0, 0, 1, 1], [], []>} : vector<8x128xbf16>, vector<128x128xbf16>, vector<8x128xf32> -> vector<8x128xf32>
    %c0_10 = arith.constant 0 : index
    %c0_11 = arith.constant 0 : index
    %9 = vector.load %arg5[%c0_10, %c0_11] : memref<1x128xf32, #tpu.memory_space<vmem>>, vector<1x128xf32>
    %10 = vector.broadcast %9 : vector<1x128xf32> to vector<8x128xf32>
    %11 = arith.addf %8, %10 : vector<8x128xf32>
    %c0_12 = arith.constant 0 : index
    %c0_13 = arith.constant 0 : index
    %12 = vector.load %arg6[%c0_12, %c0_13] : memref<128x256xbf16, #tpu.memory_space<vmem>>, vector<128x256xbf16>
    %cst_14 = arith.constant dense<0.000000e+00> : vector<128x256xf32>
    %13 = tpu.matmul %6, %12, %cst_14 {dimension_numbers = #tpu.dot_dimension_numbers<[1], [0], [0], [1], [0, 0, 1, 1], [], []>} : vector<128x128xbf16>, vector<128x256xbf16>, vector<128x256xf32> -> vector<128x256xf32>
    %c0_15 = arith.constant 0 : index
    %c0_16 = arith.constant 0 : index
    %14 = vector.load %arg7[%c0_15, %c0_16] : memref<1x256xf32, #tpu.memory_space<vmem>>, vector<1x256xf32>
    %15 = vector.broadcast %14 : vector<1x256xf32> to vector<128x256xf32>
    %16 = arith.addf %13, %15 : vector<128x256xf32>
    %17 = vector.extract_strided_slice %16 {offsets = [0, 0], sizes = [128, 128], strides = [1, 1]} : vector<128x256xf32> to vector<128x128xf32>
    %18 = vector.extract_strided_slice %16 {offsets = [0, 128], sizes = [128, 128], strides = [1, 1]} : vector<128x256xf32> to vector<128x128xf32>
    %19 = arith.truncf %11 : vector<8x128xf32> to vector<8x128xbf16>
    %20 = vector.shape_cast %19 : vector<8x128xbf16> to vector<1x8x4x32xbf16>
    %21 = tpu.transpose %20, [0, 2, 1, 3] : vector<1x8x4x32xbf16> -> vector<1x4x8x32xbf16>
    %22 = vector.shape_cast %21 : vector<1x4x8x32xbf16> to vector<4x8x32xbf16>
    %23 = arith.truncf %17 : vector<128x128xf32> to vector<128x128xbf16>
    %24 = vector.shape_cast %23 : vector<128x128xbf16> to vector<1x128x4x32xbf16>
    %25 = tpu.transpose %24, [0, 2, 1, 3] : vector<1x128x4x32xbf16> -> vector<1x4x128x32xbf16>
    %26 = vector.shape_cast %25 : vector<1x4x128x32xbf16> to vector<4x128x32xbf16>
    %27 = arith.truncf %18 : vector<128x128xf32> to vector<128x128xbf16>
    %28 = vector.shape_cast %27 : vector<128x128xbf16> to vector<1x128x4x32xbf16>
    %29 = tpu.transpose %28, [0, 2, 1, 3] : vector<1x128x4x32xbf16> -> vector<1x4x128x32xbf16>
    %30 = vector.shape_cast %29 : vector<1x4x128x32xbf16> to vector<4x128x32xbf16>
    "tpu.trace_start"() <{level = 10 : i32, message = "gqd,gkd->gqk"}> : () -> ()
    %cst_17 = arith.constant dense<0.000000e+00> : vector<4x8x128xf32>
    %31 = tpu.matmul %22, %26, %cst_17 {dimension_numbers = #tpu.dot_dimension_numbers<[2], [2], [1], [1], [0, 0, 0, 1, 1, 1], [0], [0]>} : vector<4x8x32xbf16>, vector<4x128x32xbf16>, vector<4x8x128xf32> -> vector<4x8x128xf32>
    "tpu.trace_stop"() : () -> ()
    %32 = vector.shape_cast %31 : vector<4x8x128xf32> to vector<1x32x128xf32>
    %33 = vector.broadcast %4 : vector<1x1x128xf32> to vector<1x32x128xf32>
    %34 = arith.addf %32, %33 : vector<1x32x128xf32>
    %cst_18 = arith.constant dense<0xFF800000> : vector<1x32xf32>
    %35 = vector.multi_reduction <maximumf>, %34, %cst_18 [2] : vector<1x32x128xf32> to vector<1x32xf32>
    %36 = vector.shape_cast %35 : vector<1x32xf32> to vector<1x32x1xf32>
    %37 = vector.broadcast %36 : vector<1x32x1xf32> to vector<1x32x128xf32>
    %38 = arith.subf %34, %37 : vector<1x32x128xf32>
    %39 = math.exp %38 : vector<1x32x128xf32>
    %cst_19 = arith.constant dense<0.000000e+00> : vector<1x32xf32>
    %40 = vector.multi_reduction <add>, %39, %cst_19 [2] : vector<1x32x128xf32> to vector<1x32xf32>
    %41 = vector.shape_cast %40 : vector<1x32xf32> to vector<1x32x1xf32>
    %42 = tpu.reciprocal %41 {approx = true} : vector<1x32x1xf32> -> vector<1x32x1xf32>
    %43 = vector.broadcast %42 : vector<1x32x1xf32> to vector<1x32x128xf32>
    %44 = arith.mulf %39, %43 : vector<1x32x128xf32>
    %45 = vector.shape_cast %44 : vector<1x32x128xf32> to vector<4x8x128xf32>
    %46 = arith.truncf %45 : vector<4x8x128xf32> to vector<4x8x128xbf16>
    "tpu.trace_start"() <{level = 10 : i32, message = "gqk,gkd->gqd"}> : () -> ()
    %cst_20 = arith.constant dense<0.000000e+00> : vector<4x8x32xf32>
    %47 = tpu.matmul %46, %30, %cst_20 {dimension_numbers = #tpu.dot_dimension_numbers<[2], [1], [1], [2], [0, 0, 0, 1, 1, 2], [0], [0]>} : vector<4x8x128xbf16>, vector<4x128x32xbf16>, vector<4x8x32xf32> -> vector<4x8x32xf32>
    "tpu.trace_stop"() : () -> ()
    %48 = vector.shape_cast %47 : vector<4x8x32xf32> to vector<1x4x8x32xf32>
    %49 = tpu.transpose %48, [0, 2, 1, 3] : vector<1x4x8x32xf32> -> vector<1x8x4x32xf32>
    %50 = vector.shape_cast %49 : vector<1x8x4x32xf32> to vector<8x128xf32>
    %51 = arith.truncf %50 : vector<8x128xf32> to vector<8x128xbf16>
    %c0_21 = arith.constant 0 : index
    %c0_22 = arith.constant 0 : index
    %52 = vector.load %arg8[%c0_21, %c0_22] : memref<128x128xbf16, #tpu.memory_space<vmem>>, vector<128x128xbf16>
    %cst_23 = arith.constant dense<0.000000e+00> : vector<8x128xf32>
    %53 = tpu.matmul %51, %52, %cst_23 {dimension_numbers = #tpu.dot_dimension_numbers<[1], [0], [0], [1], [0, 0, 1, 1], [], []>} : vector<8x128xbf16>, vector<128x128xbf16>, vector<8x128xf32> -> vector<8x128xf32>
    %c0_24 = arith.constant 0 : index
    %c0_25 = arith.constant 0 : index
    %54 = vector.load %arg9[%c0_24, %c0_25] : memref<1x128xf32, #tpu.memory_space<vmem>>, vector<1x128xf32>
    %55 = vector.broadcast %54 : vector<1x128xf32> to vector<8x128xf32>
    %56 = arith.addf %53, %55 : vector<8x128xf32>
    %57 = arith.addf %1, %56 : vector<8x128xf32>
    %c0_26 = arith.constant 0 : index
    %c0_27 = arith.constant 0 : index
    %58 = vector.load %arg10[%c0_26, %c0_27] : memref<1x128xf32, #tpu.memory_space<vmem>>, vector<1x128xf32>
    %c0_28 = arith.constant 0 : index
    %c0_29 = arith.constant 0 : index
    %59 = vector.load %arg11[%c0_28, %c0_29] : memref<1x128xf32, #tpu.memory_space<vmem>>, vector<1x128xf32>
    %cst_30 = arith.constant dense<0.000000e+00> : vector<8xf32>
    %60 = vector.multi_reduction <add>, %57, %cst_30 [1] : vector<8x128xf32> to vector<8xf32>
    %61 = vector.shape_cast %60 : vector<8xf32> to vector<8x1xf32>
    %cst_31 = arith.constant 1.280000e+02 : f32
    %62 = vector.broadcast %cst_31 : f32 to vector<8x1xf32>
    %63 = arith.divf %61, %62 : vector<8x1xf32>
    %64 = vector.broadcast %63 : vector<8x1xf32> to vector<8x128xf32>
    %65 = arith.subf %57, %64 : vector<8x128xf32>
    %66 = arith.mulf %65, %65 : vector<8x128xf32>
    %cst_32 = arith.constant dense<0.000000e+00> : vector<8xf32>
    %67 = vector.multi_reduction <add>, %66, %cst_32 [1] : vector<8x128xf32> to vector<8xf32>
    %68 = vector.shape_cast %67 : vector<8xf32> to vector<8x1xf32>
    %cst_33 = arith.constant 1.280000e+02 : f32
    %69 = vector.broadcast %cst_33 : f32 to vector<8x1xf32>
    %70 = arith.divf %68, %69 : vector<8x1xf32>
    %71 = vector.broadcast %63 : vector<8x1xf32> to vector<8x128xf32>
    %72 = arith.subf %57, %71 : vector<8x128xf32>
    %cst_34 = arith.constant 9.99999974E-6 : f32
    %73 = vector.broadcast %cst_34 : f32 to vector<8x1xf32>
    %74 = arith.addf %70, %73 : vector<8x1xf32>
    %75 = math.rsqrt %74 : vector<8x1xf32>
    %76 = vector.broadcast %75 : vector<8x1xf32> to vector<8x128xf32>
    %77 = arith.mulf %72, %76 : vector<8x128xf32>
    %78 = vector.broadcast %58 : vector<1x128xf32> to vector<8x128xf32>
    %79 = arith.mulf %77, %78 : vector<8x128xf32>
    %80 = vector.broadcast %59 : vector<1x128xf32> to vector<8x128xf32>
    %81 = arith.addf %79, %80 : vector<8x128xf32>
    %82 = arith.truncf %81 : vector<8x128xf32> to vector<8x128xbf16>
    %c0_35 = arith.constant 0 : index
    %c0_36 = arith.constant 0 : index
    %83 = vector.load %arg14[%c0_35, %c0_36] : memref<128x256xbf16, #tpu.memory_space<vmem>>, vector<128x256xbf16>
    %cst_37 = arith.constant dense<0.000000e+00> : vector<8x256xf32>
    %84 = tpu.matmul %82, %83, %cst_37 {dimension_numbers = #tpu.dot_dimension_numbers<[1], [0], [0], [1], [0, 0, 1, 1], [], []>} : vector<8x128xbf16>, vector<128x256xbf16>, vector<8x256xf32> -> vector<8x256xf32>
    %c0_38 = arith.constant 0 : index
    %c0_39 = arith.constant 0 : index
    %85 = vector.load %arg15[%c0_38, %c0_39] : memref<1x256xf32, #tpu.memory_space<vmem>>, vector<1x256xf32>
    %86 = vector.broadcast %85 : vector<1x256xf32> to vector<8x256xf32>
    %87 = arith.addf %84, %86 : vector<8x256xf32>
    %cst_40 = arith.constant 0.000000e+00 : f32
    %88 = vector.broadcast %cst_40 : f32 to vector<8x256xf32>
    %89 = arith.maximumf %87, %88 : vector<8x256xf32>
    %90 = arith.truncf %89 : vector<8x256xf32> to vector<8x256xbf16>
    %c0_41 = arith.constant 0 : index
    %c0_42 = arith.constant 0 : index
    %91 = vector.load %arg16[%c0_41, %c0_42] : memref<256x128xbf16, #tpu.memory_space<vmem>>, vector<256x128xbf16>
    %cst_43 = arith.constant dense<0.000000e+00> : vector<8x128xf32>
    %92 = tpu.matmul %90, %91, %cst_43 {dimension_numbers = #tpu.dot_dimension_numbers<[1], [0], [0], [1], [0, 0, 1, 1], [], []>} : vector<8x256xbf16>, vector<256x128xbf16>, vector<8x128xf32> -> vector<8x128xf32>
    %c0_44 = arith.constant 0 : index
    %c0_45 = arith.constant 0 : index
    %93 = vector.load %arg17[%c0_44, %c0_45] : memref<1x128xf32, #tpu.memory_space<vmem>>, vector<1x128xf32>
    %94 = vector.broadcast %93 : vector<1x128xf32> to vector<8x128xf32>
    %95 = arith.addf %92, %94 : vector<8x128xf32>
    %96 = arith.addf %81, %95 : vector<8x128xf32>
    %c0_46 = arith.constant 0 : index
    %c0_47 = arith.constant 0 : index
    %97 = vector.load %arg12[%c0_46, %c0_47] : memref<1x128xf32, #tpu.memory_space<vmem>>, vector<1x128xf32>
    %c0_48 = arith.constant 0 : index
    %c0_49 = arith.constant 0 : index
    %98 = vector.load %arg13[%c0_48, %c0_49] : memref<1x128xf32, #tpu.memory_space<vmem>>, vector<1x128xf32>
    %cst_50 = arith.constant dense<0.000000e+00> : vector<8xf32>
    %99 = vector.multi_reduction <add>, %96, %cst_50 [1] : vector<8x128xf32> to vector<8xf32>
    %100 = vector.shape_cast %99 : vector<8xf32> to vector<8x1xf32>
    %cst_51 = arith.constant 1.280000e+02 : f32
    %101 = vector.broadcast %cst_51 : f32 to vector<8x1xf32>
    %102 = arith.divf %100, %101 : vector<8x1xf32>
    %103 = vector.broadcast %102 : vector<8x1xf32> to vector<8x128xf32>
    %104 = arith.subf %96, %103 : vector<8x128xf32>
    %105 = arith.mulf %104, %104 : vector<8x128xf32>
    %cst_52 = arith.constant dense<0.000000e+00> : vector<8xf32>
    %106 = vector.multi_reduction <add>, %105, %cst_52 [1] : vector<8x128xf32> to vector<8xf32>
    %107 = vector.shape_cast %106 : vector<8xf32> to vector<8x1xf32>
    %cst_53 = arith.constant 1.280000e+02 : f32
    %108 = vector.broadcast %cst_53 : f32 to vector<8x1xf32>
    %109 = arith.divf %107, %108 : vector<8x1xf32>
    %110 = vector.broadcast %102 : vector<8x1xf32> to vector<8x128xf32>
    %111 = arith.subf %96, %110 : vector<8x128xf32>
    %cst_54 = arith.constant 9.99999974E-6 : f32
    %112 = vector.broadcast %cst_54 : f32 to vector<8x1xf32>
    %113 = arith.addf %109, %112 : vector<8x1xf32>
    %114 = math.rsqrt %113 : vector<8x1xf32>
    %115 = vector.broadcast %114 : vector<8x1xf32> to vector<8x128xf32>
    %116 = arith.mulf %111, %115 : vector<8x128xf32>
    %117 = vector.broadcast %97 : vector<1x128xf32> to vector<8x128xf32>
    %118 = arith.mulf %116, %117 : vector<8x128xf32>
    %119 = vector.broadcast %98 : vector<1x128xf32> to vector<8x128xf32>
    %120 = arith.addf %118, %119 : vector<8x128xf32>
    %121 = vector.shape_cast %120 : vector<8x128xf32> to vector<1x8x128xf32>
    %c0_55 = arith.constant 0 : index
    %c0_56 = arith.constant 0 : index
    %c0_57 = arith.constant 0 : index
    %122 = vector.load %arg18[%c0_55, %c0_56, %c0_57] : memref<1x8x128xf32, #tpu.memory_space<vmem>>, vector<1x8x128xf32>
    tpu.vector_store %arg18[%c0_55, %c0_56, %c0_57], %121 {strides = array<i32>} : memref<1x8x128xf32, #tpu.memory_space<vmem>>, vector<1x8x128xf32>,
    return
  }
  func.func @transform_0(%arg0: i32) -> (i32, i32, i32) {
    %c0_i32 = arith.constant 0 : i32
    %c0_i32_0 = arith.constant 0 : i32
    %c0_i32_1 = arith.constant 0 : i32
    return %arg0, %c0_i32, %c0_i32_0 : i32, i32, i32
  }
  func.func @transform_1(%arg0: i32) -> (i32, i32, i32) {
    %c0_i32 = arith.constant 0 : i32
    %c0_i32_0 = arith.constant 0 : i32
    %c0_i32_1 = arith.constant 0 : i32
    return %arg0, %c0_i32, %c0_i32_0 : i32, i32, i32
  }
  func.func @transform_2(%arg0: i32) -> (i32, i32, i32) {
    %c0_i32 = arith.constant 0 : i32
    %c0_i32_0 = arith.constant 0 : i32
    %c0_i32_1 = arith.constant 0 : i32
    return %arg0, %c0_i32, %c0_i32_0 : i32, i32, i32
  }
  func.func @transform_3(%arg0: i32) -> (i32, i32) {
    %c0_i32 = arith.constant 0 : i32
    %c0_i32_0 = arith.constant 0 : i32
    %c0_i32_1 = arith.constant 0 : i32
    return %c0_i32, %c0_i32_0 : i32, i32
  }
  func.func @transform_4(%arg0: i32) -> (i32, i32) {
    %c0_i32 = arith.constant 0 : i32
    %c0_i32_0 = arith.constant 0 : i32
    %c0_i32_1 = arith.constant 0 : i32
    return %c0_i32, %c0_i32_0 : i32, i32
  }
  func.func @transform_5(%arg0: i32) -> (i32, i32) {
    %c0_i32 = arith.constant 0 : i32
    %c0_i32_0 = arith.constant 0 : i32
    %c0_i32_1 = arith.constant 0 : i32
    return %c0_i32, %c0_i32_0 : i32, i32
  }
  func.func @transform_6(%arg0: i32) -> (i32, i32) {
    %c0_i32 = arith.constant 0 : i32
    %c0_i32_0 = arith.constant 0 : i32
    %c0_i32_1 = arith.constant 0 : i32
    return %c0_i32, %c0_i32_0 : i32, i32
  }
  func.func @transform_7(%arg0: i32) -> (i32, i32) {
    %c0_i32 = arith.constant 0 : i32
    %c0_i32_0 = arith.constant 0 : i32
    %c0_i32_1 = arith.constant 0 : i32
    return %c0_i32, %c0_i32_0 : i32, i32
  }
  func.func @transform_8(%arg0: i32) -> (i32, i32) {
    %c0_i32 = arith.constant 0 : i32
    %c0_i32_0 = arith.constant 0 : i32
    %c0_i32_1 = arith.constant 0 : i32
    return %c0_i32, %c0_i32_0 : i32, i32
  }
  func.func @transform_9(%arg0: i32) -> (i32, i32) {
    %c0_i32 = arith.constant 0 : i32
    %c0_i32_0 = arith.constant 0 : i32
    %c0_i32_1 = arith.constant 0 : i32
    return %c0_i32, %c0_i32_0 : i32, i32
  }
  func.func @transform_10(%arg0: i32) -> (i32, i32) {
    %c0_i32 = arith.constant 0 : i32
    %c0_i32_0 = arith.constant 0 : i32
    %c0_i32_1 = arith.constant 0 : i32
    return %c0_i32, %c0_i32_0 : i32, i32
  }
  func.func @transform_11(%arg0: i32) -> (i32, i32) {
    %c0_i32 = arith.constant 0 : i32
    %c0_i32_0 = arith.constant 0 : i32
    %c0_i32_1 = arith.constant 0 : i32
    return %c0_i32, %c0_i32_0 : i32, i32
  }
  func.func @transform_12(%arg0: i32) -> (i32, i32) {
    %c0_i32 = arith.constant 0 : i32
    %c0_i32_0 = arith.constant 0 : i32
    %c0_i32_1 = arith.constant 0 : i32
    return %c0_i32, %c0_i32_0 : i32, i32
  }
  func.func @transform_13(%arg0: i32) -> (i32, i32) {
    %c0_i32 = arith.constant 0 : i32
    %c0_i32_0 = arith.constant 0 : i32
    %c0_i32_1 = arith.constant 0 : i32
    return %c0_i32, %c0_i32_0 : i32, i32
  }
  func.func @transform_14(%arg0: i32) -> (i32, i32) {
    %c0_i32 = arith.constant 0 : i32
    %c0_i32_0 = arith.constant 0 : i32
    %c0_i32_1 = arith.constant 0 : i32
    return %c0_i32, %c0_i32_0 : i32, i32
  }
  func.func @transform_15(%arg0: i32) -> (i32, i32) {
    %c0_i32 = arith.constant 0 : i32
    %c0_i32_0 = arith.constant 0 : i32
    %c0_i32_1 = arith.constant 0 : i32
    return %c0_i32, %c0_i32_0 : i32, i32
  }
  func.func @transform_16(%arg0: i32) -> (i32, i32) {
    %c0_i32 = arith.constant 0 : i32
    %c0_i32_0 = arith.constant 0 : i32
    %c0_i32_1 = arith.constant 0 : i32
    return %c0_i32, %c0_i32_0 : i32, i32
  }
  func.func @transform_17(%arg0: i32) -> (i32, i32, i32) {
    %c0_i32 = arith.constant 0 : i32
    %c0_i32_0 = arith.constant 0 : i32
    %c0_i32_1 = arith.constant 0 : i32
    return %arg0, %c0_i32, %c0_i32_0 : i32, i32, i32
  }
}

</mosaic_0001>

<llo_original>
// kernel: tpu_custom_call.1
$region0: #{tpu_custom_call.1}
  #allocation0 [shape = 'u32[]', space=smem, size = 0x4, offset = 0x4, fixed_abs, tag = 'smem constant byte address 0x4 - core index']
  #allocation1 [shape = 'u32[144,128]{1,0:T(1,128)}', space=vmem, size = 0x12000, scoped, tag = 'internal scratch']
  %s0 = inlined_call_operand.hbm [shape: f32[2,8,128], index: 0, kind: input, shape index: {}]
  %s1 = inlined_call_operand.hbm [shape: f32[2,128,128], index: 1, kind: input, shape index: {}]
  %s2 = inlined_call_operand.vmem [shape: f32[2,1,128], index: 2, kind: input, shape index: {}]
  %s3 = inlined_call_operand.hbm [shape: bf16[128,128], index: 3, kind: input, shape index: {}]
  %s4 = inlined_call_operand.vmem [shape: f32[1,128], index: 4, kind: input, shape index: {}]
  %s5 = inlined_call_operand.hbm [shape: bf16[128,256], index: 5, kind: input, shape index: {}]
  %s6 = inlined_call_operand.vmem [shape: f32[1,256], index: 6, kind: input, shape index: {}]
  %s7 = inlined_call_operand.hbm [shape: bf16[128,128], index: 7, kind: input, shape index: {}]
  %s8 = inlined_call_operand.vmem [shape: f32[1,128], index: 8, kind: input, shape index: {}]
  %s9 = inlined_call_operand.vmem [shape: f32[1,128], index: 9, kind: input, shape index: {}]
  %s10 = inlined_call_operand.vmem [shape: f32[1,128], index: 10, kind: input, shape index: {}]
  %s11 = inlined_call_operand.vmem [shape: f32[1,128], index: 11, kind: input, shape index: {}]
  %s12 = inlined_call_operand.vmem [shape: f32[1,128], index: 12, kind: input, shape index: {}]
  %s13 = inlined_call_operand.hbm [shape: bf16[128,256], index: 13, kind: input, shape index: {}]
  %s14 = inlined_call_operand.vmem [shape: f32[1,256], index: 14, kind: input, shape index: {}]
  %s15 = inlined_call_operand.hbm [shape: bf16[256,128], index: 15, kind: input, shape index: {}]
  %s16 = inlined_call_operand.vmem [shape: f32[1,128], index: 16, kind: input, shape index: {}]
  %s17 = inlined_call_operand.hbm [shape: f32[2,8,128], index: 17, kind: output, shape index: {}]
  %s18 = sld [smem:[#allocation0]]
  $region129: #{tpu_custom_call.1} parent=0
    _
  %s20 = ssub.s32 1, %s18
  %s21 = scalar_select 0, %s20, %s18
  $region1: #{tpu_custom_call.1} parent=0
    #allocation2 [shape = 'u8[8192]{0}', space=vmem, size = 0x2000, scoped, tag = 'input window, operand 0']
    #allocation3 [shape = 's32[2]{0}', space=sflag, size = 0x8, scoped, tag = 'scoped memory for tpu_custom_call.1']
    #allocation4 [shape = 's32[2]{0}', space=sflag, size = 0x8, scoped, tag = 'scoped memory for tpu_custom_call.1']
    #allocation5 [shape = 'u8[131072]{0}', space=vmem, size = 0x20000, scoped, tag = 'input window, operand 1']
    #allocation6 [shape = 's32[2]{0}', space=sflag, size = 0x8, scoped, tag = 'scoped memory for tpu_custom_call.1']
    #allocation7 [shape = 'u8[32768]{0}', space=vmem, size = 0x8000, scoped, tag = 'input window, operand 3, single buffered']
    #allocation8 [shape = 'u8[65536]{0}', space=vmem, size = 0x10000, scoped, tag = 'input window, operand 5, single buffered']
    #allocation9 [shape = 's32[1]{0}', space=sflag, size = 0x4, scoped, tag = 'scoped memory for tpu_custom_call.1']
    #allocation10 [shape = 'u8[32768]{0}', space=vmem, size = 0x8000, scoped, tag = 'input window, operand 7, single buffered']
    #allocation11 [shape = 'u8[65536]{0}', space=vmem, size = 0x10000, scoped, tag = 'input window, operand 13, single buffered']
    #allocation12 [shape = 's32[1]{0}', space=sflag, size = 0x4, scoped, tag = 'scoped memory for tpu_custom_call.1']
    #allocation13 [shape = 'u8[65536]{0}', space=vmem, size = 0x10000, scoped, tag = 'input window, operand 15, single buffered']
    #allocation14 [shape = 'u8[8192]{0}', space=vmem, size = 0x2000, scoped, tag = 'output window, operand 0']
    %22 = vsyncpa [#allocation3], 0
    %s23 = scalar_lea.sflag [#allocation3], 1
    %24 = vsyncpa %s23, 0
    %25 = vsyncpa [#allocation6], 0
    %s26 = scalar_lea.sflag [#allocation6], 1
    %27 = vsyncpa %s26, 0
    %28 = vsyncpa [#allocation9], 0
    %29 = vsyncpa [#allocation12], 0
    %30 = vsyncpa [#allocation4], 0
    %s31 = scalar_lea.sflag [#allocation4], 1
    %32 = vsyncpa %s31, 0
    loop: start=0, step=1, limit=4
    $region2: #{tpu_custom_call.1} parent=1 // loop_pre_header
      _
    $region3: #{tpu_custom_call.1} parent=1 // loop_header
      %s34 = sphi 0, %s38
      %p35 = scmp.ge.s32.totalorder %s34, 4
      %s44 = sphi 0, %s46
      %s47 = sphi 0, %s44
      %s48 = sphi 0, %s47
      %s64 = sphi 0, %s48
      %s70 = sphi 0, %s72
      %s73 = sphi 0, %s70
      %s74 = sphi 0, %s73
      %s90 = sphi 0, %s74
      %s96 = sphi 0, %s98
      %s99 = sphi 0, %s96
      %s100 = sphi 0, %s99
      %s116 = sphi 0, %s100
      %s120 = sphi 0, %s120
      %s122 = sphi 0, %s120
      %s123 = sphi 0, %s122
      %s137 = sphi 0, %s123
      %s141 = sphi 0, %s141
      %s143 = sphi 0, %s141
      %s144 = sphi 0, %s143
      %s158 = sphi 0, %s144
      %s162 = sphi 0, %s162
      %s164 = sphi 0, %s162
      %s165 = sphi 0, %s164
      %s179 = sphi 0, %s165
      %s183 = sphi 0, %s183
      %s185 = sphi 0, %s183
      %s186 = sphi 0, %s185
      %s200 = sphi 0, %s186
      %s204 = sphi 0, %s204
      %s206 = sphi 0, %s204
      %s207 = sphi 0, %s206
      %s221 = sphi 0, %s207
      %s225 = sphi 0, %s225
      %s227 = sphi 0, %s225
      %s228 = sphi 0, %s227
      %s242 = sphi 0, %s228
      %s246 = sphi 0, %s246
      %s248 = sphi 0, %s246
      %s249 = sphi 0, %s248
      %s263 = sphi 0, %s249
      %s267 = sphi 0, %s267
      %s269 = sphi 0, %s267
      %s270 = sphi 0, %s269
      %s284 = sphi 0, %s270
      %s288 = sphi 0, %s288
      %s290 = sphi 0, %s288
      %s291 = sphi 0, %s290
      %s305 = sphi 0, %s291
      %s309 = sphi 0, %s309
      %s311 = sphi 0, %s309
      %s312 = sphi 0, %s311
      %s326 = sphi 0, %s312
      %s330 = sphi 0, %s330
      %s332 = sphi 0, %s330
      %s333 = sphi 0, %s332
      %s347 = sphi 0, %s333
      %s351 = sphi 0, %s351
      %s353 = sphi 0, %s351
      %s354 = sphi 0, %s353
      %s368 = sphi 0, %s354
      %s372 = sphi 0, %s372
      %s374 = sphi 0, %s372
      %s375 = sphi 0, %s374
      %s389 = sphi 0, %s375
      %s393 = sphi 0, %s393
      %s395 = sphi 0, %s393
      %s396 = sphi 0, %s395
      %s410 = sphi 0, %s396
      %s416 = sphi 0, %s418
      %s419 = sphi 0, %s416
      %s420 = sphi 0, %s419
      %s436 = sphi 0, %s420
    $region4: #{tpu_custom_call.1} parent=1 // loop_header_branch
      %37 = sbr.rel (%p35) target = $region8
    $region5: #{tpu_custom_call.1} parent=1 // loop_body
      %s39 = ssub.s32 %s34, 1
      %s40 = ssub.s32 %s34, 2
      %s41 = sadd.s32 %s34, 1
      %s42 = ssub.s32 %s34, %s41
      %p43 = scmp.eq.s32.totalorder %s42, 0
      %s45 = sadd.s32 %s44, 1
      %s46 = scalar_select %p43, %s44, %s45
      %p49 = pneg %p43
      %p50 = scmp.eq.s32.totalorder %s34, 1
      %p51 = por %p49, %p50
      %p52 = scmp.ne.s32.totalorder %s44, %s47
      %p53 = scmp.eq.s32.totalorder %s34, 0
      %p54 = por %p52, %p53
      %p55 = scmp.ne.s32.totalorder %s44, %s47
      %p56 = scmp.eq.s32.totalorder %s39, 1
      %p57 = por %p55, %p56
      %p58 = scmp.ne.s32.totalorder %s47, %s48
      %p59 = scmp.eq.s32.totalorder %s39, 0
      %p60 = por %p58, %p59
      %p61 = scmp.ne.s32.totalorder %s47, %s48
      %p62 = scmp.eq.s32.totalorder %s40, 1
      %p63 = por %p61, %p62
      %p65 = scmp.ne.s32.totalorder %s48, %s64
      %p66 = scmp.eq.s32.totalorder %s40, 0
      %p67 = por %p65, %p66
      %s68 = ssub.s32 %s34, %s41
      %p69 = scmp.eq.s32.totalorder %s68, 0
      %s71 = sadd.s32 %s70, 1
      %s72 = scalar_select %p69, %s70, %s71
      %p75 = pneg %p69
      %p76 = scmp.eq.s32.totalorder %s34, 1
      %p77 = por %p75, %p76
      %p78 = scmp.ne.s32.totalorder %s70, %s73
      %p79 = scmp.eq.s32.totalorder %s34, 0
      %p80 = por %p78, %p79
      %p81 = scmp.ne.s32.totalorder %s70, %s73
      %p82 = scmp.eq.s32.totalorder %s39, 1
      %p83 = por %p81, %p82
      %p84 = scmp.ne.s32.totalorder %s73, %s74
      %p85 = scmp.eq.s32.totalorder %s39, 0
      %p86 = por %p84, %p85
      %p87 = scmp.ne.s32.totalorder %s73, %s74
      %p88 = scmp.eq.s32.totalorder %s40, 1
      %p89 = por %p87, %p88
      %p91 = scmp.ne.s32.totalorder %s74, %s90
      %p92 = scmp.eq.s32.totalorder %s40, 0
      %p93 = por %p91, %p92
      %s94 = ssub.s32 %s34, %s41
      %p95 = scmp.eq.s32.totalorder %s94, 0
      %s97 = sadd.s32 %s96, 1
      %s98 = scalar_select %p95, %s96, %s97
      %p101 = pneg %p95
      %p102 = scmp.eq.s32.totalorder %s34, 1
      %p103 = por %p101, %p102
      %p104 = scmp.ne.s32.totalorder %s96, %s99
      %p105 = scmp.eq.s32.totalorder %s34, 0
      %p106 = por %p104, %p105
      %p107 = scmp.ne.s32.totalorder %s96, %s99
      %p108 = scmp.eq.s32.totalorder %s39, 1
      %p109 = por %p107, %p108
      %p110 = scmp.ne.s32.totalorder %s99, %s100
      %p111 = scmp.eq.s32.totalorder %s39, 0
      %p112 = por %p110, %p111
      %p113 = scmp.ne.s32.totalorder %s99, %s100
      %p114 = scmp.eq.s32.totalorder %s40, 1
      %p115 = por %p113, %p114
      %p117 = scmp.ne.s32.totalorder %s100, %s116
      %p118 = scmp.eq.s32.totalorder %s40, 0
      %p119 = por %p117, %p118
      %s121 = sadd.s32 %s120, 1
      %p124 = scmp.eq.s32.totalorder %s34, 1
      %p125 = scmp.ne.s32.totalorder %s120, %s122
      %p126 = scmp.eq.s32.totalorder %s34, 0
      %p127 = por %p125, %p126
      %p128 = scmp.ne.s32.totalorder %s120, %s122
      %p129 = scmp.eq.s32.totalorder %s39, 1
      %p130 = por %p128, %p129
      %p131 = scmp.ne.s32.totalorder %s122, %s123
      %p132 = scmp.eq.s32.totalorder %s39, 0
      %p133 = por %p131, %p132
      %p134 = scmp.ne.s32.totalorder %s122, %s123
      %p135 = scmp.eq.s32.totalorder %s40, 1
      %p136 = por %p134, %p135
      %p138 = scmp.ne.s32.totalorder %s123, %s137
      %p139 = scmp.eq.s32.totalorder %s40, 0
      %p140 = por %p138, %p139
      %s142 = sadd.s32 %s141, 1
      %p145 = scmp.eq.s32.totalorder %s34, 1
      %p146 = scmp.ne.s32.totalorder %s141, %s143
      %p147 = scmp.eq.s32.totalorder %s34, 0
      %p148 = por %p146, %p147
      %p149 = scmp.ne.s32.totalorder %s141, %s143
      %p150 = scmp.eq.s32.totalorder %s39, 1
      %p151 = por %p149, %p150
      %p152 = scmp.ne.s32.totalorder %s143, %s144
      %p153 = scmp.eq.s32.totalorder %s39, 0
      %p154 = por %p152, %p153
      %p155 = scmp.ne.s32.totalorder %s143, %s144
      %p156 = scmp.eq.s32.totalorder %s40, 1
      %p157 = por %p155, %p156
      %p159 = scmp.ne.s32.totalorder %s144, %s158
      %p160 = scmp.eq.s32.totalorder %s40, 0
      %p161 = por %p159, %p160
      %s163 = sadd.s32 %s162, 1
      %p166 = scmp.eq.s32.totalorder %s34, 1
      %p167 = scmp.ne.s32.totalorder %s162, %s164
      %p168 = scmp.eq.s32.totalorder %s34, 0
      %p169 = por %p167, %p168
      %p170 = scmp.ne.s32.totalorder %s162, %s164
      %p171 = scmp.eq.s32.totalorder %s39, 1
      %p172 = por %p170, %p171
      %p173 = scmp.ne.s32.totalorder %s164, %s165
      %p174 = scmp.eq.s32.totalorder %s39, 0
      %p175 = por %p173, %p174
      %p176 = scmp.ne.s32.totalorder %s164, %s165
      %p177 = scmp.eq.s32.totalorder %s40, 1
      %p178 = por %p176, %p177
      %p180 = scmp.ne.s32.totalorder %s165, %s179
      %p181 = scmp.eq.s32.totalorder %s40, 0
      %p182 = por %p180, %p181
      %s184 = sadd.s32 %s183, 1
      %p187 = scmp.eq.s32.totalorder %s34, 1
      %p188 = scmp.ne.s32.totalorder %s183, %s185
      %p189 = scmp.eq.s32.totalorder %s34, 0
      %p190 = por %p188, %p189
      %p191 = scmp.ne.s32.totalorder %s183, %s185
      %p192 = scmp.eq.s32.totalorder %s39, 1
      %p193 = por %p191, %p192
      %p194 = scmp.ne.s32.totalorder %s185, %s186
      %p195 = scmp.eq.s32.totalorder %s39, 0
      %p196 = por %p194, %p195
      %p197 = scmp.ne.s32.totalorder %s185, %s186
      %p198 = scmp.eq.s32.totalorder %s40, 1
      %p199 = por %p197, %p198
      %p201 = scmp.ne.s32.totalorder %s186, %s200
      %p202 = scmp.eq.s32.totalorder %s40, 0
      %p203 = por %p201, %p202
      %s205 = sadd.s32 %s204, 1
      %p208 = scmp.eq.s32.totalorder %s34, 1
      %p209 = scmp.ne.s32.totalorder %s204, %s206
      %p210 = scmp.eq.s32.totalorder %s34, 0
      %p211 = por %p209, %p210
      %p212 = scmp.ne.s32.totalorder %s204, %s206
      %p213 = scmp.eq.s32.totalorder %s39, 1
      %p214 = por %p212, %p213
      %p215 = scmp.ne.s32.totalorder %s206, %s207
      %p216 = scmp.eq.s32.totalorder %s39, 0
      %p217 = por %p215, %p216
      %p218 = scmp.ne.s32.totalorder %s206, %s207
      %p219 = scmp.eq.s32.totalorder %s40, 1
      %p220 = por %p218, %p219
      %p222 = scmp.ne.s32.totalorder %s207, %s221
      %p223 = scmp.eq.s32.totalorder %s40, 0
      %p224 = por %p222, %p223
      %s226 = sadd.s32 %s225, 1
      %p229 = scmp.eq.s32.totalorder %s34, 1
      %p230 = scmp.ne.s32.totalorder %s225, %s227
      %p231 = scmp.eq.s32.totalorder %s34, 0
      %p232 = por %p230, %p231
      %p233 = scmp.ne.s32.totalorder %s225, %s227
      %p234 = scmp.eq.s32.totalorder %s39, 1
      %p235 = por %p233, %p234
      %p236 = scmp.ne.s32.totalorder %s227, %s228
      %p237 = scmp.eq.s32.totalorder %s39, 0
      %p238 = por %p236, %p237
      %p239 = scmp.ne.s32.totalorder %s227, %s228
      %p240 = scmp.eq.s32.totalorder %s40, 1
      %p241 = por %p239, %p240
      %p243 = scmp.ne.s32.totalorder %s228, %s242
      %p244 = scmp.eq.s32.totalorder %s40, 0
      %p245 = por %p243, %p244
      %s247 = sadd.s32 %s246, 1
      %p250 = scmp.eq.s32.totalorder %s34, 1
      %p251 = scmp.ne.s32.totalorder %s246, %s248
      %p252 = scmp.eq.s32.totalorder %s34, 0
      %p253 = por %p251, %p252
      %p254 = scmp.ne.s32.totalorder %s246, %s248
      %p255 = scmp.eq.s32.totalorder %s39, 1
      %p256 = por %p254, %p255
      %p257 = scmp.ne.s32.totalorder %s248, %s249
      %p258 = scmp.eq.s32.totalorder %s39, 0
      %p259 = por %p257, %p258
      %p260 = scmp.ne.s32.totalorder %s248, %s249
      %p261 = scmp.eq.s32.totalorder %s40, 1
      %p262 = por %p260, %p261
      %p264 = scmp.ne.s32.totalorder %s249, %s263
      %p265 = scmp.eq.s32.totalorder %s40, 0
      %p266 = por %p264, %p265
      %s268 = sadd.s32 %s267, 1
      %p271 = scmp.eq.s32.totalorder %s34, 1
      %p272 = scmp.ne.s32.totalorder %s267, %s269
      %p273 = scmp.eq.s32.totalorder %s34, 0
      %p274 = por %p272, %p273
      %p275 = scmp.ne.s32.totalorder %s267, %s269
      %p276 = scmp.eq.s32.totalorder %s39, 1
      %p277 = por %p275, %p276
      %p278 = scmp.ne.s32.totalorder %s269, %s270
      %p279 = scmp.eq.s32.totalorder %s39, 0
      %p280 = por %p278, %p279
      %p281 = scmp.ne.s32.totalorder %s269, %s270
      %p282 = scmp.eq.s32.totalorder %s40, 1
      %p283 = por %p281, %p282
      %p285 = scmp.ne.s32.totalorder %s270, %s284
      %p286 = scmp.eq.s32.totalorder %s40, 0
      %p287 = por %p285, %p286
      %s289 = sadd.s32 %s288, 1
      %p292 = scmp.eq.s32.totalorder %s34, 1
      %p293 = scmp.ne.s32.totalorder %s288, %s290
      %p294 = scmp.eq.s32.totalorder %s34, 0
      %p295 = por %p293, %p294
      %p296 = scmp.ne.s32.totalorder %s288, %s290
      %p297 = scmp.eq.s32.totalorder %s39, 1
      %p298 = por %p296, %p297
      %p299 = scmp.ne.s32.totalorder %s290, %s291
      %p300 = scmp.eq.s32.totalorder %s39, 0
      %p301 = por %p299, %p300
      %p302 = scmp.ne.s32.totalorder %s290, %s291
      %p303 = scmp.eq.s32.totalorder %s40, 1
      %p304 = por %p302, %p303
      %p306 = scmp.ne.s32.totalorder %s291, %s305
      %p307 = scmp.eq.s32.totalorder %s40, 0
      %p308 = por %p306, %p307
      %s310 = sadd.s32 %s309, 1
      %p313 = scmp.eq.s32.totalorder %s34, 1
      %p314 = scmp.ne.s32.totalorder %s309, %s311
      %p315 = scmp.eq.s32.totalorder %s34, 0
      %p316 = por %p314, %p315
      %p317 = scmp.ne.s32.totalorder %s309, %s311
      %p318 = scmp.eq.s32.totalorder %s39, 1
      %p319 = por %p317, %p318
      %p320 = scmp.ne.s32.totalorder %s311, %s312
      %p321 = scmp.eq.s32.totalorder %s39, 0
      %p322 = por %p320, %p321
      %p323 = scmp.ne.s32.totalorder %s311, %s312
      %p324 = scmp.eq.s32.totalorder %s40, 1
      %p325 = por %p323, %p324
      %p327 = scmp.ne.s32.totalorder %s312, %s326
      %p328 = scmp.eq.s32.totalorder %s40, 0
      %p329 = por %p327, %p328
      %s331 = sadd.s32 %s330, 1
      %p334 = scmp.eq.s32.totalorder %s34, 1
      %p335 = scmp.ne.s32.totalorder %s330, %s332
      %p336 = scmp.eq.s32.totalorder %s34, 0
      %p337 = por %p335, %p336
      %p338 = scmp.ne.s32.totalorder %s330, %s332
      %p339 = scmp.eq.s32.totalorder %s39, 1
      %p340 = por %p338, %p339
      %p341 = scmp.ne.s32.totalorder %s332, %s333
      %p342 = scmp.eq.s32.totalorder %s39, 0
      %p343 = por %p341, %p342
      %p344 = scmp.ne.s32.totalorder %s332, %s333
      %p345 = scmp.eq.s32.totalorder %s40, 1
      %p346 = por %p344, %p345
      %p348 = scmp.ne.s32.totalorder %s333, %s347
      %p349 = scmp.eq.s32.totalorder %s40, 0
      %p350 = por %p348, %p349
      %s352 = sadd.s32 %s351, 1
      %p355 = scmp.eq.s32.totalorder %s34, 1
      %p356 = scmp.ne.s32.totalorder %s351, %s353
      %p357 = scmp.eq.s32.totalorder %s34, 0
      %p358 = por %p356, %p357
      %p359 = scmp.ne.s32.totalorder %s351, %s353
      %p360 = scmp.eq.s32.totalorder %s39, 1
      %p361 = por %p359, %p360
      %p362 = scmp.ne.s32.totalorder %s353, %s354
      %p363 = scmp.eq.s32.totalorder %s39, 0
      %p364 = por %p362, %p363
      %p365 = scmp.ne.s32.totalorder %s353, %s354
      %p366 = scmp.eq.s32.totalorder %s40, 1
      %p367 = por %p365, %p366
      %p369 = scmp.ne.s32.totalorder %s354, %s368
      %p370 = scmp.eq.s32.totalorder %s40, 0
      %p371 = por %p369, %p370
      %s373 = sadd.s32 %s372, 1
      %p376 = scmp.eq.s32.totalorder %s34, 1
      %p377 = scmp.ne.s32.totalorder %s372, %s374
      %p378 = scmp.eq.s32.totalorder %s34, 0
      %p379 = por %p377, %p378
      %p380 = scmp.ne.s32.totalorder %s372, %s374
      %p381 = scmp.eq.s32.totalorder %s39, 1
      %p382 = por %p380, %p381
      %p383 = scmp.ne.s32.totalorder %s374, %s375
      %p384 = scmp.eq.s32.totalorder %s39, 0
      %p385 = por %p383, %p384
      %p386 = scmp.ne.s32.totalorder %s374, %s375
      %p387 = scmp.eq.s32.totalorder %s40, 1
      %p388 = por %p386, %p387
      %p390 = scmp.ne.s32.totalorder %s375, %s389
      %p391 = scmp.eq.s32.totalorder %s40, 0
      %p392 = por %p390, %p391
      %s394 = sadd.s32 %s393, 1
      %p397 = scmp.eq.s32.totalorder %s34, 1
      %p398 = scmp.ne.s32.totalorder %s393, %s395
      %p399 = scmp.eq.s32.totalorder %s34, 0
      %p400 = por %p398, %p399
      %p401 = scmp.ne.s32.totalorder %s393, %s395
      %p402 = scmp.eq.s32.totalorder %s39, 1
      %p403 = por %p401, %p402
      %p404 = scmp.ne.s32.totalorder %s395, %s396
      %p405 = scmp.eq.s32.totalorder %s39, 0
      %p406 = por %p404, %p405
      %p407 = scmp.ne.s32.totalorder %s395, %s396
      %p408 = scmp.eq.s32.totalorder %s40, 1
      %p409 = por %p407, %p408
      %p411 = scmp.ne.s32.totalorder %s396, %s410
      %p412 = scmp.eq.s32.totalorder %s40, 0
      %p413 = por %p411, %p412
      %s414 = ssub.s32 %s34, %s41
      %p415 = scmp.eq.s32.totalorder %s414, 0
      %s417 = sadd.s32 %s416, 1
      %s418 = scalar_select %p415, %s416, %s417
      %p421 = pneg %p415
      %p422 = scmp.eq.s32.totalorder %s34, 1
      %p423 = por %p421, %p422
      %p424 = scmp.ne.s32.totalorder %s416, %s419
      %p425 = scmp.eq.s32.totalorder %s34, 0
      %p426 = por %p424, %p425
      %p427 = scmp.ne.s32.totalorder %s416, %s419
      %p428 = scmp.eq.s32.totalorder %s39, 1
      %p429 = por %p427, %p428
      %p430 = scmp.ne.s32.totalorder %s419, %s420
      %p431 = scmp.eq.s32.totalorder %s39, 0
      %p432 = por %p430, %p431
      %p433 = scmp.ne.s32.totalorder %s419, %s420
      %p434 = scmp.eq.s32.totalorder %s40, 1
      %p435 = por %p433, %p434
      %p437 = scmp.ne.s32.totalorder %s420, %s436
      %p438 = scmp.eq.s32.totalorder %s40, 0
      %p439 = por %p437, %p438
      %p440 = scmp.le.s32.totalorder 1, %s34
      %p441 = scmp.lt.s32.totalorder %s34, 3
      %p442 = pnand %p440, %p441
      %p443 = pneg %p442
      // Predicated region
      $region9: #{tpu_custom_call.1} parent=5 // pred_check
        _
      $region10: #{tpu_custom_call.1} parent=5 // pred_check_branch
        %445 = sbr.rel (%p442) target = $region12
      $region11: #{tpu_custom_call.1} parent=5 // pred_region
        %s446 = ssub.s32 %s34, 1
        // Predicated region
        $region13: #{tpu_custom_call.1} parent=11 // pred_check
          %p447 = pneg %p133
        $region14: #{tpu_custom_call.1} parent=11 // pred_check_branch
          %449 = sbr.rel (%p447) target = $region16
        $region15: #{tpu_custom_call.1} parent=11 // pred_region
          %s451 = ssub.s32 1024, 1024
          %452 = vsyncadd [#allocation6], %s451
          %s453 = sshll.u32 [#allocation7], 4
          %s454 = int_to_ptr.vmem [resolvable:$true] %s453
          %459 = dma.hbm_to_vmem [thread:$0]  %s3, 1024, %s454, [#allocation6], 64, 64, 4
        $region16: #{tpu_custom_call.1} parent=11 // pred_fallthru
          _
        // Predicated region
        $region17: #{tpu_custom_call.1} parent=11 // pred_check
          %p460 = pneg %p154
        $region18: #{tpu_custom_call.1} parent=11 // pred_check_branch
          %462 = sbr.rel (%p460) target = $region20
        $region19: #{tpu_custom_call.1} parent=11 // pred_region
          _
        $region20: #{tpu_custom_call.1} parent=11 // pred_fallthru
          _
        // Predicated region
        $region21: #{tpu_custom_call.1} parent=11 // pred_check
          %p463 = pneg %p175
        $region22: #{tpu_custom_call.1} parent=11 // pred_check_branch
          %465 = sbr.rel (%p463) target = $region24
        $region23: #{tpu_custom_call.1} parent=11 // pred_region
          %s467 = ssub.s32 2048, 2048
          %468 = vsyncadd [#allocation9], %s467
          %s469 = sshll.u32 [#allocation8], 4
          %s470 = int_to_ptr.vmem [resolvable:$true] %s469
          %475 = dma.hbm_to_vmem [thread:$0]  %s5, 2048, %s470, [#allocation9], 128, 128, 8
        $region24: #{tpu_custom_call.1} parent=11 // pred_fallthru
          _
        // Predicated region
        $region25: #{tpu_custom_call.1} parent=11 // pred_check
          %p476 = pneg %p196
        $region26: #{tpu_custom_call.1} parent=11 // pred_check_branch
          %478 = sbr.rel (%p476) target = $region28
        $region27: #{tpu_custom_call.1} parent=11 // pred_region
          _
        $region28: #{tpu_custom_call.1} parent=11 // pred_fallthru
          _
        // Predicated region
        $region29: #{tpu_custom_call.1} parent=11 // pred_check
          %p479 = pneg %p217
        $region30: #{tpu_custom_call.1} parent=11 // pred_check_branch
          %481 = sbr.rel (%p479) target = $region32
        $region31: #{tpu_custom_call.1} parent=11 // pred_region
          %s483 = ssub.s32 1024, 1024
          %484 = vsyncadd [#allocation9], %s483
          %s485 = sshll.u32 [#allocation10], 4
          %s486 = int_to_ptr.vmem [resolvable:$true] %s485
          %491 = dma.hbm_to_vmem [thread:$0]  %s7, 1024, %s486, [#allocation9], 64, 64, 4
        $region32: #{tpu_custom_call.1} parent=11 // pred_fallthru
          _
        // Predicated region
        $region33: #{tpu_custom_call.1} parent=11 // pred_check
          %p492 = pneg %p238
        $region34: #{tpu_custom_call.1} parent=11 // pred_check_branch
          %494 = sbr.rel (%p492) target = $region36
        $region35: #{tpu_custom_call.1} parent=11 // pred_region
          _
        $region36: #{tpu_custom_call.1} parent=11 // pred_fallthru
          _
        // Predicated region
        $region37: #{tpu_custom_call.1} parent=11 // pred_check
          %p495 = pneg %p259
        $region38: #{tpu_custom_call.1} parent=11 // pred_check_branch
          %497 = sbr.rel (%p495) target = $region40
        $region39: #{tpu_custom_call.1} parent=11 // pred_region
          _
        $region40: #{tpu_custom_call.1} parent=11 // pred_fallthru
          _
        // Predicated region
        $region41: #{tpu_custom_call.1} parent=11 // pred_check
          %p498 = pneg %p280
        $region42: #{tpu_custom_call.1} parent=11 // pred_check_branch
          %500 = sbr.rel (%p498) target = $region44
        $region43: #{tpu_custom_call.1} parent=11 // pred_region
          _
        $region44: #{tpu_custom_call.1} parent=11 // pred_fallthru
          _
        // Predicated region
        $region45: #{tpu_custom_call.1} parent=11 // pred_check
          %p501 = pneg %p301
        $region46: #{tpu_custom_call.1} parent=11 // pred_check_branch
          %503 = sbr.rel (%p501) target = $region48
        $region47: #{tpu_custom_call.1} parent=11 // pred_region
          _
        $region48: #{tpu_custom_call.1} parent=11 // pred_fallthru
          _
        // Predicated region
        $region49: #{tpu_custom_call.1} parent=11 // pred_check
          %p504 = pneg %p322
        $region50: #{tpu_custom_call.1} parent=11 // pred_check_branch
          %506 = sbr.rel (%p504) target = $region52
        $region51: #{tpu_custom_call.1} parent=11 // pred_region
          _
        $region52: #{tpu_custom_call.1} parent=11 // pred_fallthru
          _
        // Predicated region
        $region53: #{tpu_custom_call.1} parent=11 // pred_check
          %p507 = pneg %p343
        $region54: #{tpu_custom_call.1} parent=11 // pred_check_branch
          %509 = sbr.rel (%p507) target = $region56
        $region55: #{tpu_custom_call.1} parent=11 // pred_region
          %s511 = ssub.s32 2048, 2048
          %512 = vsyncadd [#allocation12], %s511
          %s513 = sshll.u32 [#allocation11], 4
          %s514 = int_to_ptr.vmem [resolvable:$true] %s513
          %519 = dma.hbm_to_vmem [thread:$0]  %s13, 2048, %s514, [#allocation12], 128, 128, 8
        $region56: #{tpu_custom_call.1} parent=11 // pred_fallthru
          _
        // Predicated region
        $region57: #{tpu_custom_call.1} parent=11 // pred_check
          %p520 = pneg %p364
        $region58: #{tpu_custom_call.1} parent=11 // pred_check_branch
          %522 = sbr.rel (%p520) target = $region60
        $region59: #{tpu_custom_call.1} parent=11 // pred_region
          _
        $region60: #{tpu_custom_call.1} parent=11 // pred_fallthru
          _
        // Predicated region
        $region61: #{tpu_custom_call.1} parent=11 // pred_check
          %p523 = pneg %p385
        $region62: #{tpu_custom_call.1} parent=11 // pred_check_branch
          %525 = sbr.rel (%p523) target = $region64
        $region63: #{tpu_custom_call.1} parent=11 // pred_region
          %s527 = ssub.s32 2048, 2048
          %528 = vsyncadd [#allocation12], %s527
          %s529 = sshll.u32 [#allocation13], 4
          %s530 = int_to_ptr.vmem [resolvable:$true] %s529
          %535 = dma.hbm_to_vmem [thread:$0]  %s15, 2048, %s530, [#allocation12], 64, 64, 4
        $region64: #{tpu_custom_call.1} parent=11 // pred_fallthru
          _
        // Predicated region
        $region65: #{tpu_custom_call.1} parent=11 // pred_check
          %p536 = pneg %p406
        $region66: #{tpu_custom_call.1} parent=11 // pred_check_branch
          %538 = sbr.rel (%p536) target = $region68
        $region67: #{tpu_custom_call.1} parent=11 // pred_region
          _
        $region68: #{tpu_custom_call.1} parent=11 // pred_fallthru
          _
      $region12: #{tpu_custom_call.1} parent=5 // pred_fallthru
        _
      %p539 = scmp.lt.s32.totalorder %s34, 2
      // Predicated region
      $region69: #{tpu_custom_call.1} parent=5 // pred_check
        %p540 = pneg %p539
      $region70: #{tpu_custom_call.1} parent=5 // pred_check_branch
        %542 = sbr.rel (%p540) target = $region72
      $region71: #{tpu_custom_call.1} parent=5 // pred_region
        // Predicated region
        $region73: #{tpu_custom_call.1} parent=71 // pred_check
          %p543 = pneg %p54
        $region74: #{tpu_custom_call.1} parent=71 // pred_check_branch
          %545 = sbr.rel (%p543) target = $region76
        $region75: #{tpu_custom_call.1} parent=71 // pred_region
          %s546 = sand.u32 %s44, 1
          %s547 = scalar_lea.sflag [#allocation3], %s546
          %s548 = sand.u32 %s44, 1
          %s549 = smul.addr %s548, 8
          %s550 = scalar_lea.vmem [#allocation2], %s549
          %s552 = ssub.s32 128, 128
          %553 = vsyncadd %s547, %s552
          %s554 = smul.addr %s34, 128
          %s555 = scalar_lea.hbm %s0, %s554
          %s557 = sshll.u32 %s550, 4
          %s558 = int_to_ptr.vmem [resolvable:$true] %s557
          %560 = dma.hbm_to_vmem [thread:$0]  %s555, 128, %s558, %s547
        $region76: #{tpu_custom_call.1} parent=71 // pred_fallthru
          _
        // Predicated region
        $region77: #{tpu_custom_call.1} parent=71 // pred_check
          %p561 = pneg %p80
        $region78: #{tpu_custom_call.1} parent=71 // pred_check_branch
          %563 = sbr.rel (%p561) target = $region80
        $region79: #{tpu_custom_call.1} parent=71 // pred_region
          %s564 = sand.u32 %s34, 1
          %s565 = scalar_lea.sflag [#allocation6], %s564
          %s566 = sand.u32 %s70, 1
          %s567 = smul.addr %s566, 128
          %s568 = scalar_lea.vmem [#allocation5], %s567
          %s570 = ssub.s32 2048, 2048
          %571 = vsyncadd %s565, %s570
          %s572 = smul.addr %s34, 16
          %s573 = smul.addr %s572, 128
          %s574 = scalar_lea.hbm %s1, %s573
          %s575 = sshll.u32 %s568, 4
          %s576 = int_to_ptr.vmem [resolvable:$true] %s575
          %581 = dma.hbm_to_vmem [thread:$0]  %s574, 2048, %s576, %s565, 128, 128, 8
        $region80: #{tpu_custom_call.1} parent=71 // pred_fallthru
          _
        // Predicated region
        $region81: #{tpu_custom_call.1} parent=71 // pred_check
          %p582 = pneg %p106
        $region82: #{tpu_custom_call.1} parent=71 // pred_check_branch
          %584 = sbr.rel (%p582) target = $region84
        $region83: #{tpu_custom_call.1} parent=71 // pred_region
          %p585 = scmp.lt.s32.totalorder %s34, 1
          %s586 = scalar_select %p585, %s34, 1
          %s587 = scalar_lea.vmem %s2, %s586
        $region84: #{tpu_custom_call.1} parent=71 // pred_fallthru
          _
      $region72: #{tpu_custom_call.1} parent=5 // pred_fallthru
        _
      %p588 = scmp.le.s32.totalorder 1, %s34
      %p589 = scmp.lt.s32.totalorder %s34, 3
      %p590 = pnand %p588, %p589
      %p591 = pneg %p590
      // Predicated region
      $region85: #{tpu_custom_call.1} parent=5 // pred_check
        _
      $region86: #{tpu_custom_call.1} parent=5 // pred_check_branch
        %593 = sbr.rel (%p590) target = $region88
      $region87: #{tpu_custom_call.1} parent=5 // pred_region
        %s594 = ssub.s32 %s34, 1
        %s595 = sand.u32 %s47, 1
        %s596 = scalar_lea.sflag [#allocation3], %s595
        %s597 = sand.u32 %s47, 1
        %s598 = smul.addr %s597, 8
        %s599 = scalar_lea.vmem [#allocation2], %s598
        // Predicated region
        $region89: #{tpu_custom_call.1} parent=87 // pred_check
          %p600 = pneg %p60
        $region90: #{tpu_custom_call.1} parent=87 // pred_check_branch
          %602 = sbr.rel (%p600) target = $region92
        $region91: #{tpu_custom_call.1} parent=87 // pred_region
          %603 = dma.done %s596, 128
        $region92: #{tpu_custom_call.1} parent=87 // pred_fallthru
          _
        %s604 = sand.u32 %s39, 1
        %s605 = scalar_lea.sflag [#allocation6], %s604
        %s606 = sand.u32 %s73, 1
        %s607 = smul.addr %s606, 128
        %s608 = scalar_lea.vmem [#allocation5], %s607
        // Predicated region
        $region93: #{tpu_custom_call.1} parent=87 // pred_check
          %p609 = pneg %p86
        $region94: #{tpu_custom_call.1} parent=87 // pred_check_branch
          %611 = sbr.rel (%p609) target = $region96
        $region95: #{tpu_custom_call.1} parent=87 // pred_region
          %612 = dma.done %s605, 2048
        $region96: #{tpu_custom_call.1} parent=87 // pred_fallthru
          _
        // Predicated region
        $region97: #{tpu_custom_call.1} parent=87 // pred_check
          %p613 = pneg %p133
        $region98: #{tpu_custom_call.1} parent=87 // pred_check_branch
          %615 = sbr.rel (%p613) target = $region100
        $region99: #{tpu_custom_call.1} parent=87 // pred_region
          %616 = dma.done [#allocation6], 1024
        $region100: #{tpu_custom_call.1} parent=87 // pred_fallthru
          _
        // Predicated region
        $region101: #{tpu_custom_call.1} parent=87 // pred_check
          %p617 = pneg %p175
        $region102: #{tpu_custom_call.1} parent=87 // pred_check_branch
          %619 = sbr.rel (%p617) target = $region104
        $region103: #{tpu_custom_call.1} parent=87 // pred_region
          %620 = dma.done [#allocation9], 2048
        $region104: #{tpu_custom_call.1} parent=87 // pred_fallthru
          _
        // Predicated region
        $region105: #{tpu_custom_call.1} parent=87 // pred_check
          %p621 = pneg %p217
        $region106: #{tpu_custom_call.1} parent=87 // pred_check_branch
          %623 = sbr.rel (%p621) target = $region108
        $region107: #{tpu_custom_call.1} parent=87 // pred_region
          %624 = dma.done [#allocation9], 1024
        $region108: #{tpu_custom_call.1} parent=87 // pred_fallthru
          _
        // Predicated region
        $region109: #{tpu_custom_call.1} parent=87 // pred_check
          %p625 = pneg %p343
        $region110: #{tpu_custom_call.1} parent=87 // pred_check_branch
          %627 = sbr.rel (%p625) target = $region112
        $region111: #{tpu_custom_call.1} parent=87 // pred_region
          %628 = dma.done [#allocation12], 2048
        $region112: #{tpu_custom_call.1} parent=87 // pred_fallthru
          _
        // Predicated region
        $region113: #{tpu_custom_call.1} parent=87 // pred_check
          %p629 = pneg %p385
        $region114: #{tpu_custom_call.1} parent=87 // pred_check_branch
          %631 = sbr.rel (%p629) target = $region116
        $region115: #{tpu_custom_call.1} parent=87 // pred_region
          %632 = dma.done [#allocation12], 2048
        $region116: #{tpu_custom_call.1} parent=87 // pred_fallthru
          _
        %s633 = sand.u32 %s47, 1
        %s634 = scalar_lea.sflag [#allocation3], %s633
        %s635 = sand.u32 %s47, 1
        %s636 = smul.addr %s635, 8
        %s637 = scalar_lea.vmem [#allocation2], %s636
        %p638 = pneg %p60
        %p639 = pneg %p57
        %s640 = sand.u32 %s39, 1
        %s641 = scalar_lea.sflag [#allocation6], %s640
        %s642 = sand.u32 %s73, 1
        %s643 = smul.addr %s642, 128
        %s644 = scalar_lea.vmem [#allocation5], %s643
        %p645 = pneg %p86
        %p646 = pneg %p83
        %p647 = scmp.lt.s32.totalorder %s39, 1
        %s648 = scalar_select %p647, %s39, 1
        %s649 = scalar_lea.vmem %s2, %s648
        %p650 = pneg %p112
        %p651 = pneg %p109
        %p652 = pneg %p133
        %p653 = pneg %p130
        %p654 = pneg %p154
        %p655 = pneg %p151
        %p656 = pneg %p175
        %p657 = pneg %p172
        %p658 = pneg %p196
        %p659 = pneg %p193
        %p660 = pneg %p217
        %p661 = pneg %p214
        %p662 = pneg %p238
        %p663 = pneg %p235
        %p664 = pneg %p259
        %p665 = pneg %p256
        %p666 = pneg %p280
        %p667 = pneg %p277
        %p668 = pneg %p301
        %p669 = pneg %p298
        %p670 = pneg %p322
        %p671 = pneg %p319
        %p672 = pneg %p343
        %p673 = pneg %p340
        %p674 = pneg %p364
        %p675 = pneg %p361
        %p676 = pneg %p385
        %p677 = pneg %p382
        %p678 = pneg %p406
        %p679 = pneg %p403
        %p680 = pneg %p432
        %p681 = pneg %p429
        %s682 = sand.u32 %s419, 1
        %s683 = scalar_lea.sflag [#allocation4], %s682
        %s684 = sand.u32 %s419, 1
        %s685 = smul.addr %s684, 8
        %s686 = scalar_lea.vmem [#allocation14], %s685
        %p687 = scmp.lt.s32.totalorder %s39, 1
        %s688 = scalar_select %p687, %s39, 1
        %s689 = scalar_lea.vmem %s2, %s688
        %v691 = vld [vmem:[%s599] sm:$0xff]
        %v692 = vld [vmem:[%s608] sm:$0xff]
        %v693 = vld [vmem:[%s608 + $0x8] sm:$0xff]
        %v694 = vld [vmem:[%s608 + $0x10] sm:$0xff]
        %v695 = vld [vmem:[%s608 + $0x18] sm:$0xff]
        %v696 = vld [vmem:[%s608 + $0x20] sm:$0xff]
        %v697 = vld [vmem:[%s608 + $0x28] sm:$0xff]
        %v698 = vld [vmem:[%s608 + $0x30] sm:$0xff]
        %v699 = vld [vmem:[%s608 + $0x38] sm:$0xff]
        %v700 = vld [vmem:[%s608 + $0x40] sm:$0xff]
        %v701 = vld [vmem:[%s608 + $0x48] sm:$0xff]
        %v702 = vld [vmem:[%s608 + $0x50] sm:$0xff]
        %v703 = vld [vmem:[%s608 + $0x58] sm:$0xff]
        %v704 = vld [vmem:[%s608 + $0x60] sm:$0xff]
        %v705 = vld [vmem:[%s608 + $0x68] sm:$0xff]
        %v706 = vld [vmem:[%s608 + $0x70] sm:$0xff]
        %v707 = vld [vmem:[%s608 + $0x78] sm:$0xff]
        %v708 = vld [vmem:[%s689] sm:$0x1]
        %v709 = vpack.c.bf16 %v691, %v691
        %v710 = vpack.c.bf16 %v693, %v692
        %v711 = vpack.c.bf16 %v695, %v694
        %v712 = vpack.c.bf16 %v697, %v696
        %v713 = vpack.c.bf16 %v699, %v698
        %v714 = vpack.c.bf16 %v701, %v700
        %v715 = vpack.c.bf16 %v703, %v702
        %v716 = vpack.c.bf16 %v705, %v704
        %v717 = vpack.c.bf16 %v707, %v706
        %v718 = vld [vmem:[#allocation7] sm:$0xf]
        %v719 = vld [vmem:[#allocation7 + $0x4] sm:$0xf]
        %v720 = vld [vmem:[#allocation7 + $0x8] sm:$0xf]
        %v721 = vld [vmem:[#allocation7 + $0xc] sm:$0xf]
        %v722 = vld [vmem:[#allocation7 + $0x10] sm:$0xf]
        %v723 = vld [vmem:[#allocation7 + $0x14] sm:$0xf]
        %v724 = vld [vmem:[#allocation7 + $0x18] sm:$0xf]
        %v725 = vld [vmem:[#allocation7 + $0x1c] sm:$0xf]
        %v726 = vld [vmem:[#allocation7 + $0x20] sm:$0xf]
        %v727 = vld [vmem:[#allocation7 + $0x24] sm:$0xf]
        %v728 = vld [vmem:[#allocation7 + $0x28] sm:$0xf]
        %v729 = vld [vmem:[#allocation7 + $0x2c] sm:$0xf]
        %v730 = vld [vmem:[#allocation7 + $0x30] sm:$0xf]
        %v731 = vld [vmem:[#allocation7 + $0x34] sm:$0xf]
        %v732 = vld [vmem:[#allocation7 + $0x38] sm:$0xf]
        %v733 = vld [vmem:[#allocation7 + $0x3c] sm:$0xf]
        %v734 = vld [vmem:[%s4] sm:$0x1]
        %v736 = vlaneseq
        %v737 = vshrl.u32 %v736, 7
        %v738 = vsub.s32 0, %v737
        %v739 = vrot.slane %v734, %v738
        %v757 = vunpack.c.l.b16 %v718
        %v758 = vunpack.c.l.b16 %v719
        %v759 = vunpack.c.l.b16 %v720
        %v760 = vunpack.c.l.b16 %v721
        %v761 = vunpack.c.l.b16 %v722
        %v762 = vunpack.c.l.b16 %v723
        %v763 = vunpack.c.l.b16 %v724
        %v764 = vunpack.c.l.b16 %v725
        %v765 = vunpack.c.l.b16 %v726
        %v766 = vunpack.c.l.b16 %v727
        %v767 = vunpack.c.l.b16 %v728
        %v768 = vunpack.c.l.b16 %v729
        %v769 = vunpack.c.l.b16 %v730
        %v770 = vunpack.c.l.b16 %v731
        %v771 = vunpack.c.l.b16 %v732
        %v772 = vunpack.c.l.b16 %v733
        %v773 = vpack.c.b16 %v758, %v757
        %v774 = vpack.c.b16 %v760, %v759
        %v775 = vpack.c.b16 %v762, %v761
        %v776 = vpack.c.b16 %v764, %v763
        %v777 = vpack.c.b16 %v766, %v765
        %v778 = vpack.c.b16 %v768, %v767
        %v779 = vpack.c.b16 %v770, %v769
        %v780 = vpack.c.b16 %v772, %v771
        %789 = vmatprep.subr.bf16.mxu0 0
        %790 = vmatpush1.bf16.msra.mxu0 %v773
        %791 = vmatprep.subr.bf16.mxu0 0
        %792 = vmatpush1.bf16.msra.mxu0 %v774
        %793 = vmatprep.subr.bf16.mxu0 0
        %794 = vmatpush1.bf16.msra.mxu0 %v775
        %795 = vmatprep.subr.bf16.mxu0 0
        %796 = vmatpush1.bf16.msra.mxu0 %v776
        %797 = vmatprep.subr.bf16.mxu0 0
        %798 = vmatpush1.bf16.msra.mxu0 %v777
        %799 = vmatprep.subr.bf16.mxu0 0
        %800 = vmatpush1.bf16.msra.mxu0 %v778
        %801 = vmatprep.subr.bf16.mxu0 0
        %802 = vmatpush1.bf16.msra.mxu0 %v779
        %803 = vmatprep.subr.bf16.mxu0 0
        %804 = vmatpush1.bf16.msra.mxu0 %v780
        %805 = vmatprep.subr.bf16.mxu0 0
        %806 = vmatpush1.bf16.msra.mxu0 0
        %807 = vmatprep.subr.bf16.mxu0 0
        %808 = vmatpush1.bf16.msra.mxu0 0
        %809 = vmatprep.subr.bf16.mxu0 0
        %810 = vmatpush1.bf16.msra.mxu0 0
        %811 = vmatprep.subr.bf16.mxu0 0
        %812 = vmatpush1.bf16.msra.mxu0 0
        %813 = vmatprep.subr.bf16.mxu0 0
        %814 = vmatpush1.bf16.msra.mxu0 0
        %815 = vmatprep.subr.bf16.mxu0 0
        %816 = vmatpush1.bf16.msra.mxu0 0
        %817 = vmatprep.subr.bf16.mxu0 0
        %818 = vmatpush1.bf16.msra.mxu0 0
        %819 = vmatprep.subr.bf16.mxu0 0
        %820 = vmatpush1.bf16.msra.mxu0 0
        %821 = vmatprep.mubr.bf16.mxu0 0
        %822 = vmatmul.mubr.bf16.gmra.mrb[0].mxu0 %v709
        %v823 = vpop.f32.mrb[0].mxu0
        %v824 = vadd.f32 %v739, %v823
        %v825 = vpop.f32.mrb[0].mxu0
        %v826 = vpop.f32.mrb[0].mxu0
        %v827 = vpop.f32.mrb[0].mxu0
        %828 = vdwg.mxu0
        %v829 = vld [vmem:[#allocation8] sm:$0xff]
        %v830 = vld [vmem:[#allocation8 + $0x8] sm:$0xff]
        %v831 = vld [vmem:[#allocation8 + $0x10] sm:$0xff]
        %v832 = vld [vmem:[#allocation8 + $0x18] sm:$0xff]
        %v833 = vld [vmem:[#allocation8 + $0x20] sm:$0xff]
        %v834 = vld [vmem:[#allocation8 + $0x28] sm:$0xff]
        %v835 = vld [vmem:[#allocation8 + $0x30] sm:$0xff]
        %v836 = vld [vmem:[#allocation8 + $0x38] sm:$0xff]
        %v837 = vld [vmem:[#allocation8 + $0x40] sm:$0xff]
        %v838 = vld [vmem:[#allocation8 + $0x48] sm:$0xff]
        %v839 = vld [vmem:[#allocation8 + $0x50] sm:$0xff]
        %v840 = vld [vmem:[#allocation8 + $0x58] sm:$0xff]
        %v841 = vld [vmem:[#allocation8 + $0x60] sm:$0xff]
        %v842 = vld [vmem:[#allocation8 + $0x68] sm:$0xff]
        %v843 = vld [vmem:[#allocation8 + $0x70] sm:$0xff]
        %v844 = vld [vmem:[#allocation8 + $0x78] sm:$0xff]
        %v845 = vld [vmem:[%s6] sm:$0x3]
        %v847 = vlaneseq
        %v848 = vshrl.u32 %v847, 7
        %v849 = vsub.s32 0, %v848
        %v850 = vrot.slane %v845, %v849
        %v851 = vlaneseq
        %v852 = vshrl.u32 %v851, 7
        %v853 = vsub.s32 1, %v852
        %v854 = vrot.slane %v845, %v853
        %v873 = vunpack.c.l.b16 %v829
        %v874 = vunpack.c.h.b16 %v829
        %v875 = vunpack.c.l.b16 %v830
        %v876 = vunpack.c.h.b16 %v830
        %v877 = vunpack.c.l.b16 %v831
        %v878 = vunpack.c.h.b16 %v831
        %v879 = vunpack.c.l.b16 %v832
        %v880 = vunpack.c.h.b16 %v832
        %v881 = vunpack.c.l.b16 %v833
        %v882 = vunpack.c.h.b16 %v833
        %v883 = vunpack.c.l.b16 %v834
        %v884 = vunpack.c.h.b16 %v834
        %v885 = vunpack.c.l.b16 %v835
        %v886 = vunpack.c.h.b16 %v835
        %v887 = vunpack.c.l.b16 %v836
        %v888 = vunpack.c.h.b16 %v836
        %v889 = vunpack.c.l.b16 %v837
        %v890 = vunpack.c.h.b16 %v837
        %v891 = vunpack.c.l.b16 %v838
        %v892 = vunpack.c.h.b16 %v838
        %v893 = vunpack.c.l.b16 %v839
        %v894 = vunpack.c.h.b16 %v839
        %v895 = vunpack.c.l.b16 %v840
        %v896 = vunpack.c.h.b16 %v840
        %v897 = vunpack.c.l.b16 %v841
        %v898 = vunpack.c.h.b16 %v841
        %v899 = vunpack.c.l.b16 %v842
        %v900 = vunpack.c.h.b16 %v842
        %v901 = vunpack.c.l.b16 %v843
        %v902 = vunpack.c.h.b16 %v843
        %v903 = vunpack.c.l.b16 %v844
        %v904 = vunpack.c.h.b16 %v844
        %v905 = vpack.c.b16 %v875, %v873
        %v906 = vpack.c.b16 %v876, %v874
        %v907 = vpack.c.b16 %v879, %v877
        %v908 = vpack.c.b16 %v880, %v878
        %v909 = vpack.c.b16 %v883, %v881
        %v910 = vpack.c.b16 %v884, %v882
        %v911 = vpack.c.b16 %v887, %v885
        %v912 = vpack.c.b16 %v888, %v886
        %v913 = vpack.c.b16 %v891, %v889
        %v914 = vpack.c.b16 %v892, %v890
        %v915 = vpack.c.b16 %v895, %v893
        %v916 = vpack.c.b16 %v896, %v894
        %v917 = vpack.c.b16 %v899, %v897
        %v918 = vpack.c.b16 %v900, %v898
        %v919 = vpack.c.b16 %v903, %v901
        %v920 = vpack.c.b16 %v904, %v902
        %937 = vmatprep.subr.bf16.mxu0 %v906
        %938 = vmatpush1.bf16.msra.mxu0 %v905
        %939 = vmatprep.subr.bf16.mxu0 %v908
        %940 = vmatpush1.bf16.msra.mxu0 %v907
        %941 = vmatprep.subr.bf16.mxu0 %v910
        %942 = vmatpush1.bf16.msra.mxu0 %v909
        %943 = vmatprep.subr.bf16.mxu0 %v912
        %944 = vmatpush1.bf16.msra.mxu0 %v911
        %945 = vmatprep.subr.bf16.mxu0 %v914
        %946 = vmatpush1.bf16.msra.mxu0 %v913
        %947 = vmatprep.subr.bf16.mxu0 %v916
        %948 = vmatpush1.bf16.msra.mxu0 %v915
        %949 = vmatprep.subr.bf16.mxu0 %v918
        %950 = vmatpush1.bf16.msra.mxu0 %v917
        %951 = vmatprep.subr.bf16.mxu0 %v920
        %952 = vmatpush1.bf16.msra.mxu0 %v919
        %953 = vmatprep.subr.bf16.mxu0 0
        %954 = vmatpush1.bf16.msra.mxu0 0
        %955 = vmatprep.subr.bf16.mxu0 0
        %956 = vmatpush1.bf16.msra.mxu0 0
        %957 = vmatprep.subr.bf16.mxu0 0
        %958 = vmatpush1.bf16.msra.mxu0 0
        %959 = vmatprep.subr.bf16.mxu0 0
        %960 = vmatpush1.bf16.msra.mxu0 0
        %961 = vmatprep.subr.bf16.mxu0 0
        %962 = vmatpush1.bf16.msra.mxu0 0
        %963 = vmatprep.subr.bf16.mxu0 0
        %964 = vmatpush1.bf16.msra.mxu0 0
        %965 = vmatprep.subr.bf16.mxu0 0
        %966 = vmatpush1.bf16.msra.mxu0 0
        %967 = vmatprep.subr.bf16.mxu0 0
        %968 = vmatpush1.bf16.msra.mxu0 0
        %969 = vmatprep.mubr.bf16.mxu0 0
        %970 = vmatmul.mubr.bf16.gmra.mrb[0].mxu0 %v710
        %v971 = vpop.f32.mrb[0].mxu0
        %v972 = vadd.f32 %v850, %v971
        %v973 = vpop.f32.mrb[0].mxu0
        %v974 = vadd.f32 %v854, %v973
        %v975 = vpop.f32.mrb[0].mxu0
        %v976 = vadd.f32 %v850, %v975
        %v977 = vpop.f32.mrb[0].mxu0
        %v978 = vadd.f32 %v854, %v977
        %979 = vmatprep.mubr.bf16.mxu0 0
        %980 = vmatmul.mubr.bf16.gmra.mrb[0].mxu0 %v711
        %v981 = vpop.f32.mrb[0].mxu0
        %v982 = vadd.f32 %v850, %v981
        %v983 = vpop.f32.mrb[0].mxu0
        %v984 = vadd.f32 %v854, %v983
        %v985 = vpop.f32.mrb[0].mxu0
        %v986 = vadd.f32 %v850, %v985
        %v987 = vpop.f32.mrb[0].mxu0
        %v988 = vadd.f32 %v854, %v987
        %989 = vmatprep.mubr.bf16.mxu0 0
        %990 = vmatmul.mubr.bf16.gmra.mrb[0].mxu0 %v712
        %v991 = vpop.f32.mrb[0].mxu0
        %v992 = vadd.f32 %v850, %v991
        %v993 = vpop.f32.mrb[0].mxu0
        %v994 = vadd.f32 %v854, %v993
        %v995 = vpop.f32.mrb[0].mxu0
        %v996 = vadd.f32 %v850, %v995
        %v997 = vpop.f32.mrb[0].mxu0
        %v998 = vadd.f32 %v854, %v997
        %999 = vmatprep.mubr.bf16.mxu0 0
        %1000 = vmatmul.mubr.bf16.gmra.mrb[0].mxu0 %v713
        %v1001 = vpop.f32.mrb[0].mxu0
        %v1002 = vadd.f32 %v850, %v1001
        %v1003 = vpop.f32.mrb[0].mxu0
        %v1004 = vadd.f32 %v854, %v1003
        %v1005 = vpop.f32.mrb[0].mxu0
        %v1006 = vadd.f32 %v850, %v1005
        %v1007 = vpop.f32.mrb[0].mxu0
        %v1008 = vadd.f32 %v854, %v1007
        %1009 = vmatprep.mubr.bf16.mxu0 0
        %1010 = vmatmul.mubr.bf16.gmra.mrb[0].mxu0 %v714
        %v1011 = vpop.f32.mrb[0].mxu0
        %v1012 = vadd.f32 %v850, %v1011
        %v1013 = vpop.f32.mrb[0].mxu0
        %v1014 = vadd.f32 %v854, %v1013
        %v1015 = vpop.f32.mrb[0].mxu0
        %v1016 = vadd.f32 %v850, %v1015
        %v1017 = vpop.f32.mrb[0].mxu0
        %v1018 = vadd.f32 %v854, %v1017
        %1019 = vmatprep.mubr.bf16.mxu0 0
        %1020 = vmatmul.mubr.bf16.gmra.mrb[0].mxu0 %v715
        %v1021 = vpop.f32.mrb[0].mxu0
        %v1022 = vadd.f32 %v850, %v1021
        %v1023 = vpop.f32.mrb[0].mxu0
        %v1024 = vadd.f32 %v854, %v1023
        %v1025 = vpop.f32.mrb[0].mxu0
        %v1026 = vadd.f32 %v850, %v1025
        %v1027 = vpop.f32.mrb[0].mxu0
        %v1028 = vadd.f32 %v854, %v1027
        %1029 = vmatprep.mubr.bf16.mxu0 0
        %1030 = vmatmul.mubr.bf16.gmra.mrb[0].mxu0 %v716
        %v1031 = vpop.f32.mrb[0].mxu0
        %v1032 = vadd.f32 %v850, %v1031
        %v1033 = vpop.f32.mrb[0].mxu0
        %v1034 = vadd.f32 %v854, %v1033
        %v1035 = vpop.f32.mrb[0].mxu0
        %v1036 = vadd.f32 %v850, %v1035
        %v1037 = vpop.f32.mrb[0].mxu0
        %v1038 = vadd.f32 %v854, %v1037
        %1039 = vmatprep.mubr.bf16.mxu0 0
        %1040 = vmatmul.mubr.bf16.gmra.mrb[0].mxu0 %v717
        %v1041 = vpop.f32.mrb[0].mxu0
        %v1042 = vadd.f32 %v850, %v1041
        %v1043 = vpop.f32.mrb[0].mxu0
        %v1044 = vadd.f32 %v854, %v1043
        %v1045 = vpop.f32.mrb[0].mxu0
        %v1046 = vadd.f32 %v850, %v1045
        %v1047 = vpop.f32.mrb[0].mxu0
        %v1048 = vadd.f32 %v854, %v1047
        %1049 = vdwg.mxu0
        %v1050 = vpack.c.bf16 %v824, %v824
        %1052 = vrot.lane.b32.xlu0 %v1050, 96
        %v1053 = vpop.permute.xlu0 %1052
        %1054 = vrot.lane.b32.xlu0 %v1050, 64
        %v1055 = vpop.permute.xlu0 %1054
        %1056 = vrot.lane.b32.xlu0 %v1050, 32
        %v1057 = vpop.permute.xlu0 %1056
        %v1059 = vunpack.c.l.s4 1983009808
        %v1060 = vunpack.c.0.s8 %v1059
        %v1061 = vlaneseq
        %v1062 = vshrl.u32 %v1061, 7
        %v1063 = vsub.s32 %v1060, %v1062
        %v1064 = vrot.slane %v1050, %v1063
        %v1067 = vunpack.c.l.s4 1983009808
        %v1068 = vunpack.c.0.s8 %v1067
        %v1069 = vlaneseq
        %v1070 = vshrl.u32 %v1069, 7
        %v1071 = vsub.s32 %v1068, %v1070
        %v1072 = vrot.slane %v1055, %v1071
        %v1073 = vcombine.low %v1064, %v1072
        %v1074 = vcombine.high %v1064, %v1072
        %v1076 = vunpack.c.l.s4 1934713408
        %v1077 = vunpack.c.0.s8 %v1076
        %v1078 = vlaneseq
        %v1079 = vshrl.u32 %v1078, 7
        %v1080 = vsub.s32 %v1077, %v1079
        %v1081 = vrot.slane %v1073, %v1080
        %v1083 = vunpack.c.l.s4 1934713408
        %v1084 = vunpack.c.0.s8 %v1083
        %v1085 = vlaneseq
        %v1086 = vshrl.u32 %v1085, 7
        %v1087 = vsub.s32 %v1084, %v1086
        %v1088 = vrot.slane %v1074, %v1087
        %v1089 = vcombine.high %v1081, 0
        %v1090 = vcombine.high %v1088, 0
        %v1093 = vunpack.c.l.s4 1983009808
        %v1094 = vunpack.c.0.s8 %v1093
        %v1095 = vlaneseq
        %v1096 = vshrl.u32 %v1095, 7
        %v1097 = vsub.s32 %v1094, %v1096
        %v1098 = vrot.slane %v1053, %v1097
        %v1101 = vunpack.c.l.s4 1983009808
        %v1102 = vunpack.c.0.s8 %v1101
        %v1103 = vlaneseq
        %v1104 = vshrl.u32 %v1103, 7
        %v1105 = vsub.s32 %v1102, %v1104
        %v1106 = vrot.slane %v1057, %v1105
        %v1107 = vcombine.low %v1098, %v1106
        %v1108 = vcombine.high %v1098, %v1106
        %v1110 = vunpack.c.l.s4 1934713408
        %v1111 = vunpack.c.0.s8 %v1110
        %v1112 = vlaneseq
        %v1113 = vshrl.u32 %v1112, 7
        %v1114 = vsub.s32 %v1111, %v1113
        %v1115 = vrot.slane %v1107, %v1114
        %v1117 = vunpack.c.l.s4 1934713408
        %v1118 = vunpack.c.0.s8 %v1117
        %v1119 = vlaneseq
        %v1120 = vshrl.u32 %v1119, 7
        %v1121 = vsub.s32 %v1118, %v1120
        %v1122 = vrot.slane %v1108, %v1121
        %v1123 = vcombine.high %v1115, 0
        %v1124 = vcombine.high %v1122, 0
        %v1127 = vpack.i.b16 %v1115, %v1081
        %v1129 = vshrl.u32 %v1081, 16
        %v1130 = vshrl.u32 %v1115, 16
        %v1131 = vpack.i.b16 %v1130, %v1129
        %v1135 = vpack.i.b16 %v1123, %v1089
        %v1137 = vshrl.u32 %v1089, 16
        %v1138 = vshrl.u32 %v1123, 16
        %v1139 = vpack.i.b16 %v1138, %v1137
        %v1143 = vpack.i.b16 %v1122, %v1088
        %v1145 = vshrl.u32 %v1088, 16
        %v1146 = vshrl.u32 %v1122, 16
        %v1147 = vpack.i.b16 %v1146, %v1145
        %v1151 = vpack.i.b16 %v1124, %v1090
        %v1153 = vshrl.u32 %v1090, 16
        %v1154 = vshrl.u32 %v1124, 16
        %v1155 = vpack.i.b16 %v1154, %v1153
        %v1157 = vcombine.low %v1127, %v1143
        %v1159 = vunpack.c.l.s4 1983009808
        %v1160 = vunpack.c.0.s8 %v1159
        %v1161 = vlaneseq
        %v1162 = vshrl.u32 %v1161, 7
        %v1163 = vsub.s32 %v1160, %v1162
        %v1164 = vrot.slane %v1157, %v1163
        %v1165 = vcombine.low %v1135, %v1151
        %v1167 = vunpack.c.l.s4 1983009808
        %v1168 = vunpack.c.0.s8 %v1167
        %v1169 = vlaneseq
        %v1170 = vshrl.u32 %v1169, 7
        %v1171 = vsub.s32 %v1168, %v1170
        %v1172 = vrot.slane %v1165, %v1171
        %v1173 = vcombine.low %v1164, %v1172
        %v1175 = vunpack.c.l.s4 1934713408
        %v1176 = vunpack.c.0.s8 %v1175
        %v1177 = vlaneseq
        %v1178 = vshrl.u32 %v1177, 7
        %v1179 = vsub.s32 %v1176, %v1178
        %v1180 = vrot.slane %v1173, %v1179
        %v1181 = vcombine.high %v1180, 0
        %v1182 = vcombine.low %v1131, %v1147
        %v1184 = vunpack.c.l.s4 1983009808
        %v1185 = vunpack.c.0.s8 %v1184
        %v1186 = vlaneseq
        %v1187 = vshrl.u32 %v1186, 7
        %v1188 = vsub.s32 %v1185, %v1187
        %v1189 = vrot.slane %v1182, %v1188
        %v1190 = vcombine.low %v1139, %v1155
        %v1192 = vunpack.c.l.s4 1983009808
        %v1193 = vunpack.c.0.s8 %v1192
        %v1194 = vlaneseq
        %v1195 = vshrl.u32 %v1194, 7
        %v1196 = vsub.s32 %v1193, %v1195
        %v1197 = vrot.slane %v1190, %v1196
        %v1198 = vcombine.low %v1189, %v1197
        %v1200 = vunpack.c.l.s4 1934713408
        %v1201 = vunpack.c.0.s8 %v1200
        %v1202 = vlaneseq
        %v1203 = vshrl.u32 %v1202, 7
        %v1204 = vsub.s32 %v1201, %v1203
        %v1205 = vrot.slane %v1198, %v1204
        %v1206 = vcombine.high %v1205, 0
        %v1209 = vpack.i.b16 %v1205, %v1180
        %v1210 = vshrl.u32 %v1180, 16
        %v1211 = vshrl.u32 %v1205, 16
        %v1212 = vpack.i.b16 %v1211, %v1210
        %v1215 = vpack.i.b16 %v1206, %v1181
        %v1216 = vshrl.u32 %v1181, 16
        %v1217 = vshrl.u32 %v1206, 16
        %v1218 = vpack.i.b16 %v1217, %v1216
        %v1219 = vpack.c.bf16 %v976, %v972
        %v1220 = vpack.c.bf16 %v986, %v982
        %v1221 = vpack.c.bf16 %v996, %v992
        %v1222 = vpack.c.bf16 %v1006, %v1002
        %v1223 = vpack.c.bf16 %v1016, %v1012
        %v1224 = vpack.c.bf16 %v1026, %v1022
        %v1225 = vpack.c.bf16 %v1036, %v1032
        %v1226 = vpack.c.bf16 %v1046, %v1042
        %1235 = vrot.lane.b32.xlu0 %v1219, 96
        %v1236 = vpop.permute.xlu0 %1235
        %1237 = vrot.lane.b32.xlu0 %v1220, 96
        %v1238 = vpop.permute.xlu0 %1237
        %1239 = vrot.lane.b32.xlu0 %v1221, 96
        %v1240 = vpop.permute.xlu0 %1239
        %1241 = vrot.lane.b32.xlu0 %v1222, 96
        %v1242 = vpop.permute.xlu0 %1241
        %1243 = vrot.lane.b32.xlu0 %v1223, 96
        %v1244 = vpop.permute.xlu0 %1243
        %1245 = vrot.lane.b32.xlu0 %v1224, 96
        %v1246 = vpop.permute.xlu0 %1245
        %1247 = vrot.lane.b32.xlu0 %v1225, 96
        %v1248 = vpop.permute.xlu0 %1247
        %1249 = vrot.lane.b32.xlu0 %v1226, 96
        %v1250 = vpop.permute.xlu0 %1249
        %1251 = vrot.lane.b32.xlu0 %v1219, 64
        %v1252 = vpop.permute.xlu0 %1251
        %1253 = vrot.lane.b32.xlu0 %v1220, 64
        %v1254 = vpop.permute.xlu0 %1253
        %1255 = vrot.lane.b32.xlu0 %v1221, 64
        %v1256 = vpop.permute.xlu0 %1255
        %1257 = vrot.lane.b32.xlu0 %v1222, 64
        %v1258 = vpop.permute.xlu0 %1257
        %1259 = vrot.lane.b32.xlu0 %v1223, 64
        %v1260 = vpop.permute.xlu0 %1259
        %1261 = vrot.lane.b32.xlu0 %v1224, 64
        %v1262 = vpop.permute.xlu0 %1261
        %1263 = vrot.lane.b32.xlu0 %v1225, 64
        %v1264 = vpop.permute.xlu0 %1263
        %1265 = vrot.lane.b32.xlu0 %v1226, 64
        %v1266 = vpop.permute.xlu0 %1265
        %1267 = vrot.lane.b32.xlu0 %v1219, 32
        %v1268 = vpop.permute.xlu0 %1267
        %1269 = vrot.lane.b32.xlu0 %v1220, 32
        %v1270 = vpop.permute.xlu0 %1269
        %1271 = vrot.lane.b32.xlu0 %v1221, 32
        %v1272 = vpop.permute.xlu0 %1271
        %1273 = vrot.lane.b32.xlu0 %v1222, 32
        %v1274 = vpop.permute.xlu0 %1273
        %1275 = vrot.lane.b32.xlu0 %v1223, 32
        %v1276 = vpop.permute.xlu0 %1275
        %1277 = vrot.lane.b32.xlu0 %v1224, 32
        %v1278 = vpop.permute.xlu0 %1277
        %1279 = vrot.lane.b32.xlu0 %v1225, 32
        %v1280 = vpop.permute.xlu0 %1279
        %1281 = vrot.lane.b32.xlu0 %v1226, 32
        %v1282 = vpop.permute.xlu0 %1281
        %v1285 = vpack.i.b16 %v1236, %v1219
        %v1287 = vshrl.u32 %v1219, 16
        %v1288 = vshrl.u32 %v1236, 16
        %v1289 = vpack.i.b16 %v1288, %v1287
        %v1293 = vpack.i.b16 %v1268, %v1252
        %v1295 = vshrl.u32 %v1252, 16
        %v1296 = vshrl.u32 %v1268, 16
        %v1297 = vpack.i.b16 %v1296, %v1295
        %v1300 = vpack.i.b16 0, 0
        %v1302 = vshrl.u32 0, 16
        %v1303 = vpack.i.b16 %v1302, %v1302
        %v1307 = vpack.i.b16 %v1238, %v1220
        %v1309 = vshrl.u32 %v1220, 16
        %v1310 = vshrl.u32 %v1238, 16
        %v1311 = vpack.i.b16 %v1310, %v1309
        %v1315 = vpack.i.b16 %v1270, %v1254
        %v1317 = vshrl.u32 %v1254, 16
        %v1318 = vshrl.u32 %v1270, 16
        %v1319 = vpack.i.b16 %v1318, %v1317
        %v1323 = vpack.i.b16 %v1240, %v1221
        %v1325 = vshrl.u32 %v1221, 16
        %v1326 = vshrl.u32 %v1240, 16
        %v1327 = vpack.i.b16 %v1326, %v1325
        %v1331 = vpack.i.b16 %v1272, %v1256
        %v1333 = vshrl.u32 %v1256, 16
        %v1334 = vshrl.u32 %v1272, 16
        %v1335 = vpack.i.b16 %v1334, %v1333
        %v1339 = vpack.i.b16 %v1242, %v1222
        %v1341 = vshrl.u32 %v1222, 16
        %v1342 = vshrl.u32 %v1242, 16
        %v1343 = vpack.i.b16 %v1342, %v1341
        %v1347 = vpack.i.b16 %v1274, %v1258
        %v1349 = vshrl.u32 %v1258, 16
        %v1350 = vshrl.u32 %v1274, 16
        %v1351 = vpack.i.b16 %v1350, %v1349
        %v1355 = vpack.i.b16 %v1244, %v1223
        %v1357 = vshrl.u32 %v1223, 16
        %v1358 = vshrl.u32 %v1244, 16
        %v1359 = vpack.i.b16 %v1358, %v1357
        %v1363 = vpack.i.b16 %v1276, %v1260
        %v1365 = vshrl.u32 %v1260, 16
        %v1366 = vshrl.u32 %v1276, 16
        %v1367 = vpack.i.b16 %v1366, %v1365
        %v1371 = vpack.i.b16 %v1246, %v1224
        %v1373 = vshrl.u32 %v1224, 16
        %v1374 = vshrl.u32 %v1246, 16
        %v1375 = vpack.i.b16 %v1374, %v1373
        %v1379 = vpack.i.b16 %v1278, %v1262
        %v1381 = vshrl.u32 %v1262, 16
        %v1382 = vshrl.u32 %v1278, 16
        %v1383 = vpack.i.b16 %v1382, %v1381
        %v1387 = vpack.i.b16 %v1248, %v1225
        %v1389 = vshrl.u32 %v1225, 16
        %v1390 = vshrl.u32 %v1248, 16
        %v1391 = vpack.i.b16 %v1390, %v1389
        %v1395 = vpack.i.b16 %v1280, %v1264
        %v1397 = vshrl.u32 %v1264, 16
        %v1398 = vshrl.u32 %v1280, 16
        %v1399 = vpack.i.b16 %v1398, %v1397
        %v1403 = vpack.i.b16 %v1250, %v1226
        %v1405 = vshrl.u32 %v1226, 16
        %v1406 = vshrl.u32 %v1250, 16
        %v1407 = vpack.i.b16 %v1406, %v1405
        %v1411 = vpack.i.b16 %v1282, %v1266
        %v1413 = vshrl.u32 %v1266, 16
        %v1414 = vshrl.u32 %v1282, 16
        %v1415 = vpack.i.b16 %v1414, %v1413
        %v1417 = vcombine.high %v1285, %v1300
        %v1419 = vunpack.c.l.s4 1983009808
        %v1420 = vunpack.c.0.s8 %v1419
        %v1421 = vlaneseq
        %v1422 = vshrl.u32 %v1421, 7
        %v1423 = vsub.s32 %v1420, %v1422
        %v1424 = vrot.slane %v1285, %v1423
        %v1426 = vunpack.c.l.s4 1983009808
        %v1427 = vunpack.c.0.s8 %v1426
        %v1428 = vlaneseq
        %v1429 = vshrl.u32 %v1428, 7
        %v1430 = vsub.s32 %v1427, %v1429
        %v1431 = vrot.slane %v1417, %v1430
        %v1432 = vcombine.high %v1293, %v1300
        %v1434 = vunpack.c.l.s4 1983009808
        %v1435 = vunpack.c.0.s8 %v1434
        %v1436 = vlaneseq
        %v1437 = vshrl.u32 %v1436, 7
        %v1438 = vsub.s32 %v1435, %v1437
        %v1439 = vrot.slane %v1293, %v1438
        %v1441 = vunpack.c.l.s4 1983009808
        %v1442 = vunpack.c.0.s8 %v1441
        %v1443 = vlaneseq
        %v1444 = vshrl.u32 %v1443, 7
        %v1445 = vsub.s32 %v1442, %v1444
        %v1446 = vrot.slane %v1432, %v1445
        %v1447 = vcombine.low %v1424, %v1439
        %v1448 = vcombine.high %v1424, %v1439
        %v1450 = vunpack.c.l.s4 1934713408
        %v1451 = vunpack.c.0.s8 %v1450
        %v1452 = vlaneseq
        %v1453 = vshrl.u32 %v1452, 7
        %v1454 = vsub.s32 %v1451, %v1453
        %v1455 = vrot.slane %v1447, %v1454
        %v1457 = vunpack.c.l.s4 1934713408
        %v1458 = vunpack.c.0.s8 %v1457
        %v1459 = vlaneseq
        %v1460 = vshrl.u32 %v1459, 7
        %v1461 = vsub.s32 %v1458, %v1460
        %v1462 = vrot.slane %v1448, %v1461
        %v1463 = vcombine.low %v1431, %v1446
        %v1464 = vcombine.high %v1431, %v1446
        %v1466 = vunpack.c.l.s4 1934713408
        %v1467 = vunpack.c.0.s8 %v1466
        %v1468 = vlaneseq
        %v1469 = vshrl.u32 %v1468, 7
        %v1470 = vsub.s32 %v1467, %v1469
        %v1471 = vrot.slane %v1463, %v1470
        %v1473 = vunpack.c.l.s4 1934713408
        %v1474 = vunpack.c.0.s8 %v1473
        %v1475 = vlaneseq
        %v1476 = vshrl.u32 %v1475, 7
        %v1477 = vsub.s32 %v1474, %v1476
        %v1478 = vrot.slane %v1464, %v1477
        %v1479 = vcombine.high %v1455, 0
        %v1480 = vcombine.high %v1462, 0
        %v1481 = vcombine.high %v1471, 0
        %v1482 = vcombine.high %v1478, 0
        %v1483 = vcombine.high %v1289, %v1303
        %v1485 = vunpack.c.l.s4 1983009808
        %v1486 = vunpack.c.0.s8 %v1485
        %v1487 = vlaneseq
        %v1488 = vshrl.u32 %v1487, 7
        %v1489 = vsub.s32 %v1486, %v1488
        %v1490 = vrot.slane %v1289, %v1489
        %v1492 = vunpack.c.l.s4 1983009808
        %v1493 = vunpack.c.0.s8 %v1492
        %v1494 = vlaneseq
        %v1495 = vshrl.u32 %v1494, 7
        %v1496 = vsub.s32 %v1493, %v1495
        %v1497 = vrot.slane %v1483, %v1496
        %v1498 = vcombine.high %v1297, %v1303
        %v1500 = vunpack.c.l.s4 1983009808
        %v1501 = vunpack.c.0.s8 %v1500
        %v1502 = vlaneseq
        %v1503 = vshrl.u32 %v1502, 7
        %v1504 = vsub.s32 %v1501, %v1503
        %v1505 = vrot.slane %v1297, %v1504
        %v1507 = vunpack.c.l.s4 1983009808
        %v1508 = vunpack.c.0.s8 %v1507
        %v1509 = vlaneseq
        %v1510 = vshrl.u32 %v1509, 7
        %v1511 = vsub.s32 %v1508, %v1510
        %v1512 = vrot.slane %v1498, %v1511
        %v1513 = vcombine.low %v1490, %v1505
        %v1514 = vcombine.high %v1490, %v1505
        %v1516 = vunpack.c.l.s4 1934713408
        %v1517 = vunpack.c.0.s8 %v1516
        %v1518 = vlaneseq
        %v1519 = vshrl.u32 %v1518, 7
        %v1520 = vsub.s32 %v1517, %v1519
        %v1521 = vrot.slane %v1513, %v1520
        %v1523 = vunpack.c.l.s4 1934713408
        %v1524 = vunpack.c.0.s8 %v1523
        %v1525 = vlaneseq
        %v1526 = vshrl.u32 %v1525, 7
        %v1527 = vsub.s32 %v1524, %v1526
        %v1528 = vrot.slane %v1514, %v1527
        %v1529 = vcombine.low %v1497, %v1512
        %v1530 = vcombine.high %v1497, %v1512
        %v1532 = vunpack.c.l.s4 1934713408
        %v1533 = vunpack.c.0.s8 %v1532
        %v1534 = vlaneseq
        %v1535 = vshrl.u32 %v1534, 7
        %v1536 = vsub.s32 %v1533, %v1535
        %v1537 = vrot.slane %v1529, %v1536
        %v1539 = vunpack.c.l.s4 1934713408
        %v1540 = vunpack.c.0.s8 %v1539
        %v1541 = vlaneseq
        %v1542 = vshrl.u32 %v1541, 7
        %v1543 = vsub.s32 %v1540, %v1542
        %v1544 = vrot.slane %v1530, %v1543
        %v1545 = vcombine.high %v1521, 0
        %v1546 = vcombine.high %v1528, 0
        %v1547 = vcombine.high %v1537, 0
        %v1548 = vcombine.high %v1544, 0
        %v1549 = vcombine.high %v1307, %v1300
        %v1551 = vunpack.c.l.s4 1983009808
        %v1552 = vunpack.c.0.s8 %v1551
        %v1553 = vlaneseq
        %v1554 = vshrl.u32 %v1553, 7
        %v1555 = vsub.s32 %v1552, %v1554
        %v1556 = vrot.slane %v1307, %v1555
        %v1558 = vunpack.c.l.s4 1983009808
        %v1559 = vunpack.c.0.s8 %v1558
        %v1560 = vlaneseq
        %v1561 = vshrl.u32 %v1560, 7
        %v1562 = vsub.s32 %v1559, %v1561
        %v1563 = vrot.slane %v1549, %v1562
        %v1564 = vcombine.high %v1315, %v1300
        %v1566 = vunpack.c.l.s4 1983009808
        %v1567 = vunpack.c.0.s8 %v1566
        %v1568 = vlaneseq
        %v1569 = vshrl.u32 %v1568, 7
        %v1570 = vsub.s32 %v1567, %v1569
        %v1571 = vrot.slane %v1315, %v1570
        %v1573 = vunpack.c.l.s4 1983009808
        %v1574 = vunpack.c.0.s8 %v1573
        %v1575 = vlaneseq
        %v1576 = vshrl.u32 %v1575, 7
        %v1577 = vsub.s32 %v1574, %v1576
        %v1578 = vrot.slane %v1564, %v1577
        %v1579 = vcombine.low %v1556, %v1571
        %v1580 = vcombine.high %v1556, %v1571
        %v1582 = vunpack.c.l.s4 1934713408
        %v1583 = vunpack.c.0.s8 %v1582
        %v1584 = vlaneseq
        %v1585 = vshrl.u32 %v1584, 7
        %v1586 = vsub.s32 %v1583, %v1585
        %v1587 = vrot.slane %v1579, %v1586
        %v1589 = vunpack.c.l.s4 1934713408
        %v1590 = vunpack.c.0.s8 %v1589
        %v1591 = vlaneseq
        %v1592 = vshrl.u32 %v1591, 7
        %v1593 = vsub.s32 %v1590, %v1592
        %v1594 = vrot.slane %v1580, %v1593
        %v1595 = vcombine.low %v1563, %v1578
        %v1596 = vcombine.high %v1563, %v1578
        %v1598 = vunpack.c.l.s4 1934713408
        %v1599 = vunpack.c.0.s8 %v1598
        %v1600 = vlaneseq
        %v1601 = vshrl.u32 %v1600, 7
        %v1602 = vsub.s32 %v1599, %v1601
        %v1603 = vrot.slane %v1595, %v1602
        %v1605 = vunpack.c.l.s4 1934713408
        %v1606 = vunpack.c.0.s8 %v1605
        %v1607 = vlaneseq
        %v1608 = vshrl.u32 %v1607, 7
        %v1609 = vsub.s32 %v1606, %v1608
        %v1610 = vrot.slane %v1596, %v1609
        %v1611 = vcombine.high %v1587, 0
        %v1612 = vcombine.high %v1594, 0
        %v1613 = vcombine.high %v1603, 0
        %v1614 = vcombine.high %v1610, 0
        %v1615 = vcombine.high %v1311, %v1303
        %v1617 = vunpack.c.l.s4 1983009808
        %v1618 = vunpack.c.0.s8 %v1617
        %v1619 = vlaneseq
        %v1620 = vshrl.u32 %v1619, 7
        %v1621 = vsub.s32 %v1618, %v1620
        %v1622 = vrot.slane %v1311, %v1621
        %v1624 = vunpack.c.l.s4 1983009808
        %v1625 = vunpack.c.0.s8 %v1624
        %v1626 = vlaneseq
        %v1627 = vshrl.u32 %v1626, 7
        %v1628 = vsub.s32 %v1625, %v1627
        %v1629 = vrot.slane %v1615, %v1628
        %v1630 = vcombine.high %v1319, %v1303
        %v1632 = vunpack.c.l.s4 1983009808
        %v1633 = vunpack.c.0.s8 %v1632
        %v1634 = vlaneseq
        %v1635 = vshrl.u32 %v1634, 7
        %v1636 = vsub.s32 %v1633, %v1635
        %v1637 = vrot.slane %v1319, %v1636
        %v1639 = vunpack.c.l.s4 1983009808
        %v1640 = vunpack.c.0.s8 %v1639
        %v1641 = vlaneseq
        %v1642 = vshrl.u32 %v1641, 7
        %v1643 = vsub.s32 %v1640, %v1642
        %v1644 = vrot.slane %v1630, %v1643
        %v1645 = vcombine.low %v1622, %v1637
        %v1646 = vcombine.high %v1622, %v1637
        %v1648 = vunpack.c.l.s4 1934713408
        %v1649 = vunpack.c.0.s8 %v1648
        %v1650 = vlaneseq
        %v1651 = vshrl.u32 %v1650, 7
        %v1652 = vsub.s32 %v1649, %v1651
        %v1653 = vrot.slane %v1645, %v1652
        %v1655 = vunpack.c.l.s4 1934713408
        %v1656 = vunpack.c.0.s8 %v1655
        %v1657 = vlaneseq
        %v1658 = vshrl.u32 %v1657, 7
        %v1659 = vsub.s32 %v1656, %v1658
        %v1660 = vrot.slane %v1646, %v1659
        %v1661 = vcombine.low %v1629, %v1644
        %v1662 = vcombine.high %v1629, %v1644
        %v1664 = vunpack.c.l.s4 1934713408
        %v1665 = vunpack.c.0.s8 %v1664
        %v1666 = vlaneseq
        %v1667 = vshrl.u32 %v1666, 7
        %v1668 = vsub.s32 %v1665, %v1667
        %v1669 = vrot.slane %v1661, %v1668
        %v1671 = vunpack.c.l.s4 1934713408
        %v1672 = vunpack.c.0.s8 %v1671
        %v1673 = vlaneseq
        %v1674 = vshrl.u32 %v1673, 7
        %v1675 = vsub.s32 %v1672, %v1674
        %v1676 = vrot.slane %v1662, %v1675
        %v1677 = vcombine.high %v1653, 0
        %v1678 = vcombine.high %v1660, 0
        %v1679 = vcombine.high %v1669, 0
        %v1680 = vcombine.high %v1676, 0
        %v1681 = vcombine.high %v1323, %v1300
        %v1683 = vunpack.c.l.s4 1983009808
        %v1684 = vunpack.c.0.s8 %v1683
        %v1685 = vlaneseq
        %v1686 = vshrl.u32 %v1685, 7
        %v1687 = vsub.s32 %v1684, %v1686
        %v1688 = vrot.slane %v1323, %v1687
        %v1690 = vunpack.c.l.s4 1983009808
        %v1691 = vunpack.c.0.s8 %v1690
        %v1692 = vlaneseq
        %v1693 = vshrl.u32 %v1692, 7
        %v1694 = vsub.s32 %v1691, %v1693
        %v1695 = vrot.slane %v1681, %v1694
        %v1696 = vcombine.high %v1331, %v1300
        %v1698 = vunpack.c.l.s4 1983009808
        %v1699 = vunpack.c.0.s8 %v1698
        %v1700 = vlaneseq
        %v1701 = vshrl.u32 %v1700, 7
        %v1702 = vsub.s32 %v1699, %v1701
        %v1703 = vrot.slane %v1331, %v1702
        %v1705 = vunpack.c.l.s4 1983009808
        %v1706 = vunpack.c.0.s8 %v1705
        %v1707 = vlaneseq
        %v1708 = vshrl.u32 %v1707, 7
        %v1709 = vsub.s32 %v1706, %v1708
        %v1710 = vrot.slane %v1696, %v1709
        %v1711 = vcombine.low %v1688, %v1703
        %v1712 = vcombine.high %v1688, %v1703
        %v1714 = vunpack.c.l.s4 1934713408
        %v1715 = vunpack.c.0.s8 %v1714
        %v1716 = vlaneseq
        %v1717 = vshrl.u32 %v1716, 7
        %v1718 = vsub.s32 %v1715, %v1717
        %v1719 = vrot.slane %v1711, %v1718
        %v1721 = vunpack.c.l.s4 1934713408
        %v1722 = vunpack.c.0.s8 %v1721
        %v1723 = vlaneseq
        %v1724 = vshrl.u32 %v1723, 7
        %v1725 = vsub.s32 %v1722, %v1724
        %v1726 = vrot.slane %v1712, %v1725
        %v1727 = vcombine.low %v1695, %v1710
        %v1728 = vcombine.high %v1695, %v1710
        %v1730 = vunpack.c.l.s4 1934713408
        %v1731 = vunpack.c.0.s8 %v1730
        %v1732 = vlaneseq
        %v1733 = vshrl.u32 %v1732, 7
        %v1734 = vsub.s32 %v1731, %v1733
        %v1735 = vrot.slane %v1727, %v1734
        %v1737 = vunpack.c.l.s4 1934713408
        %v1738 = vunpack.c.0.s8 %v1737
        %v1739 = vlaneseq
        %v1740 = vshrl.u32 %v1739, 7
        %v1741 = vsub.s32 %v1738, %v1740
        %v1742 = vrot.slane %v1728, %v1741
        %v1743 = vcombine.high %v1719, 0
        %v1744 = vcombine.high %v1726, 0
        %v1745 = vcombine.high %v1735, 0
        %v1746 = vcombine.high %v1742, 0
        %v1747 = vcombine.high %v1327, %v1303
        %v1749 = vunpack.c.l.s4 1983009808
        %v1750 = vunpack.c.0.s8 %v1749
        %v1751 = vlaneseq
        %v1752 = vshrl.u32 %v1751, 7
        %v1753 = vsub.s32 %v1750, %v1752
        %v1754 = vrot.slane %v1327, %v1753
        %v1756 = vunpack.c.l.s4 1983009808
        %v1757 = vunpack.c.0.s8 %v1756
        %v1758 = vlaneseq
        %v1759 = vshrl.u32 %v1758, 7
        %v1760 = vsub.s32 %v1757, %v1759
        %v1761 = vrot.slane %v1747, %v1760
        %v1762 = vcombine.high %v1335, %v1303
        %v1764 = vunpack.c.l.s4 1983009808
        %v1765 = vunpack.c.0.s8 %v1764
        %v1766 = vlaneseq
        %v1767 = vshrl.u32 %v1766, 7
        %v1768 = vsub.s32 %v1765, %v1767
        %v1769 = vrot.slane %v1335, %v1768
        %v1771 = vunpack.c.l.s4 1983009808
        %v1772 = vunpack.c.0.s8 %v1771
        %v1773 = vlaneseq
        %v1774 = vshrl.u32 %v1773, 7
        %v1775 = vsub.s32 %v1772, %v1774
        %v1776 = vrot.slane %v1762, %v1775
        %v1777 = vcombine.low %v1754, %v1769
        %v1778 = vcombine.high %v1754, %v1769
        %v1780 = vunpack.c.l.s4 1934713408
        %v1781 = vunpack.c.0.s8 %v1780
        %v1782 = vlaneseq
        %v1783 = vshrl.u32 %v1782, 7
        %v1784 = vsub.s32 %v1781, %v1783
        %v1785 = vrot.slane %v1777, %v1784
        %v1787 = vunpack.c.l.s4 1934713408
        %v1788 = vunpack.c.0.s8 %v1787
        %v1789 = vlaneseq
        %v1790 = vshrl.u32 %v1789, 7
        %v1791 = vsub.s32 %v1788, %v1790
        %v1792 = vrot.slane %v1778, %v1791
        %v1793 = vcombine.low %v1761, %v1776
        %v1794 = vcombine.high %v1761, %v1776
        %v1796 = vunpack.c.l.s4 1934713408
        %v1797 = vunpack.c.0.s8 %v1796
        %v1798 = vlaneseq
        %v1799 = vshrl.u32 %v1798, 7
        %v1800 = vsub.s32 %v1797, %v1799
        %v1801 = vrot.slane %v1793, %v1800
        %v1803 = vunpack.c.l.s4 1934713408
        %v1804 = vunpack.c.0.s8 %v1803
        %v1805 = vlaneseq
        %v1806 = vshrl.u32 %v1805, 7
        %v1807 = vsub.s32 %v1804, %v1806
        %v1808 = vrot.slane %v1794, %v1807
        %v1809 = vcombine.high %v1785, 0
        %v1810 = vcombine.high %v1792, 0
        %v1811 = vcombine.high %v1801, 0
        %v1812 = vcombine.high %v1808, 0
        %v1813 = vcombine.high %v1339, %v1300
        %v1815 = vunpack.c.l.s4 1983009808
        %v1816 = vunpack.c.0.s8 %v1815
        %v1817 = vlaneseq
        %v1818 = vshrl.u32 %v1817, 7
        %v1819 = vsub.s32 %v1816, %v1818
        %v1820 = vrot.slane %v1339, %v1819
        %v1822 = vunpack.c.l.s4 1983009808
        %v1823 = vunpack.c.0.s8 %v1822
        %v1824 = vlaneseq
        %v1825 = vshrl.u32 %v1824, 7
        %v1826 = vsub.s32 %v1823, %v1825
        %v1827 = vrot.slane %v1813, %v1826
        %v1828 = vcombine.high %v1347, %v1300
        %v1830 = vunpack.c.l.s4 1983009808
        %v1831 = vunpack.c.0.s8 %v1830
        %v1832 = vlaneseq
        %v1833 = vshrl.u32 %v1832, 7
        %v1834 = vsub.s32 %v1831, %v1833
        %v1835 = vrot.slane %v1347, %v1834
        %v1837 = vunpack.c.l.s4 1983009808
        %v1838 = vunpack.c.0.s8 %v1837
        %v1839 = vlaneseq
        %v1840 = vshrl.u32 %v1839, 7
        %v1841 = vsub.s32 %v1838, %v1840
        %v1842 = vrot.slane %v1828, %v1841
        %v1843 = vcombine.low %v1820, %v1835
        %v1844 = vcombine.high %v1820, %v1835
        %v1846 = vunpack.c.l.s4 1934713408
        %v1847 = vunpack.c.0.s8 %v1846
        %v1848 = vlaneseq
        %v1849 = vshrl.u32 %v1848, 7
        %v1850 = vsub.s32 %v1847, %v1849
        %v1851 = vrot.slane %v1843, %v1850
        %v1853 = vunpack.c.l.s4 1934713408
        %v1854 = vunpack.c.0.s8 %v1853
        %v1855 = vlaneseq
        %v1856 = vshrl.u32 %v1855, 7
        %v1857 = vsub.s32 %v1854, %v1856
        %v1858 = vrot.slane %v1844, %v1857
        %v1859 = vcombine.low %v1827, %v1842
        %v1860 = vcombine.high %v1827, %v1842
        %v1862 = vunpack.c.l.s4 1934713408
        %v1863 = vunpack.c.0.s8 %v1862
        %v1864 = vlaneseq
        %v1865 = vshrl.u32 %v1864, 7
        %v1866 = vsub.s32 %v1863, %v1865
        %v1867 = vrot.slane %v1859, %v1866
        %v1869 = vunpack.c.l.s4 1934713408
        %v1870 = vunpack.c.0.s8 %v1869
        %v1871 = vlaneseq
        %v1872 = vshrl.u32 %v1871, 7
        %v1873 = vsub.s32 %v1870, %v1872
        %v1874 = vrot.slane %v1860, %v1873
        %v1875 = vcombine.high %v1851, 0
        %v1876 = vcombine.high %v1858, 0
        %v1877 = vcombine.high %v1867, 0
        %v1878 = vcombine.high %v1874, 0
        %v1879 = vcombine.high %v1343, %v1303
        %v1881 = vunpack.c.l.s4 1983009808
        %v1882 = vunpack.c.0.s8 %v1881
        %v1883 = vlaneseq
        %v1884 = vshrl.u32 %v1883, 7
        %v1885 = vsub.s32 %v1882, %v1884
        %v1886 = vrot.slane %v1343, %v1885
        %v1888 = vunpack.c.l.s4 1983009808
        %v1889 = vunpack.c.0.s8 %v1888
        %v1890 = vlaneseq
        %v1891 = vshrl.u32 %v1890, 7
        %v1892 = vsub.s32 %v1889, %v1891
        %v1893 = vrot.slane %v1879, %v1892
        %v1894 = vcombine.high %v1351, %v1303
        %v1896 = vunpack.c.l.s4 1983009808
        %v1897 = vunpack.c.0.s8 %v1896
        %v1898 = vlaneseq
        %v1899 = vshrl.u32 %v1898, 7
        %v1900 = vsub.s32 %v1897, %v1899
        %v1901 = vrot.slane %v1351, %v1900
        %v1903 = vunpack.c.l.s4 1983009808
        %v1904 = vunpack.c.0.s8 %v1903
        %v1905 = vlaneseq
        %v1906 = vshrl.u32 %v1905, 7
        %v1907 = vsub.s32 %v1904, %v1906
        %v1908 = vrot.slane %v1894, %v1907
        %v1909 = vcombine.low %v1886, %v1901
        %v1910 = vcombine.high %v1886, %v1901
        %v1912 = vunpack.c.l.s4 1934713408
        %v1913 = vunpack.c.0.s8 %v1912
        %v1914 = vlaneseq
        %v1915 = vshrl.u32 %v1914, 7
        %v1916 = vsub.s32 %v1913, %v1915
        %v1917 = vrot.slane %v1909, %v1916
        %v1919 = vunpack.c.l.s4 1934713408
        %v1920 = vunpack.c.0.s8 %v1919
        %v1921 = vlaneseq
        %v1922 = vshrl.u32 %v1921, 7
        %v1923 = vsub.s32 %v1920, %v1922
        %v1924 = vrot.slane %v1910, %v1923
        %v1925 = vcombine.low %v1893, %v1908
        %v1926 = vcombine.high %v1893, %v1908
        %v1928 = vunpack.c.l.s4 1934713408
        %v1929 = vunpack.c.0.s8 %v1928
        %v1930 = vlaneseq
        %v1931 = vshrl.u32 %v1930, 7
        %v1932 = vsub.s32 %v1929, %v1931
        %v1933 = vrot.slane %v1925, %v1932
        %v1935 = vunpack.c.l.s4 1934713408
        %v1936 = vunpack.c.0.s8 %v1935
        %v1937 = vlaneseq
        %v1938 = vshrl.u32 %v1937, 7
        %v1939 = vsub.s32 %v1936, %v1938
        %v1940 = vrot.slane %v1926, %v1939
        %v1941 = vcombine.high %v1917, 0
        %v1942 = vcombine.high %v1924, 0
        %v1943 = vcombine.high %v1933, 0
        %v1944 = vcombine.high %v1940, 0
        %v1945 = vcombine.high %v1355, %v1300
        %v1947 = vunpack.c.l.s4 1983009808
        %v1948 = vunpack.c.0.s8 %v1947
        %v1949 = vlaneseq
        %v1950 = vshrl.u32 %v1949, 7
        %v1951 = vsub.s32 %v1948, %v1950
        %v1952 = vrot.slane %v1355, %v1951
        %v1954 = vunpack.c.l.s4 1983009808
        %v1955 = vunpack.c.0.s8 %v1954
        %v1956 = vlaneseq
        %v1957 = vshrl.u32 %v1956, 7
        %v1958 = vsub.s32 %v1955, %v1957
        %v1959 = vrot.slane %v1945, %v1958
        %v1960 = vcombine.high %v1363, %v1300
        %v1962 = vunpack.c.l.s4 1983009808
        %v1963 = vunpack.c.0.s8 %v1962
        %v1964 = vlaneseq
        %v1965 = vshrl.u32 %v1964, 7
        %v1966 = vsub.s32 %v1963, %v1965
        %v1967 = vrot.slane %v1363, %v1966
        %v1969 = vunpack.c.l.s4 1983009808
        %v1970 = vunpack.c.0.s8 %v1969
        %v1971 = vlaneseq
        %v1972 = vshrl.u32 %v1971, 7
        %v1973 = vsub.s32 %v1970, %v1972
        %v1974 = vrot.slane %v1960, %v1973
        %v1975 = vcombine.low %v1952, %v1967
        %v1976 = vcombine.high %v1952, %v1967
        %v1978 = vunpack.c.l.s4 1934713408
        %v1979 = vunpack.c.0.s8 %v1978
        %v1980 = vlaneseq
        %v1981 = vshrl.u32 %v1980, 7
        %v1982 = vsub.s32 %v1979, %v1981
        %v1983 = vrot.slane %v1975, %v1982
        %v1985 = vunpack.c.l.s4 1934713408
        %v1986 = vunpack.c.0.s8 %v1985
        %v1987 = vlaneseq
        %v1988 = vshrl.u32 %v1987, 7
        %v1989 = vsub.s32 %v1986, %v1988
        %v1990 = vrot.slane %v1976, %v1989
        %v1991 = vcombine.low %v1959, %v1974
        %v1992 = vcombine.high %v1959, %v1974
        %v1994 = vunpack.c.l.s4 1934713408
        %v1995 = vunpack.c.0.s8 %v1994
        %v1996 = vlaneseq
        %v1997 = vshrl.u32 %v1996, 7
        %v1998 = vsub.s32 %v1995, %v1997
        %v1999 = vrot.slane %v1991, %v1998
        %v2001 = vunpack.c.l.s4 1934713408
        %v2002 = vunpack.c.0.s8 %v2001
        %v2003 = vlaneseq
        %v2004 = vshrl.u32 %v2003, 7
        %v2005 = vsub.s32 %v2002, %v2004
        %v2006 = vrot.slane %v1992, %v2005
        %v2007 = vcombine.high %v1983, 0
        %v2008 = vcombine.high %v1990, 0
        %v2009 = vcombine.high %v1999, 0
        %v2010 = vcombine.high %v2006, 0
        %v2011 = vcombine.high %v1359, %v1303
        %v2013 = vunpack.c.l.s4 1983009808
        %v2014 = vunpack.c.0.s8 %v2013
        %v2015 = vlaneseq
        %v2016 = vshrl.u32 %v2015, 7
        %v2017 = vsub.s32 %v2014, %v2016
        %v2018 = vrot.slane %v1359, %v2017
        %v2020 = vunpack.c.l.s4 1983009808
        %v2021 = vunpack.c.0.s8 %v2020
        %v2022 = vlaneseq
        %v2023 = vshrl.u32 %v2022, 7
        %v2024 = vsub.s32 %v2021, %v2023
        %v2025 = vrot.slane %v2011, %v2024
        %v2026 = vcombine.high %v1367, %v1303
        %v2028 = vunpack.c.l.s4 1983009808
        %v2029 = vunpack.c.0.s8 %v2028
        %v2030 = vlaneseq
        %v2031 = vshrl.u32 %v2030, 7
        %v2032 = vsub.s32 %v2029, %v2031
        %v2033 = vrot.slane %v1367, %v2032
        %v2035 = vunpack.c.l.s4 1983009808
        %v2036 = vunpack.c.0.s8 %v2035
        %v2037 = vlaneseq
        %v2038 = vshrl.u32 %v2037, 7
        %v2039 = vsub.s32 %v2036, %v2038
        %v2040 = vrot.slane %v2026, %v2039
        %v2041 = vcombine.low %v2018, %v2033
        %v2042 = vcombine.high %v2018, %v2033
        %v2044 = vunpack.c.l.s4 1934713408
        %v2045 = vunpack.c.0.s8 %v2044
        %v2046 = vlaneseq
        %v2047 = vshrl.u32 %v2046, 7
        %v2048 = vsub.s32 %v2045, %v2047
        %v2049 = vrot.slane %v2041, %v2048
        %v2051 = vunpack.c.l.s4 1934713408
        %v2052 = vunpack.c.0.s8 %v2051
        %v2053 = vlaneseq
        %v2054 = vshrl.u32 %v2053, 7
        %v2055 = vsub.s32 %v2052, %v2054
        %v2056 = vrot.slane %v2042, %v2055
        %v2057 = vcombine.low %v2025, %v2040
        %v2058 = vcombine.high %v2025, %v2040
        %v2060 = vunpack.c.l.s4 1934713408
        %v2061 = vunpack.c.0.s8 %v2060
        %v2062 = vlaneseq
        %v2063 = vshrl.u32 %v2062, 7
        %v2064 = vsub.s32 %v2061, %v2063
        %v2065 = vrot.slane %v2057, %v2064
        %v2067 = vunpack.c.l.s4 1934713408
        %v2068 = vunpack.c.0.s8 %v2067
        %v2069 = vlaneseq
        %v2070 = vshrl.u32 %v2069, 7
        %v2071 = vsub.s32 %v2068, %v2070
        %v2072 = vrot.slane %v2058, %v2071
        %v2073 = vcombine.high %v2049, 0
        %v2074 = vcombine.high %v2056, 0
        %v2075 = vcombine.high %v2065, 0
        %v2076 = vcombine.high %v2072, 0
        %v2077 = vcombine.high %v1371, %v1300
        %v2079 = vunpack.c.l.s4 1983009808
        %v2080 = vunpack.c.0.s8 %v2079
        %v2081 = vlaneseq
        %v2082 = vshrl.u32 %v2081, 7
        %v2083 = vsub.s32 %v2080, %v2082
        %v2084 = vrot.slane %v1371, %v2083
        %v2086 = vunpack.c.l.s4 1983009808
        %v2087 = vunpack.c.0.s8 %v2086
        %v2088 = vlaneseq
        %v2089 = vshrl.u32 %v2088, 7
        %v2090 = vsub.s32 %v2087, %v2089
        %v2091 = vrot.slane %v2077, %v2090
        %v2092 = vcombine.high %v1379, %v1300
        %v2094 = vunpack.c.l.s4 1983009808
        %v2095 = vunpack.c.0.s8 %v2094
        %v2096 = vlaneseq
        %v2097 = vshrl.u32 %v2096, 7
        %v2098 = vsub.s32 %v2095, %v2097
        %v2099 = vrot.slane %v1379, %v2098
        %v2101 = vunpack.c.l.s4 1983009808
        %v2102 = vunpack.c.0.s8 %v2101
        %v2103 = vlaneseq
        %v2104 = vshrl.u32 %v2103, 7
        %v2105 = vsub.s32 %v2102, %v2104
        %v2106 = vrot.slane %v2092, %v2105
        %v2107 = vcombine.low %v2084, %v2099
        %v2108 = vcombine.high %v2084, %v2099
        %v2110 = vunpack.c.l.s4 1934713408
        %v2111 = vunpack.c.0.s8 %v2110
        %v2112 = vlaneseq
        %v2113 = vshrl.u32 %v2112, 7
        %v2114 = vsub.s32 %v2111, %v2113
        %v2115 = vrot.slane %v2107, %v2114
        %v2117 = vunpack.c.l.s4 1934713408
        %v2118 = vunpack.c.0.s8 %v2117
        %v2119 = vlaneseq
        %v2120 = vshrl.u32 %v2119, 7
        %v2121 = vsub.s32 %v2118, %v2120
        %v2122 = vrot.slane %v2108, %v2121
        %v2123 = vcombine.low %v2091, %v2106
        %v2124 = vcombine.high %v2091, %v2106
        %v2126 = vunpack.c.l.s4 1934713408
        %v2127 = vunpack.c.0.s8 %v2126
        %v2128 = vlaneseq
        %v2129 = vshrl.u32 %v2128, 7
        %v2130 = vsub.s32 %v2127, %v2129
        %v2131 = vrot.slane %v2123, %v2130
        %v2133 = vunpack.c.l.s4 1934713408
        %v2134 = vunpack.c.0.s8 %v2133
        %v2135 = vlaneseq
        %v2136 = vshrl.u32 %v2135, 7
        %v2137 = vsub.s32 %v2134, %v2136
        %v2138 = vrot.slane %v2124, %v2137
        %v2139 = vcombine.high %v2115, 0
        %v2140 = vcombine.high %v2122, 0
        %v2141 = vcombine.high %v2131, 0
        %v2142 = vcombine.high %v2138, 0
        %v2143 = vcombine.high %v1375, %v1303
        %v2145 = vunpack.c.l.s4 1983009808
        %v2146 = vunpack.c.0.s8 %v2145
        %v2147 = vlaneseq
        %v2148 = vshrl.u32 %v2147, 7
        %v2149 = vsub.s32 %v2146, %v2148
        %v2150 = vrot.slane %v1375, %v2149
        %v2152 = vunpack.c.l.s4 1983009808
        %v2153 = vunpack.c.0.s8 %v2152
        %v2154 = vlaneseq
        %v2155 = vshrl.u32 %v2154, 7
        %v2156 = vsub.s32 %v2153, %v2155
        %v2157 = vrot.slane %v2143, %v2156
        %v2158 = vcombine.high %v1383, %v1303
        %v2160 = vunpack.c.l.s4 1983009808
        %v2161 = vunpack.c.0.s8 %v2160
        %v2162 = vlaneseq
        %v2163 = vshrl.u32 %v2162, 7
        %v2164 = vsub.s32 %v2161, %v2163
        %v2165 = vrot.slane %v1383, %v2164
        %v2167 = vunpack.c.l.s4 1983009808
        %v2168 = vunpack.c.0.s8 %v2167
        %v2169 = vlaneseq
        %v2170 = vshrl.u32 %v2169, 7
        %v2171 = vsub.s32 %v2168, %v2170
        %v2172 = vrot.slane %v2158, %v2171
        %v2173 = vcombine.low %v2150, %v2165
        %v2174 = vcombine.high %v2150, %v2165
        %v2176 = vunpack.c.l.s4 1934713408
        %v2177 = vunpack.c.0.s8 %v2176
        %v2178 = vlaneseq
        %v2179 = vshrl.u32 %v2178, 7
        %v2180 = vsub.s32 %v2177, %v2179
        %v2181 = vrot.slane %v2173, %v2180
        %v2183 = vunpack.c.l.s4 1934713408
        %v2184 = vunpack.c.0.s8 %v2183
        %v2185 = vlaneseq
        %v2186 = vshrl.u32 %v2185, 7
        %v2187 = vsub.s32 %v2184, %v2186
        %v2188 = vrot.slane %v2174, %v2187
        %v2189 = vcombine.low %v2157, %v2172
        %v2190 = vcombine.high %v2157, %v2172
        %v2192 = vunpack.c.l.s4 1934713408
        %v2193 = vunpack.c.0.s8 %v2192
        %v2194 = vlaneseq
        %v2195 = vshrl.u32 %v2194, 7
        %v2196 = vsub.s32 %v2193, %v2195
        %v2197 = vrot.slane %v2189, %v2196
        %v2199 = vunpack.c.l.s4 1934713408
        %v2200 = vunpack.c.0.s8 %v2199
        %v2201 = vlaneseq
        %v2202 = vshrl.u32 %v2201, 7
        %v2203 = vsub.s32 %v2200, %v2202
        %v2204 = vrot.slane %v2190, %v2203
        %v2205 = vcombine.high %v2181, 0
        %v2206 = vcombine.high %v2188, 0
        %v2207 = vcombine.high %v2197, 0
        %v2208 = vcombine.high %v2204, 0
        %v2209 = vcombine.high %v1387, %v1300
        %v2211 = vunpack.c.l.s4 1983009808
        %v2212 = vunpack.c.0.s8 %v2211
        %v2213 = vlaneseq
        %v2214 = vshrl.u32 %v2213, 7
        %v2215 = vsub.s32 %v2212, %v2214
        %v2216 = vrot.slane %v1387, %v2215
        %v2218 = vunpack.c.l.s4 1983009808
        %v2219 = vunpack.c.0.s8 %v2218
        %v2220 = vlaneseq
        %v2221 = vshrl.u32 %v2220, 7
        %v2222 = vsub.s32 %v2219, %v2221
        %v2223 = vrot.slane %v2209, %v2222
        %v2224 = vcombine.high %v1395, %v1300
        %v2226 = vunpack.c.l.s4 1983009808
        %v2227 = vunpack.c.0.s8 %v2226
        %v2228 = vlaneseq
        %v2229 = vshrl.u32 %v2228, 7
        %v2230 = vsub.s32 %v2227, %v2229
        %v2231 = vrot.slane %v1395, %v2230
        %v2233 = vunpack.c.l.s4 1983009808
        %v2234 = vunpack.c.0.s8 %v2233
        %v2235 = vlaneseq
        %v2236 = vshrl.u32 %v2235, 7
        %v2237 = vsub.s32 %v2234, %v2236
        %v2238 = vrot.slane %v2224, %v2237
        %v2239 = vcombine.low %v2216, %v2231
        %v2240 = vcombine.high %v2216, %v2231
        %v2242 = vunpack.c.l.s4 1934713408
        %v2243 = vunpack.c.0.s8 %v2242
        %v2244 = vlaneseq
        %v2245 = vshrl.u32 %v2244, 7
        %v2246 = vsub.s32 %v2243, %v2245
        %v2247 = vrot.slane %v2239, %v2246
        %v2249 = vunpack.c.l.s4 1934713408
        %v2250 = vunpack.c.0.s8 %v2249
        %v2251 = vlaneseq
        %v2252 = vshrl.u32 %v2251, 7
        %v2253 = vsub.s32 %v2250, %v2252
        %v2254 = vrot.slane %v2240, %v2253
        %v2255 = vcombine.low %v2223, %v2238
        %v2256 = vcombine.high %v2223, %v2238
        %v2258 = vunpack.c.l.s4 1934713408
        %v2259 = vunpack.c.0.s8 %v2258
        %v2260 = vlaneseq
        %v2261 = vshrl.u32 %v2260, 7
        %v2262 = vsub.s32 %v2259, %v2261
        %v2263 = vrot.slane %v2255, %v2262
        %v2265 = vunpack.c.l.s4 1934713408
        %v2266 = vunpack.c.0.s8 %v2265
        %v2267 = vlaneseq
        %v2268 = vshrl.u32 %v2267, 7
        %v2269 = vsub.s32 %v2266, %v2268
        %v2270 = vrot.slane %v2256, %v2269
        %v2271 = vcombine.high %v2247, 0
        %v2272 = vcombine.high %v2254, 0
        %v2273 = vcombine.high %v2263, 0
        %v2274 = vcombine.high %v2270, 0
        %v2275 = vcombine.high %v1391, %v1303
        %v2277 = vunpack.c.l.s4 1983009808
        %v2278 = vunpack.c.0.s8 %v2277
        %v2279 = vlaneseq
        %v2280 = vshrl.u32 %v2279, 7
        %v2281 = vsub.s32 %v2278, %v2280
        %v2282 = vrot.slane %v1391, %v2281
        %v2284 = vunpack.c.l.s4 1983009808
        %v2285 = vunpack.c.0.s8 %v2284
        %v2286 = vlaneseq
        %v2287 = vshrl.u32 %v2286, 7
        %v2288 = vsub.s32 %v2285, %v2287
        %v2289 = vrot.slane %v2275, %v2288
        %v2290 = vcombine.high %v1399, %v1303
        %v2292 = vunpack.c.l.s4 1983009808
        %v2293 = vunpack.c.0.s8 %v2292
        %v2294 = vlaneseq
        %v2295 = vshrl.u32 %v2294, 7
        %v2296 = vsub.s32 %v2293, %v2295
        %v2297 = vrot.slane %v1399, %v2296
        %v2299 = vunpack.c.l.s4 1983009808
        %v2300 = vunpack.c.0.s8 %v2299
        %v2301 = vlaneseq
        %v2302 = vshrl.u32 %v2301, 7
        %v2303 = vsub.s32 %v2300, %v2302
        %v2304 = vrot.slane %v2290, %v2303
        %v2305 = vcombine.low %v2282, %v2297
        %v2306 = vcombine.high %v2282, %v2297
        %v2308 = vunpack.c.l.s4 1934713408
        %v2309 = vunpack.c.0.s8 %v2308
        %v2310 = vlaneseq
        %v2311 = vshrl.u32 %v2310, 7
        %v2312 = vsub.s32 %v2309, %v2311
        %v2313 = vrot.slane %v2305, %v2312
        %v2315 = vunpack.c.l.s4 1934713408
        %v2316 = vunpack.c.0.s8 %v2315
        %v2317 = vlaneseq
        %v2318 = vshrl.u32 %v2317, 7
        %v2319 = vsub.s32 %v2316, %v2318
        %v2320 = vrot.slane %v2306, %v2319
        %v2321 = vcombine.low %v2289, %v2304
        %v2322 = vcombine.high %v2289, %v2304
        %v2324 = vunpack.c.l.s4 1934713408
        %v2325 = vunpack.c.0.s8 %v2324
        %v2326 = vlaneseq
        %v2327 = vshrl.u32 %v2326, 7
        %v2328 = vsub.s32 %v2325, %v2327
        %v2329 = vrot.slane %v2321, %v2328
        %v2331 = vunpack.c.l.s4 1934713408
        %v2332 = vunpack.c.0.s8 %v2331
        %v2333 = vlaneseq
        %v2334 = vshrl.u32 %v2333, 7
        %v2335 = vsub.s32 %v2332, %v2334
        %v2336 = vrot.slane %v2322, %v2335
        %v2337 = vcombine.high %v2313, 0
        %v2338 = vcombine.high %v2320, 0
        %v2339 = vcombine.high %v2329, 0
        %v2340 = vcombine.high %v2336, 0
        %v2341 = vcombine.high %v1403, %v1300
        %v2343 = vunpack.c.l.s4 1983009808
        %v2344 = vunpack.c.0.s8 %v2343
        %v2345 = vlaneseq
        %v2346 = vshrl.u32 %v2345, 7
        %v2347 = vsub.s32 %v2344, %v2346
        %v2348 = vrot.slane %v1403, %v2347
        %v2350 = vunpack.c.l.s4 1983009808
        %v2351 = vunpack.c.0.s8 %v2350
        %v2352 = vlaneseq
        %v2353 = vshrl.u32 %v2352, 7
        %v2354 = vsub.s32 %v2351, %v2353
        %v2355 = vrot.slane %v2341, %v2354
        %v2356 = vcombine.high %v1411, %v1300
        %v2358 = vunpack.c.l.s4 1983009808
        %v2359 = vunpack.c.0.s8 %v2358
        %v2360 = vlaneseq
        %v2361 = vshrl.u32 %v2360, 7
        %v2362 = vsub.s32 %v2359, %v2361
        %v2363 = vrot.slane %v1411, %v2362
        %v2365 = vunpack.c.l.s4 1983009808
        %v2366 = vunpack.c.0.s8 %v2365
        %v2367 = vlaneseq
        %v2368 = vshrl.u32 %v2367, 7
        %v2369 = vsub.s32 %v2366, %v2368
        %v2370 = vrot.slane %v2356, %v2369
        %v2371 = vcombine.low %v2348, %v2363
        %v2372 = vcombine.high %v2348, %v2363
        %v2374 = vunpack.c.l.s4 1934713408
        %v2375 = vunpack.c.0.s8 %v2374
        %v2376 = vlaneseq
        %v2377 = vshrl.u32 %v2376, 7
        %v2378 = vsub.s32 %v2375, %v2377
        %v2379 = vrot.slane %v2371, %v2378
        %v2381 = vunpack.c.l.s4 1934713408
        %v2382 = vunpack.c.0.s8 %v2381
        %v2383 = vlaneseq
        %v2384 = vshrl.u32 %v2383, 7
        %v2385 = vsub.s32 %v2382, %v2384
        %v2386 = vrot.slane %v2372, %v2385
        %v2387 = vcombine.low %v2355, %v2370
        %v2388 = vcombine.high %v2355, %v2370
        %v2390 = vunpack.c.l.s4 1934713408
        %v2391 = vunpack.c.0.s8 %v2390
        %v2392 = vlaneseq
        %v2393 = vshrl.u32 %v2392, 7
        %v2394 = vsub.s32 %v2391, %v2393
        %v2395 = vrot.slane %v2387, %v2394
        %v2397 = vunpack.c.l.s4 1934713408
        %v2398 = vunpack.c.0.s8 %v2397
        %v2399 = vlaneseq
        %v2400 = vshrl.u32 %v2399, 7
        %v2401 = vsub.s32 %v2398, %v2400
        %v2402 = vrot.slane %v2388, %v2401
        %v2403 = vcombine.high %v2379, 0
        %v2404 = vcombine.high %v2386, 0
        %v2405 = vcombine.high %v2395, 0
        %v2406 = vcombine.high %v2402, 0
        %v2407 = vcombine.high %v1407, %v1303
        %v2409 = vunpack.c.l.s4 1983009808
        %v2410 = vunpack.c.0.s8 %v2409
        %v2411 = vlaneseq
        %v2412 = vshrl.u32 %v2411, 7
        %v2413 = vsub.s32 %v2410, %v2412
        %v2414 = vrot.slane %v1407, %v2413
        %v2416 = vunpack.c.l.s4 1983009808
        %v2417 = vunpack.c.0.s8 %v2416
        %v2418 = vlaneseq
        %v2419 = vshrl.u32 %v2418, 7
        %v2420 = vsub.s32 %v2417, %v2419
        %v2421 = vrot.slane %v2407, %v2420
        %v2422 = vcombine.high %v1415, %v1303
        %v2424 = vunpack.c.l.s4 1983009808
        %v2425 = vunpack.c.0.s8 %v2424
        %v2426 = vlaneseq
        %v2427 = vshrl.u32 %v2426, 7
        %v2428 = vsub.s32 %v2425, %v2427
        %v2429 = vrot.slane %v1415, %v2428
        %v2431 = vunpack.c.l.s4 1983009808
        %v2432 = vunpack.c.0.s8 %v2431
        %v2433 = vlaneseq
        %v2434 = vshrl.u32 %v2433, 7
        %v2435 = vsub.s32 %v2432, %v2434
        %v2436 = vrot.slane %v2422, %v2435
        %v2437 = vcombine.low %v2414, %v2429
        %v2438 = vcombine.high %v2414, %v2429
        %v2440 = vunpack.c.l.s4 1934713408
        %v2441 = vunpack.c.0.s8 %v2440
        %v2442 = vlaneseq
        %v2443 = vshrl.u32 %v2442, 7
        %v2444 = vsub.s32 %v2441, %v2443
        %v2445 = vrot.slane %v2437, %v2444
        %v2447 = vunpack.c.l.s4 1934713408
        %v2448 = vunpack.c.0.s8 %v2447
        %v2449 = vlaneseq
        %v2450 = vshrl.u32 %v2449, 7
        %v2451 = vsub.s32 %v2448, %v2450
        %v2452 = vrot.slane %v2438, %v2451
        %v2453 = vcombine.low %v2421, %v2436
        %v2454 = vcombine.high %v2421, %v2436
        %v2456 = vunpack.c.l.s4 1934713408
        %v2457 = vunpack.c.0.s8 %v2456
        %v2458 = vlaneseq
        %v2459 = vshrl.u32 %v2458, 7
        %v2460 = vsub.s32 %v2457, %v2459
        %v2461 = vrot.slane %v2453, %v2460
        %v2463 = vunpack.c.l.s4 1934713408
        %v2464 = vunpack.c.0.s8 %v2463
        %v2465 = vlaneseq
        %v2466 = vshrl.u32 %v2465, 7
        %v2467 = vsub.s32 %v2464, %v2466
        %v2468 = vrot.slane %v2454, %v2467
        %v2469 = vcombine.high %v2445, 0
        %v2470 = vcombine.high %v2452, 0
        %v2471 = vcombine.high %v2461, 0
        %v2472 = vcombine.high %v2468, 0
        %v2473 = vcombine.low %v1455, %v1462
        %v2475 = vunpack.c.l.s4 1983009808
        %v2476 = vunpack.c.0.s8 %v2475
        %v2477 = vlaneseq
        %v2478 = vshrl.u32 %v2477, 7
        %v2479 = vsub.s32 %v2476, %v2478
        %v2480 = vrot.slane %v2473, %v2479
        %v2481 = vcombine.low %v1479, %v1480
        %v2483 = vunpack.c.l.s4 1983009808
        %v2484 = vunpack.c.0.s8 %v2483
        %v2485 = vlaneseq
        %v2486 = vshrl.u32 %v2485, 7
        %v2487 = vsub.s32 %v2484, %v2486
        %v2488 = vrot.slane %v2481, %v2487
        %v2489 = vcombine.low %v1471, %v1478
        %v2491 = vunpack.c.l.s4 1983009808
        %v2492 = vunpack.c.0.s8 %v2491
        %v2493 = vlaneseq
        %v2494 = vshrl.u32 %v2493, 7
        %v2495 = vsub.s32 %v2492, %v2494
        %v2496 = vrot.slane %v2489, %v2495
        %v2497 = vcombine.low %v1481, %v1482
        %v2499 = vunpack.c.l.s4 1983009808
        %v2500 = vunpack.c.0.s8 %v2499
        %v2501 = vlaneseq
        %v2502 = vshrl.u32 %v2501, 7
        %v2503 = vsub.s32 %v2500, %v2502
        %v2504 = vrot.slane %v2497, %v2503
        %v2505 = vcombine.low %v2480, %v2488
        %v2507 = vunpack.c.l.s4 1934713408
        %v2508 = vunpack.c.0.s8 %v2507
        %v2509 = vlaneseq
        %v2510 = vshrl.u32 %v2509, 7
        %v2511 = vsub.s32 %v2508, %v2510
        %v2512 = vrot.slane %v2505, %v2511
        %v2513 = vcombine.low %v2496, %v2504
        %v2515 = vunpack.c.l.s4 1934713408
        %v2516 = vunpack.c.0.s8 %v2515
        %v2517 = vlaneseq
        %v2518 = vshrl.u32 %v2517, 7
        %v2519 = vsub.s32 %v2516, %v2518
        %v2520 = vrot.slane %v2513, %v2519
        %v2521 = vcombine.low %v2512, %v2520
        %v2522 = vcombine.high %v2512, %v2520
        %v2523 = vcombine.low %v1521, %v1528
        %v2525 = vunpack.c.l.s4 1983009808
        %v2526 = vunpack.c.0.s8 %v2525
        %v2527 = vlaneseq
        %v2528 = vshrl.u32 %v2527, 7
        %v2529 = vsub.s32 %v2526, %v2528
        %v2530 = vrot.slane %v2523, %v2529
        %v2531 = vcombine.low %v1545, %v1546
        %v2533 = vunpack.c.l.s4 1983009808
        %v2534 = vunpack.c.0.s8 %v2533
        %v2535 = vlaneseq
        %v2536 = vshrl.u32 %v2535, 7
        %v2537 = vsub.s32 %v2534, %v2536
        %v2538 = vrot.slane %v2531, %v2537
        %v2539 = vcombine.low %v1537, %v1544
        %v2541 = vunpack.c.l.s4 1983009808
        %v2542 = vunpack.c.0.s8 %v2541
        %v2543 = vlaneseq
        %v2544 = vshrl.u32 %v2543, 7
        %v2545 = vsub.s32 %v2542, %v2544
        %v2546 = vrot.slane %v2539, %v2545
        %v2547 = vcombine.low %v1547, %v1548
        %v2549 = vunpack.c.l.s4 1983009808
        %v2550 = vunpack.c.0.s8 %v2549
        %v2551 = vlaneseq
        %v2552 = vshrl.u32 %v2551, 7
        %v2553 = vsub.s32 %v2550, %v2552
        %v2554 = vrot.slane %v2547, %v2553
        %v2555 = vcombine.low %v2530, %v2538
        %v2557 = vunpack.c.l.s4 1934713408
        %v2558 = vunpack.c.0.s8 %v2557
        %v2559 = vlaneseq
        %v2560 = vshrl.u32 %v2559, 7
        %v2561 = vsub.s32 %v2558, %v2560
        %v2562 = vrot.slane %v2555, %v2561
        %v2563 = vcombine.low %v2546, %v2554
        %v2565 = vunpack.c.l.s4 1934713408
        %v2566 = vunpack.c.0.s8 %v2565
        %v2567 = vlaneseq
        %v2568 = vshrl.u32 %v2567, 7
        %v2569 = vsub.s32 %v2566, %v2568
        %v2570 = vrot.slane %v2563, %v2569
        %v2571 = vcombine.low %v2562, %v2570
        %v2572 = vcombine.high %v2562, %v2570
        %v2573 = vcombine.low %v1587, %v1594
        %v2575 = vunpack.c.l.s4 1983009808
        %v2576 = vunpack.c.0.s8 %v2575
        %v2577 = vlaneseq
        %v2578 = vshrl.u32 %v2577, 7
        %v2579 = vsub.s32 %v2576, %v2578
        %v2580 = vrot.slane %v2573, %v2579
        %v2581 = vcombine.low %v1611, %v1612
        %v2583 = vunpack.c.l.s4 1983009808
        %v2584 = vunpack.c.0.s8 %v2583
        %v2585 = vlaneseq
        %v2586 = vshrl.u32 %v2585, 7
        %v2587 = vsub.s32 %v2584, %v2586
        %v2588 = vrot.slane %v2581, %v2587
        %v2589 = vcombine.low %v1603, %v1610
        %v2591 = vunpack.c.l.s4 1983009808
        %v2592 = vunpack.c.0.s8 %v2591
        %v2593 = vlaneseq
        %v2594 = vshrl.u32 %v2593, 7
        %v2595 = vsub.s32 %v2592, %v2594
        %v2596 = vrot.slane %v2589, %v2595
        %v2597 = vcombine.low %v1613, %v1614
        %v2599 = vunpack.c.l.s4 1983009808
        %v2600 = vunpack.c.0.s8 %v2599
        %v2601 = vlaneseq
        %v2602 = vshrl.u32 %v2601, 7
        %v2603 = vsub.s32 %v2600, %v2602
        %v2604 = vrot.slane %v2597, %v2603
        %v2605 = vcombine.low %v2580, %v2588
        %v2607 = vunpack.c.l.s4 1934713408
        %v2608 = vunpack.c.0.s8 %v2607
        %v2609 = vlaneseq
        %v2610 = vshrl.u32 %v2609, 7
        %v2611 = vsub.s32 %v2608, %v2610
        %v2612 = vrot.slane %v2605, %v2611
        %v2613 = vcombine.low %v2596, %v2604
        %v2615 = vunpack.c.l.s4 1934713408
        %v2616 = vunpack.c.0.s8 %v2615
        %v2617 = vlaneseq
        %v2618 = vshrl.u32 %v2617, 7
        %v2619 = vsub.s32 %v2616, %v2618
        %v2620 = vrot.slane %v2613, %v2619
        %v2621 = vcombine.low %v2612, %v2620
        %v2622 = vcombine.high %v2612, %v2620
        %v2623 = vcombine.low %v1653, %v1660
        %v2625 = vunpack.c.l.s4 1983009808
        %v2626 = vunpack.c.0.s8 %v2625
        %v2627 = vlaneseq
        %v2628 = vshrl.u32 %v2627, 7
        %v2629 = vsub.s32 %v2626, %v2628
        %v2630 = vrot.slane %v2623, %v2629
        %v2631 = vcombine.low %v1677, %v1678
        %v2633 = vunpack.c.l.s4 1983009808
        %v2634 = vunpack.c.0.s8 %v2633
        %v2635 = vlaneseq
        %v2636 = vshrl.u32 %v2635, 7
        %v2637 = vsub.s32 %v2634, %v2636
        %v2638 = vrot.slane %v2631, %v2637
        %v2639 = vcombine.low %v1669, %v1676
        %v2641 = vunpack.c.l.s4 1983009808
        %v2642 = vunpack.c.0.s8 %v2641
        %v2643 = vlaneseq
        %v2644 = vshrl.u32 %v2643, 7
        %v2645 = vsub.s32 %v2642, %v2644
        %v2646 = vrot.slane %v2639, %v2645
        %v2647 = vcombine.low %v1679, %v1680
        %v2649 = vunpack.c.l.s4 1983009808
        %v2650 = vunpack.c.0.s8 %v2649
        %v2651 = vlaneseq
        %v2652 = vshrl.u32 %v2651, 7
        %v2653 = vsub.s32 %v2650, %v2652
        %v2654 = vrot.slane %v2647, %v2653
        %v2655 = vcombine.low %v2630, %v2638
        %v2657 = vunpack.c.l.s4 1934713408
        %v2658 = vunpack.c.0.s8 %v2657
        %v2659 = vlaneseq
        %v2660 = vshrl.u32 %v2659, 7
        %v2661 = vsub.s32 %v2658, %v2660
        %v2662 = vrot.slane %v2655, %v2661
        %v2663 = vcombine.low %v2646, %v2654
        %v2665 = vunpack.c.l.s4 1934713408
        %v2666 = vunpack.c.0.s8 %v2665
        %v2667 = vlaneseq
        %v2668 = vshrl.u32 %v2667, 7
        %v2669 = vsub.s32 %v2666, %v2668
        %v2670 = vrot.slane %v2663, %v2669
        %v2671 = vcombine.low %v2662, %v2670
        %v2672 = vcombine.high %v2662, %v2670
        %v2673 = vcombine.low %v1719, %v1726
        %v2675 = vunpack.c.l.s4 1983009808
        %v2676 = vunpack.c.0.s8 %v2675
        %v2677 = vlaneseq
        %v2678 = vshrl.u32 %v2677, 7
        %v2679 = vsub.s32 %v2676, %v2678
        %v2680 = vrot.slane %v2673, %v2679
        %v2681 = vcombine.low %v1743, %v1744
        %v2683 = vunpack.c.l.s4 1983009808
        %v2684 = vunpack.c.0.s8 %v2683
        %v2685 = vlaneseq
        %v2686 = vshrl.u32 %v2685, 7
        %v2687 = vsub.s32 %v2684, %v2686
        %v2688 = vrot.slane %v2681, %v2687
        %v2689 = vcombine.low %v1735, %v1742
        %v2691 = vunpack.c.l.s4 1983009808
        %v2692 = vunpack.c.0.s8 %v2691
        %v2693 = vlaneseq
        %v2694 = vshrl.u32 %v2693, 7
        %v2695 = vsub.s32 %v2692, %v2694
        %v2696 = vrot.slane %v2689, %v2695
        %v2697 = vcombine.low %v1745, %v1746
        %v2699 = vunpack.c.l.s4 1983009808
        %v2700 = vunpack.c.0.s8 %v2699
        %v2701 = vlaneseq
        %v2702 = vshrl.u32 %v2701, 7
        %v2703 = vsub.s32 %v2700, %v2702
        %v2704 = vrot.slane %v2697, %v2703
        %v2705 = vcombine.low %v2680, %v2688
        %v2707 = vunpack.c.l.s4 1934713408
        %v2708 = vunpack.c.0.s8 %v2707
        %v2709 = vlaneseq
        %v2710 = vshrl.u32 %v2709, 7
        %v2711 = vsub.s32 %v2708, %v2710
        %v2712 = vrot.slane %v2705, %v2711
        %v2713 = vcombine.low %v2696, %v2704
        %v2715 = vunpack.c.l.s4 1934713408
        %v2716 = vunpack.c.0.s8 %v2715
        %v2717 = vlaneseq
        %v2718 = vshrl.u32 %v2717, 7
        %v2719 = vsub.s32 %v2716, %v2718
        %v2720 = vrot.slane %v2713, %v2719
        %v2721 = vcombine.low %v2712, %v2720
        %v2722 = vcombine.high %v2712, %v2720
        %v2723 = vcombine.low %v1785, %v1792
        %v2725 = vunpack.c.l.s4 1983009808
        %v2726 = vunpack.c.0.s8 %v2725
        %v2727 = vlaneseq
        %v2728 = vshrl.u32 %v2727, 7
        %v2729 = vsub.s32 %v2726, %v2728
        %v2730 = vrot.slane %v2723, %v2729
        %v2731 = vcombine.low %v1809, %v1810
        %v2733 = vunpack.c.l.s4 1983009808
        %v2734 = vunpack.c.0.s8 %v2733
        %v2735 = vlaneseq
        %v2736 = vshrl.u32 %v2735, 7
        %v2737 = vsub.s32 %v2734, %v2736
        %v2738 = vrot.slane %v2731, %v2737
        %v2739 = vcombine.low %v1801, %v1808
        %v2741 = vunpack.c.l.s4 1983009808
        %v2742 = vunpack.c.0.s8 %v2741
        %v2743 = vlaneseq
        %v2744 = vshrl.u32 %v2743, 7
        %v2745 = vsub.s32 %v2742, %v2744
        %v2746 = vrot.slane %v2739, %v2745
        %v2747 = vcombine.low %v1811, %v1812
        %v2749 = vunpack.c.l.s4 1983009808
        %v2750 = vunpack.c.0.s8 %v2749
        %v2751 = vlaneseq
        %v2752 = vshrl.u32 %v2751, 7
        %v2753 = vsub.s32 %v2750, %v2752
        %v2754 = vrot.slane %v2747, %v2753
        %v2755 = vcombine.low %v2730, %v2738
        %v2757 = vunpack.c.l.s4 1934713408
        %v2758 = vunpack.c.0.s8 %v2757
        %v2759 = vlaneseq
        %v2760 = vshrl.u32 %v2759, 7
        %v2761 = vsub.s32 %v2758, %v2760
        %v2762 = vrot.slane %v2755, %v2761
        %v2763 = vcombine.low %v2746, %v2754
        %v2765 = vunpack.c.l.s4 1934713408
        %v2766 = vunpack.c.0.s8 %v2765
        %v2767 = vlaneseq
        %v2768 = vshrl.u32 %v2767, 7
        %v2769 = vsub.s32 %v2766, %v2768
        %v2770 = vrot.slane %v2763, %v2769
        %v2771 = vcombine.low %v2762, %v2770
        %v2772 = vcombine.high %v2762, %v2770
        %v2773 = vcombine.low %v1851, %v1858
        %v2775 = vunpack.c.l.s4 1983009808
        %v2776 = vunpack.c.0.s8 %v2775
        %v2777 = vlaneseq
        %v2778 = vshrl.u32 %v2777, 7
        %v2779 = vsub.s32 %v2776, %v2778
        %v2780 = vrot.slane %v2773, %v2779
        %v2781 = vcombine.low %v1875, %v1876
        %v2783 = vunpack.c.l.s4 1983009808
        %v2784 = vunpack.c.0.s8 %v2783
        %v2785 = vlaneseq
        %v2786 = vshrl.u32 %v2785, 7
        %v2787 = vsub.s32 %v2784, %v2786
        %v2788 = vrot.slane %v2781, %v2787
        %v2789 = vcombine.low %v1867, %v1874
        %v2791 = vunpack.c.l.s4 1983009808
        %v2792 = vunpack.c.0.s8 %v2791
        %v2793 = vlaneseq
        %v2794 = vshrl.u32 %v2793, 7
        %v2795 = vsub.s32 %v2792, %v2794
        %v2796 = vrot.slane %v2789, %v2795
        %v2797 = vcombine.low %v1877, %v1878
        %v2799 = vunpack.c.l.s4 1983009808
        %v2800 = vunpack.c.0.s8 %v2799
        %v2801 = vlaneseq
        %v2802 = vshrl.u32 %v2801, 7
        %v2803 = vsub.s32 %v2800, %v2802
        %v2804 = vrot.slane %v2797, %v2803
        %v2805 = vcombine.low %v2780, %v2788
        %v2807 = vunpack.c.l.s4 1934713408
        %v2808 = vunpack.c.0.s8 %v2807
        %v2809 = vlaneseq
        %v2810 = vshrl.u32 %v2809, 7
        %v2811 = vsub.s32 %v2808, %v2810
        %v2812 = vrot.slane %v2805, %v2811
        %v2813 = vcombine.low %v2796, %v2804
        %v2815 = vunpack.c.l.s4 1934713408
        %v2816 = vunpack.c.0.s8 %v2815
        %v2817 = vlaneseq
        %v2818 = vshrl.u32 %v2817, 7
        %v2819 = vsub.s32 %v2816, %v2818
        %v2820 = vrot.slane %v2813, %v2819
        %v2821 = vcombine.low %v2812, %v2820
        %v2822 = vcombine.high %v2812, %v2820
        %v2823 = vcombine.low %v1917, %v1924
        %v2825 = vunpack.c.l.s4 1983009808
        %v2826 = vunpack.c.0.s8 %v2825
        %v2827 = vlaneseq
        %v2828 = vshrl.u32 %v2827, 7
        %v2829 = vsub.s32 %v2826, %v2828
        %v2830 = vrot.slane %v2823, %v2829
        %v2831 = vcombine.low %v1941, %v1942
        %v2833 = vunpack.c.l.s4 1983009808
        %v2834 = vunpack.c.0.s8 %v2833
        %v2835 = vlaneseq
        %v2836 = vshrl.u32 %v2835, 7
        %v2837 = vsub.s32 %v2834, %v2836
        %v2838 = vrot.slane %v2831, %v2837
        %v2839 = vcombine.low %v1933, %v1940
        %v2841 = vunpack.c.l.s4 1983009808
        %v2842 = vunpack.c.0.s8 %v2841
        %v2843 = vlaneseq
        %v2844 = vshrl.u32 %v2843, 7
        %v2845 = vsub.s32 %v2842, %v2844
        %v2846 = vrot.slane %v2839, %v2845
        %v2847 = vcombine.low %v1943, %v1944
        %v2849 = vunpack.c.l.s4 1983009808
        %v2850 = vunpack.c.0.s8 %v2849
        %v2851 = vlaneseq
        %v2852 = vshrl.u32 %v2851, 7
        %v2853 = vsub.s32 %v2850, %v2852
        %v2854 = vrot.slane %v2847, %v2853
        %v2855 = vcombine.low %v2830, %v2838
        %v2857 = vunpack.c.l.s4 1934713408
        %v2858 = vunpack.c.0.s8 %v2857
        %v2859 = vlaneseq
        %v2860 = vshrl.u32 %v2859, 7
        %v2861 = vsub.s32 %v2858, %v2860
        %v2862 = vrot.slane %v2855, %v2861
        %v2863 = vcombine.low %v2846, %v2854
        %v2865 = vunpack.c.l.s4 1934713408
        %v2866 = vunpack.c.0.s8 %v2865
        %v2867 = vlaneseq
        %v2868 = vshrl.u32 %v2867, 7
        %v2869 = vsub.s32 %v2866, %v2868
        %v2870 = vrot.slane %v2863, %v2869
        %v2871 = vcombine.low %v2862, %v2870
        %v2872 = vcombine.high %v2862, %v2870
        %v2873 = vcombine.low %v1983, %v1990
        %v2875 = vunpack.c.l.s4 1983009808
        %v2876 = vunpack.c.0.s8 %v2875
        %v2877 = vlaneseq
        %v2878 = vshrl.u32 %v2877, 7
        %v2879 = vsub.s32 %v2876, %v2878
        %v2880 = vrot.slane %v2873, %v2879
        %v2881 = vcombine.low %v2007, %v2008
        %v2883 = vunpack.c.l.s4 1983009808
        %v2884 = vunpack.c.0.s8 %v2883
        %v2885 = vlaneseq
        %v2886 = vshrl.u32 %v2885, 7
        %v2887 = vsub.s32 %v2884, %v2886
        %v2888 = vrot.slane %v2881, %v2887
        %v2889 = vcombine.low %v1999, %v2006
        %v2891 = vunpack.c.l.s4 1983009808
        %v2892 = vunpack.c.0.s8 %v2891
        %v2893 = vlaneseq
        %v2894 = vshrl.u32 %v2893, 7
        %v2895 = vsub.s32 %v2892, %v2894
        %v2896 = vrot.slane %v2889, %v2895
        %v2897 = vcombine.low %v2009, %v2010
        %v2899 = vunpack.c.l.s4 1983009808
        %v2900 = vunpack.c.0.s8 %v2899
        %v2901 = vlaneseq
        %v2902 = vshrl.u32 %v2901, 7
        %v2903 = vsub.s32 %v2900, %v2902
        %v2904 = vrot.slane %v2897, %v2903
        %v2905 = vcombine.low %v2880, %v2888
        %v2907 = vunpack.c.l.s4 1934713408
        %v2908 = vunpack.c.0.s8 %v2907
        %v2909 = vlaneseq
        %v2910 = vshrl.u32 %v2909, 7
        %v2911 = vsub.s32 %v2908, %v2910
        %v2912 = vrot.slane %v2905, %v2911
        %v2913 = vcombine.low %v2896, %v2904
        %v2915 = vunpack.c.l.s4 1934713408
        %v2916 = vunpack.c.0.s8 %v2915
        %v2917 = vlaneseq
        %v2918 = vshrl.u32 %v2917, 7
        %v2919 = vsub.s32 %v2916, %v2918
        %v2920 = vrot.slane %v2913, %v2919
        %v2921 = vcombine.low %v2912, %v2920
        %v2922 = vcombine.high %v2912, %v2920
        %v2923 = vcombine.low %v2049, %v2056
        %v2925 = vunpack.c.l.s4 1983009808
        %v2926 = vunpack.c.0.s8 %v2925
        %v2927 = vlaneseq
        %v2928 = vshrl.u32 %v2927, 7
        %v2929 = vsub.s32 %v2926, %v2928
        %v2930 = vrot.slane %v2923, %v2929
        %v2931 = vcombine.low %v2073, %v2074
        %v2933 = vunpack.c.l.s4 1983009808
        %v2934 = vunpack.c.0.s8 %v2933
        %v2935 = vlaneseq
        %v2936 = vshrl.u32 %v2935, 7
        %v2937 = vsub.s32 %v2934, %v2936
        %v2938 = vrot.slane %v2931, %v2937
        %v2939 = vcombine.low %v2065, %v2072
        %v2941 = vunpack.c.l.s4 1983009808
        %v2942 = vunpack.c.0.s8 %v2941
        %v2943 = vlaneseq
        %v2944 = vshrl.u32 %v2943, 7
        %v2945 = vsub.s32 %v2942, %v2944
        %v2946 = vrot.slane %v2939, %v2945
        %v2947 = vcombine.low %v2075, %v2076
        %v2949 = vunpack.c.l.s4 1983009808
        %v2950 = vunpack.c.0.s8 %v2949
        %v2951 = vlaneseq
        %v2952 = vshrl.u32 %v2951, 7
        %v2953 = vsub.s32 %v2950, %v2952
        %v2954 = vrot.slane %v2947, %v2953
        %v2955 = vcombine.low %v2930, %v2938
        %v2957 = vunpack.c.l.s4 1934713408
        %v2958 = vunpack.c.0.s8 %v2957
        %v2959 = vlaneseq
        %v2960 = vshrl.u32 %v2959, 7
        %v2961 = vsub.s32 %v2958, %v2960
        %v2962 = vrot.slane %v2955, %v2961
        %v2963 = vcombine.low %v2946, %v2954
        %v2965 = vunpack.c.l.s4 1934713408
        %v2966 = vunpack.c.0.s8 %v2965
        %v2967 = vlaneseq
        %v2968 = vshrl.u32 %v2967, 7
        %v2969 = vsub.s32 %v2966, %v2968
        %v2970 = vrot.slane %v2963, %v2969
        %v2971 = vcombine.low %v2962, %v2970
        %v2972 = vcombine.high %v2962, %v2970
        %v2973 = vcombine.low %v2115, %v2122
        %v2975 = vunpack.c.l.s4 1983009808
        %v2976 = vunpack.c.0.s8 %v2975
        %v2977 = vlaneseq
        %v2978 = vshrl.u32 %v2977, 7
        %v2979 = vsub.s32 %v2976, %v2978
        %v2980 = vrot.slane %v2973, %v2979
        %v2981 = vcombine.low %v2139, %v2140
        %v2983 = vunpack.c.l.s4 1983009808
        %v2984 = vunpack.c.0.s8 %v2983
        %v2985 = vlaneseq
        %v2986 = vshrl.u32 %v2985, 7
        %v2987 = vsub.s32 %v2984, %v2986
        %v2988 = vrot.slane %v2981, %v2987
        %v2989 = vcombine.low %v2131, %v2138
        %v2991 = vunpack.c.l.s4 1983009808
        %v2992 = vunpack.c.0.s8 %v2991
        %v2993 = vlaneseq
        %v2994 = vshrl.u32 %v2993, 7
        %v2995 = vsub.s32 %v2992, %v2994
        %v2996 = vrot.slane %v2989, %v2995
        %v2997 = vcombine.low %v2141, %v2142
        %v2999 = vunpack.c.l.s4 1983009808
        %v3000 = vunpack.c.0.s8 %v2999
        %v3001 = vlaneseq
        %v3002 = vshrl.u32 %v3001, 7
        %v3003 = vsub.s32 %v3000, %v3002
        %v3004 = vrot.slane %v2997, %v3003
        %v3005 = vcombine.low %v2980, %v2988
        %v3007 = vunpack.c.l.s4 1934713408
        %v3008 = vunpack.c.0.s8 %v3007
        %v3009 = vlaneseq
        %v3010 = vshrl.u32 %v3009, 7
        %v3011 = vsub.s32 %v3008, %v3010
        %v3012 = vrot.slane %v3005, %v3011
        %v3013 = vcombine.low %v2996, %v3004
        %v3015 = vunpack.c.l.s4 1934713408
        %v3016 = vunpack.c.0.s8 %v3015
        %v3017 = vlaneseq
        %v3018 = vshrl.u32 %v3017, 7
        %v3019 = vsub.s32 %v3016, %v3018
        %v3020 = vrot.slane %v3013, %v3019
        %v3021 = vcombine.low %v3012, %v3020
        %v3022 = vcombine.high %v3012, %v3020
        %v3023 = vcombine.low %v2181, %v2188
        %v3025 = vunpack.c.l.s4 1983009808
        %v3026 = vunpack.c.0.s8 %v3025
        %v3027 = vlaneseq
        %v3028 = vshrl.u32 %v3027, 7
        %v3029 = vsub.s32 %v3026, %v3028
        %v3030 = vrot.slane %v3023, %v3029
        %v3031 = vcombine.low %v2205, %v2206
        %v3033 = vunpack.c.l.s4 1983009808
        %v3034 = vunpack.c.0.s8 %v3033
        %v3035 = vlaneseq
        %v3036 = vshrl.u32 %v3035, 7
        %v3037 = vsub.s32 %v3034, %v3036
        %v3038 = vrot.slane %v3031, %v3037
        %v3039 = vcombine.low %v2197, %v2204
        %v3041 = vunpack.c.l.s4 1983009808
        %v3042 = vunpack.c.0.s8 %v3041
        %v3043 = vlaneseq
        %v3044 = vshrl.u32 %v3043, 7
        %v3045 = vsub.s32 %v3042, %v3044
        %v3046 = vrot.slane %v3039, %v3045
        %v3047 = vcombine.low %v2207, %v2208
        %v3049 = vunpack.c.l.s4 1983009808
        %v3050 = vunpack.c.0.s8 %v3049
        %v3051 = vlaneseq
        %v3052 = vshrl.u32 %v3051, 7
        %v3053 = vsub.s32 %v3050, %v3052
        %v3054 = vrot.slane %v3047, %v3053
        %v3055 = vcombine.low %v3030, %v3038
        %v3057 = vunpack.c.l.s4 1934713408
        %v3058 = vunpack.c.0.s8 %v3057
        %v3059 = vlaneseq
        %v3060 = vshrl.u32 %v3059, 7
        %v3061 = vsub.s32 %v3058, %v3060
        %v3062 = vrot.slane %v3055, %v3061
        %v3063 = vcombine.low %v3046, %v3054
        %v3065 = vunpack.c.l.s4 1934713408
        %v3066 = vunpack.c.0.s8 %v3065
        %v3067 = vlaneseq
        %v3068 = vshrl.u32 %v3067, 7
        %v3069 = vsub.s32 %v3066, %v3068
        %v3070 = vrot.slane %v3063, %v3069
        %v3071 = vcombine.low %v3062, %v3070
        %v3072 = vcombine.high %v3062, %v3070
        %v3073 = vcombine.low %v2247, %v2254
        %v3075 = vunpack.c.l.s4 1983009808
        %v3076 = vunpack.c.0.s8 %v3075
        %v3077 = vlaneseq
        %v3078 = vshrl.u32 %v3077, 7
        %v3079 = vsub.s32 %v3076, %v3078
        %v3080 = vrot.slane %v3073, %v3079
        %v3081 = vcombine.low %v2271, %v2272
        %v3083 = vunpack.c.l.s4 1983009808
        %v3084 = vunpack.c.0.s8 %v3083
        %v3085 = vlaneseq
        %v3086 = vshrl.u32 %v3085, 7
        %v3087 = vsub.s32 %v3084, %v3086
        %v3088 = vrot.slane %v3081, %v3087
        %v3089 = vcombine.low %v2263, %v2270
        %v3091 = vunpack.c.l.s4 1983009808
        %v3092 = vunpack.c.0.s8 %v3091
        %v3093 = vlaneseq
        %v3094 = vshrl.u32 %v3093, 7
        %v3095 = vsub.s32 %v3092, %v3094
        %v3096 = vrot.slane %v3089, %v3095
        %v3097 = vcombine.low %v2273, %v2274
        %v3099 = vunpack.c.l.s4 1983009808
        %v3100 = vunpack.c.0.s8 %v3099
        %v3101 = vlaneseq
        %v3102 = vshrl.u32 %v3101, 7
        %v3103 = vsub.s32 %v3100, %v3102
        %v3104 = vrot.slane %v3097, %v3103
        %v3105 = vcombine.low %v3080, %v3088
        %v3107 = vunpack.c.l.s4 1934713408
        %v3108 = vunpack.c.0.s8 %v3107
        %v3109 = vlaneseq
        %v3110 = vshrl.u32 %v3109, 7
        %v3111 = vsub.s32 %v3108, %v3110
        %v3112 = vrot.slane %v3105, %v3111
        %v3113 = vcombine.low %v3096, %v3104
        %v3115 = vunpack.c.l.s4 1934713408
        %v3116 = vunpack.c.0.s8 %v3115
        %v3117 = vlaneseq
        %v3118 = vshrl.u32 %v3117, 7
        %v3119 = vsub.s32 %v3116, %v3118
        %v3120 = vrot.slane %v3113, %v3119
        %v3121 = vcombine.low %v3112, %v3120
        %v3122 = vcombine.high %v3112, %v3120
        %v3123 = vcombine.low %v2313, %v2320
        %v3125 = vunpack.c.l.s4 1983009808
        %v3126 = vunpack.c.0.s8 %v3125
        %v3127 = vlaneseq
        %v3128 = vshrl.u32 %v3127, 7
        %v3129 = vsub.s32 %v3126, %v3128
        %v3130 = vrot.slane %v3123, %v3129
        %v3131 = vcombine.low %v2337, %v2338
        %v3133 = vunpack.c.l.s4 1983009808
        %v3134 = vunpack.c.0.s8 %v3133
        %v3135 = vlaneseq
        %v3136 = vshrl.u32 %v3135, 7
        %v3137 = vsub.s32 %v3134, %v3136
        %v3138 = vrot.slane %v3131, %v3137
        %v3139 = vcombine.low %v2329, %v2336
        %v3141 = vunpack.c.l.s4 1983009808
        %v3142 = vunpack.c.0.s8 %v3141
        %v3143 = vlaneseq
        %v3144 = vshrl.u32 %v3143, 7
        %v3145 = vsub.s32 %v3142, %v3144
        %v3146 = vrot.slane %v3139, %v3145
        %v3147 = vcombine.low %v2339, %v2340
        %v3149 = vunpack.c.l.s4 1983009808
        %v3150 = vunpack.c.0.s8 %v3149
        %v3151 = vlaneseq
        %v3152 = vshrl.u32 %v3151, 7
        %v3153 = vsub.s32 %v3150, %v3152
        %v3154 = vrot.slane %v3147, %v3153
        %v3155 = vcombine.low %v3130, %v3138
        %v3157 = vunpack.c.l.s4 1934713408
        %v3158 = vunpack.c.0.s8 %v3157
        %v3159 = vlaneseq
        %v3160 = vshrl.u32 %v3159, 7
        %v3161 = vsub.s32 %v3158, %v3160
        %v3162 = vrot.slane %v3155, %v3161
        %v3163 = vcombine.low %v3146, %v3154
        %v3165 = vunpack.c.l.s4 1934713408
        %v3166 = vunpack.c.0.s8 %v3165
        %v3167 = vlaneseq
        %v3168 = vshrl.u32 %v3167, 7
        %v3169 = vsub.s32 %v3166, %v3168
        %v3170 = vrot.slane %v3163, %v3169
        %v3171 = vcombine.low %v3162, %v3170
        %v3172 = vcombine.high %v3162, %v3170
        %v3173 = vcombine.low %v2379, %v2386
        %v3175 = vunpack.c.l.s4 1983009808
        %v3176 = vunpack.c.0.s8 %v3175
        %v3177 = vlaneseq
        %v3178 = vshrl.u32 %v3177, 7
        %v3179 = vsub.s32 %v3176, %v3178
        %v3180 = vrot.slane %v3173, %v3179
        %v3181 = vcombine.low %v2403, %v2404
        %v3183 = vunpack.c.l.s4 1983009808
        %v3184 = vunpack.c.0.s8 %v3183
        %v3185 = vlaneseq
        %v3186 = vshrl.u32 %v3185, 7
        %v3187 = vsub.s32 %v3184, %v3186
        %v3188 = vrot.slane %v3181, %v3187
        %v3189 = vcombine.low %v2395, %v2402
        %v3191 = vunpack.c.l.s4 1983009808
        %v3192 = vunpack.c.0.s8 %v3191
        %v3193 = vlaneseq
        %v3194 = vshrl.u32 %v3193, 7
        %v3195 = vsub.s32 %v3192, %v3194
        %v3196 = vrot.slane %v3189, %v3195
        %v3197 = vcombine.low %v2405, %v2406
        %v3199 = vunpack.c.l.s4 1983009808
        %v3200 = vunpack.c.0.s8 %v3199
        %v3201 = vlaneseq
        %v3202 = vshrl.u32 %v3201, 7
        %v3203 = vsub.s32 %v3200, %v3202
        %v3204 = vrot.slane %v3197, %v3203
        %v3205 = vcombine.low %v3180, %v3188
        %v3207 = vunpack.c.l.s4 1934713408
        %v3208 = vunpack.c.0.s8 %v3207
        %v3209 = vlaneseq
        %v3210 = vshrl.u32 %v3209, 7
        %v3211 = vsub.s32 %v3208, %v3210
        %v3212 = vrot.slane %v3205, %v3211
        %v3213 = vcombine.low %v3196, %v3204
        %v3215 = vunpack.c.l.s4 1934713408
        %v3216 = vunpack.c.0.s8 %v3215
        %v3217 = vlaneseq
        %v3218 = vshrl.u32 %v3217, 7
        %v3219 = vsub.s32 %v3216, %v3218
        %v3220 = vrot.slane %v3213, %v3219
        %v3221 = vcombine.low %v3212, %v3220
        %v3222 = vcombine.high %v3212, %v3220
        %v3223 = vcombine.low %v2445, %v2452
        %v3225 = vunpack.c.l.s4 1983009808
        %v3226 = vunpack.c.0.s8 %v3225
        %v3227 = vlaneseq
        %v3228 = vshrl.u32 %v3227, 7
        %v3229 = vsub.s32 %v3226, %v3228
        %v3230 = vrot.slane %v3223, %v3229
        %v3231 = vcombine.low %v2469, %v2470
        %v3233 = vunpack.c.l.s4 1983009808
        %v3234 = vunpack.c.0.s8 %v3233
        %v3235 = vlaneseq
        %v3236 = vshrl.u32 %v3235, 7
        %v3237 = vsub.s32 %v3234, %v3236
        %v3238 = vrot.slane %v3231, %v3237
        %v3239 = vcombine.low %v2461, %v2468
        %v3241 = vunpack.c.l.s4 1983009808
        %v3242 = vunpack.c.0.s8 %v3241
        %v3243 = vlaneseq
        %v3244 = vshrl.u32 %v3243, 7
        %v3245 = vsub.s32 %v3242, %v3244
        %v3246 = vrot.slane %v3239, %v3245
        %v3247 = vcombine.low %v2471, %v2472
        %v3249 = vunpack.c.l.s4 1983009808
        %v3250 = vunpack.c.0.s8 %v3249
        %v3251 = vlaneseq
        %v3252 = vshrl.u32 %v3251, 7
        %v3253 = vsub.s32 %v3250, %v3252
        %v3254 = vrot.slane %v3247, %v3253
        %v3255 = vcombine.low %v3230, %v3238
        %v3257 = vunpack.c.l.s4 1934713408
        %v3258 = vunpack.c.0.s8 %v3257
        %v3259 = vlaneseq
        %v3260 = vshrl.u32 %v3259, 7
        %v3261 = vsub.s32 %v3258, %v3260
        %v3262 = vrot.slane %v3255, %v3261
        %v3263 = vcombine.low %v3246, %v3254
        %v3265 = vunpack.c.l.s4 1934713408
        %v3266 = vunpack.c.0.s8 %v3265
        %v3267 = vlaneseq
        %v3268 = vshrl.u32 %v3267, 7
        %v3269 = vsub.s32 %v3266, %v3268
        %v3270 = vrot.slane %v3263, %v3269
        %v3271 = vcombine.low %v3262, %v3270
        %v3272 = vcombine.high %v3262, %v3270
        %v3275 = vpack.i.b16 %v2571, %v2521
        %v3276 = vshrl.u32 %v2521, 16
        %v3277 = vshrl.u32 %v2571, 16
        %v3278 = vpack.i.b16 %v3277, %v3276
        %v3281 = vpack.i.b16 %v2572, %v2522
        %v3282 = vshrl.u32 %v2522, 16
        %v3283 = vshrl.u32 %v2572, 16
        %v3284 = vpack.i.b16 %v3283, %v3282
        %v3287 = vpack.i.b16 %v2671, %v2621
        %v3288 = vshrl.u32 %v2621, 16
        %v3289 = vshrl.u32 %v2671, 16
        %v3290 = vpack.i.b16 %v3289, %v3288
        %v3293 = vpack.i.b16 %v2672, %v2622
        %v3294 = vshrl.u32 %v2622, 16
        %v3295 = vshrl.u32 %v2672, 16
        %v3296 = vpack.i.b16 %v3295, %v3294
        %v3299 = vpack.i.b16 %v2771, %v2721
        %v3300 = vshrl.u32 %v2721, 16
        %v3301 = vshrl.u32 %v2771, 16
        %v3302 = vpack.i.b16 %v3301, %v3300
        %v3305 = vpack.i.b16 %v2772, %v2722
        %v3306 = vshrl.u32 %v2722, 16
        %v3307 = vshrl.u32 %v2772, 16
        %v3308 = vpack.i.b16 %v3307, %v3306
        %v3311 = vpack.i.b16 %v2871, %v2821
        %v3312 = vshrl.u32 %v2821, 16
        %v3313 = vshrl.u32 %v2871, 16
        %v3314 = vpack.i.b16 %v3313, %v3312
        %v3317 = vpack.i.b16 %v2872, %v2822
        %v3318 = vshrl.u32 %v2822, 16
        %v3319 = vshrl.u32 %v2872, 16
        %v3320 = vpack.i.b16 %v3319, %v3318
        %v3323 = vpack.i.b16 %v2971, %v2921
        %v3324 = vshrl.u32 %v2921, 16
        %v3325 = vshrl.u32 %v2971, 16
        %v3326 = vpack.i.b16 %v3325, %v3324
        %v3329 = vpack.i.b16 %v2972, %v2922
        %v3330 = vshrl.u32 %v2922, 16
        %v3331 = vshrl.u32 %v2972, 16
        %v3332 = vpack.i.b16 %v3331, %v3330
        %v3335 = vpack.i.b16 %v3071, %v3021
        %v3336 = vshrl.u32 %v3021, 16
        %v3337 = vshrl.u32 %v3071, 16
        %v3338 = vpack.i.b16 %v3337, %v3336
        %v3341 = vpack.i.b16 %v3072, %v3022
        %v3342 = vshrl.u32 %v3022, 16
        %v3343 = vshrl.u32 %v3072, 16
        %v3344 = vpack.i.b16 %v3343, %v3342
        %v3347 = vpack.i.b16 %v3171, %v3121
        %v3348 = vshrl.u32 %v3121, 16
        %v3349 = vshrl.u32 %v3171, 16
        %v3350 = vpack.i.b16 %v3349, %v3348
        %v3353 = vpack.i.b16 %v3172, %v3122
        %v3354 = vshrl.u32 %v3122, 16
        %v3355 = vshrl.u32 %v3172, 16
        %v3356 = vpack.i.b16 %v3355, %v3354
        %v3359 = vpack.i.b16 %v3271, %v3221
        %v3360 = vshrl.u32 %v3221, 16
        %v3361 = vshrl.u32 %v3271, 16
        %v3362 = vpack.i.b16 %v3361, %v3360
        %v3365 = vpack.i.b16 %v3272, %v3222
        %v3366 = vshrl.u32 %v3222, 16
        %v3367 = vshrl.u32 %v3272, 16
        %v3368 = vpack.i.b16 %v3367, %v3366
        %v3369 = vpack.c.bf16 %v978, %v974
        %v3370 = vpack.c.bf16 %v988, %v984
        %v3371 = vpack.c.bf16 %v998, %v994
        %v3372 = vpack.c.bf16 %v1008, %v1004
        %v3373 = vpack.c.bf16 %v1018, %v1014
        %v3374 = vpack.c.bf16 %v1028, %v1024
        %v3375 = vpack.c.bf16 %v1038, %v1034
        %v3376 = vpack.c.bf16 %v1048, %v1044
        %3385 = vrot.lane.b32.xlu0 %v3369, 96
        %v3386 = vpop.permute.xlu0 %3385
        %3387 = vrot.lane.b32.xlu0 %v3370, 96
        %v3388 = vpop.permute.xlu0 %3387
        %3389 = vrot.lane.b32.xlu0 %v3371, 96
        %v3390 = vpop.permute.xlu0 %3389
        %3391 = vrot.lane.b32.xlu0 %v3372, 96
        %v3392 = vpop.permute.xlu0 %3391
        %3393 = vrot.lane.b32.xlu0 %v3373, 96
        %v3394 = vpop.permute.xlu0 %3393
        %3395 = vrot.lane.b32.xlu0 %v3374, 96
        %v3396 = vpop.permute.xlu0 %3395
        %3397 = vrot.lane.b32.xlu0 %v3375, 96
        %v3398 = vpop.permute.xlu0 %3397
        %3399 = vrot.lane.b32.xlu0 %v3376, 96
        %v3400 = vpop.permute.xlu0 %3399
        %3401 = vrot.lane.b32.xlu0 %v3369, 64
        %v3402 = vpop.permute.xlu0 %3401
        %3403 = vrot.lane.b32.xlu0 %v3370, 64
        %v3404 = vpop.permute.xlu0 %3403
        %3405 = vrot.lane.b32.xlu0 %v3371, 64
        %v3406 = vpop.permute.xlu0 %3405
        %3407 = vrot.lane.b32.xlu0 %v3372, 64
        %v3408 = vpop.permute.xlu0 %3407
        %3409 = vrot.lane.b32.xlu0 %v3373, 64
        %v3410 = vpop.permute.xlu0 %3409
        %3411 = vrot.lane.b32.xlu0 %v3374, 64
        %v3412 = vpop.permute.xlu0 %3411
        %3413 = vrot.lane.b32.xlu0 %v3375, 64
        %v3414 = vpop.permute.xlu0 %3413
        %3415 = vrot.lane.b32.xlu0 %v3376, 64
        %v3416 = vpop.permute.xlu0 %3415
        %3417 = vrot.lane.b32.xlu0 %v3369, 32
        %v3418 = vpop.permute.xlu0 %3417
        %3419 = vrot.lane.b32.xlu0 %v3370, 32
        %v3420 = vpop.permute.xlu0 %3419
        %3421 = vrot.lane.b32.xlu0 %v3371, 32
        %v3422 = vpop.permute.xlu0 %3421
        %3423 = vrot.lane.b32.xlu0 %v3372, 32
        %v3424 = vpop.permute.xlu0 %3423
        %3425 = vrot.lane.b32.xlu0 %v3373, 32
        %v3426 = vpop.permute.xlu0 %3425
        %3427 = vrot.lane.b32.xlu0 %v3374, 32
        %v3428 = vpop.permute.xlu0 %3427
        %3429 = vrot.lane.b32.xlu0 %v3375, 32
        %v3430 = vpop.permute.xlu0 %3429
        %3431 = vrot.lane.b32.xlu0 %v3376, 32
        %v3432 = vpop.permute.xlu0 %3431
        %v3435 = vpack.i.b16 %v3386, %v3369
        %v3437 = vshrl.u32 %v3369, 16
        %v3438 = vshrl.u32 %v3386, 16
        %v3439 = vpack.i.b16 %v3438, %v3437
        %v3443 = vpack.i.b16 %v3418, %v3402
        %v3445 = vshrl.u32 %v3402, 16
        %v3446 = vshrl.u32 %v3418, 16
        %v3447 = vpack.i.b16 %v3446, %v3445
        %v3451 = vpack.i.b16 %v3388, %v3370
        %v3453 = vshrl.u32 %v3370, 16
        %v3454 = vshrl.u32 %v3388, 16
        %v3455 = vpack.i.b16 %v3454, %v3453
        %v3459 = vpack.i.b16 %v3420, %v3404
        %v3461 = vshrl.u32 %v3404, 16
        %v3462 = vshrl.u32 %v3420, 16
        %v3463 = vpack.i.b16 %v3462, %v3461
        %v3467 = vpack.i.b16 %v3390, %v3371
        %v3469 = vshrl.u32 %v3371, 16
        %v3470 = vshrl.u32 %v3390, 16
        %v3471 = vpack.i.b16 %v3470, %v3469
        %v3475 = vpack.i.b16 %v3422, %v3406
        %v3477 = vshrl.u32 %v3406, 16
        %v3478 = vshrl.u32 %v3422, 16
        %v3479 = vpack.i.b16 %v3478, %v3477
        %v3483 = vpack.i.b16 %v3392, %v3372
        %v3485 = vshrl.u32 %v3372, 16
        %v3486 = vshrl.u32 %v3392, 16
        %v3487 = vpack.i.b16 %v3486, %v3485
        %v3491 = vpack.i.b16 %v3424, %v3408
        %v3493 = vshrl.u32 %v3408, 16
        %v3494 = vshrl.u32 %v3424, 16
        %v3495 = vpack.i.b16 %v3494, %v3493
        %v3499 = vpack.i.b16 %v3394, %v3373
        %v3501 = vshrl.u32 %v3373, 16
        %v3502 = vshrl.u32 %v3394, 16
        %v3503 = vpack.i.b16 %v3502, %v3501
        %v3507 = vpack.i.b16 %v3426, %v3410
        %v3509 = vshrl.u32 %v3410, 16
        %v3510 = vshrl.u32 %v3426, 16
        %v3511 = vpack.i.b16 %v3510, %v3509
        %v3515 = vpack.i.b16 %v3396, %v3374
        %v3517 = vshrl.u32 %v3374, 16
        %v3518 = vshrl.u32 %v3396, 16
        %v3519 = vpack.i.b16 %v3518, %v3517
        %v3523 = vpack.i.b16 %v3428, %v3412
        %v3525 = vshrl.u32 %v3412, 16
        %v3526 = vshrl.u32 %v3428, 16
        %v3527 = vpack.i.b16 %v3526, %v3525
        %v3531 = vpack.i.b16 %v3398, %v3375
        %v3533 = vshrl.u32 %v3375, 16
        %v3534 = vshrl.u32 %v3398, 16
        %v3535 = vpack.i.b16 %v3534, %v3533
        %v3539 = vpack.i.b16 %v3430, %v3414
        %v3541 = vshrl.u32 %v3414, 16
        %v3542 = vshrl.u32 %v3430, 16
        %v3543 = vpack.i.b16 %v3542, %v3541
        %v3547 = vpack.i.b16 %v3400, %v3376
        %v3549 = vshrl.u32 %v3376, 16
        %v3550 = vshrl.u32 %v3400, 16
        %v3551 = vpack.i.b16 %v3550, %v3549
        %v3555 = vpack.i.b16 %v3432, %v3416
        %v3557 = vshrl.u32 %v3416, 16
        %v3558 = vshrl.u32 %v3432, 16
        %v3559 = vpack.i.b16 %v3558, %v3557
        %v3561 = vcombine.high %v3435, %v1300
        %v3563 = vunpack.c.l.s4 1983009808
        %v3564 = vunpack.c.0.s8 %v3563
        %v3565 = vlaneseq
        %v3566 = vshrl.u32 %v3565, 7
        %v3567 = vsub.s32 %v3564, %v3566
        %v3568 = vrot.slane %v3435, %v3567
        %v3570 = vunpack.c.l.s4 1983009808
        %v3571 = vunpack.c.0.s8 %v3570
        %v3572 = vlaneseq
        %v3573 = vshrl.u32 %v3572, 7
        %v3574 = vsub.s32 %v3571, %v3573
        %v3575 = vrot.slane %v3561, %v3574
        %v3576 = vcombine.high %v3443, %v1300
        %v3578 = vunpack.c.l.s4 1983009808
        %v3579 = vunpack.c.0.s8 %v3578
        %v3580 = vlaneseq
        %v3581 = vshrl.u32 %v3580, 7
        %v3582 = vsub.s32 %v3579, %v3581
        %v3583 = vrot.slane %v3443, %v3582
        %v3585 = vunpack.c.l.s4 1983009808
        %v3586 = vunpack.c.0.s8 %v3585
        %v3587 = vlaneseq
        %v3588 = vshrl.u32 %v3587, 7
        %v3589 = vsub.s32 %v3586, %v3588
        %v3590 = vrot.slane %v3576, %v3589
        %v3591 = vcombine.low %v3568, %v3583
        %v3592 = vcombine.high %v3568, %v3583
        %v3594 = vunpack.c.l.s4 1934713408
        %v3595 = vunpack.c.0.s8 %v3594
        %v3596 = vlaneseq
        %v3597 = vshrl.u32 %v3596, 7
        %v3598 = vsub.s32 %v3595, %v3597
        %v3599 = vrot.slane %v3591, %v3598
        %v3601 = vunpack.c.l.s4 1934713408
        %v3602 = vunpack.c.0.s8 %v3601
        %v3603 = vlaneseq
        %v3604 = vshrl.u32 %v3603, 7
        %v3605 = vsub.s32 %v3602, %v3604
        %v3606 = vrot.slane %v3592, %v3605
        %v3607 = vcombine.low %v3575, %v3590
        %v3608 = vcombine.high %v3575, %v3590
        %v3610 = vunpack.c.l.s4 1934713408
        %v3611 = vunpack.c.0.s8 %v3610
        %v3612 = vlaneseq
        %v3613 = vshrl.u32 %v3612, 7
        %v3614 = vsub.s32 %v3611, %v3613
        %v3615 = vrot.slane %v3607, %v3614
        %v3617 = vunpack.c.l.s4 1934713408
        %v3618 = vunpack.c.0.s8 %v3617
        %v3619 = vlaneseq
        %v3620 = vshrl.u32 %v3619, 7
        %v3621 = vsub.s32 %v3618, %v3620
        %v3622 = vrot.slane %v3608, %v3621
        %v3623 = vcombine.high %v3599, 0
        %v3624 = vcombine.high %v3606, 0
        %v3625 = vcombine.high %v3615, 0
        %v3626 = vcombine.high %v3622, 0
        %v3627 = vcombine.high %v3439, %v1303
        %v3629 = vunpack.c.l.s4 1983009808
        %v3630 = vunpack.c.0.s8 %v3629
        %v3631 = vlaneseq
        %v3632 = vshrl.u32 %v3631, 7
        %v3633 = vsub.s32 %v3630, %v3632
        %v3634 = vrot.slane %v3439, %v3633
        %v3636 = vunpack.c.l.s4 1983009808
        %v3637 = vunpack.c.0.s8 %v3636
        %v3638 = vlaneseq
        %v3639 = vshrl.u32 %v3638, 7
        %v3640 = vsub.s32 %v3637, %v3639
        %v3641 = vrot.slane %v3627, %v3640
        %v3642 = vcombine.high %v3447, %v1303
        %v3644 = vunpack.c.l.s4 1983009808
        %v3645 = vunpack.c.0.s8 %v3644
        %v3646 = vlaneseq
        %v3647 = vshrl.u32 %v3646, 7
        %v3648 = vsub.s32 %v3645, %v3647
        %v3649 = vrot.slane %v3447, %v3648
        %v3651 = vunpack.c.l.s4 1983009808
        %v3652 = vunpack.c.0.s8 %v3651
        %v3653 = vlaneseq
        %v3654 = vshrl.u32 %v3653, 7
        %v3655 = vsub.s32 %v3652, %v3654
        %v3656 = vrot.slane %v3642, %v3655
        %v3657 = vcombine.low %v3634, %v3649
        %v3658 = vcombine.high %v3634, %v3649
        %v3660 = vunpack.c.l.s4 1934713408
        %v3661 = vunpack.c.0.s8 %v3660
        %v3662 = vlaneseq
        %v3663 = vshrl.u32 %v3662, 7
        %v3664 = vsub.s32 %v3661, %v3663
        %v3665 = vrot.slane %v3657, %v3664
        %v3667 = vunpack.c.l.s4 1934713408
        %v3668 = vunpack.c.0.s8 %v3667
        %v3669 = vlaneseq
        %v3670 = vshrl.u32 %v3669, 7
        %v3671 = vsub.s32 %v3668, %v3670
        %v3672 = vrot.slane %v3658, %v3671
        %v3673 = vcombine.low %v3641, %v3656
        %v3674 = vcombine.high %v3641, %v3656
        %v3676 = vunpack.c.l.s4 1934713408
        %v3677 = vunpack.c.0.s8 %v3676
        %v3678 = vlaneseq
        %v3679 = vshrl.u32 %v3678, 7
        %v3680 = vsub.s32 %v3677, %v3679
        %v3681 = vrot.slane %v3673, %v3680
        %v3683 = vunpack.c.l.s4 1934713408
        %v3684 = vunpack.c.0.s8 %v3683
        %v3685 = vlaneseq
        %v3686 = vshrl.u32 %v3685, 7
        %v3687 = vsub.s32 %v3684, %v3686
        %v3688 = vrot.slane %v3674, %v3687
        %v3689 = vcombine.high %v3665, 0
        %v3690 = vcombine.high %v3672, 0
        %v3691 = vcombine.high %v3681, 0
        %v3692 = vcombine.high %v3688, 0
        %v3693 = vcombine.high %v3451, %v1300
        %v3695 = vunpack.c.l.s4 1983009808
        %v3696 = vunpack.c.0.s8 %v3695
        %v3697 = vlaneseq
        %v3698 = vshrl.u32 %v3697, 7
        %v3699 = vsub.s32 %v3696, %v3698
        %v3700 = vrot.slane %v3451, %v3699
        %v3702 = vunpack.c.l.s4 1983009808
        %v3703 = vunpack.c.0.s8 %v3702
        %v3704 = vlaneseq
        %v3705 = vshrl.u32 %v3704, 7
        %v3706 = vsub.s32 %v3703, %v3705
        %v3707 = vrot.slane %v3693, %v3706
        %v3708 = vcombine.high %v3459, %v1300
        %v3710 = vunpack.c.l.s4 1983009808
        %v3711 = vunpack.c.0.s8 %v3710
        %v3712 = vlaneseq
        %v3713 = vshrl.u32 %v3712, 7
        %v3714 = vsub.s32 %v3711, %v3713
        %v3715 = vrot.slane %v3459, %v3714
        %v3717 = vunpack.c.l.s4 1983009808
        %v3718 = vunpack.c.0.s8 %v3717
        %v3719 = vlaneseq
        %v3720 = vshrl.u32 %v3719, 7
        %v3721 = vsub.s32 %v3718, %v3720
        %v3722 = vrot.slane %v3708, %v3721
        %v3723 = vcombine.low %v3700, %v3715
        %v3724 = vcombine.high %v3700, %v3715
        %v3726 = vunpack.c.l.s4 1934713408
        %v3727 = vunpack.c.0.s8 %v3726
        %v3728 = vlaneseq
        %v3729 = vshrl.u32 %v3728, 7
        %v3730 = vsub.s32 %v3727, %v3729
        %v3731 = vrot.slane %v3723, %v3730
        %v3733 = vunpack.c.l.s4 1934713408
        %v3734 = vunpack.c.0.s8 %v3733
        %v3735 = vlaneseq
        %v3736 = vshrl.u32 %v3735, 7
        %v3737 = vsub.s32 %v3734, %v3736
        %v3738 = vrot.slane %v3724, %v3737
        %v3739 = vcombine.low %v3707, %v3722
        %v3740 = vcombine.high %v3707, %v3722
        %v3742 = vunpack.c.l.s4 1934713408
        %v3743 = vunpack.c.0.s8 %v3742
        %v3744 = vlaneseq
        %v3745 = vshrl.u32 %v3744, 7
        %v3746 = vsub.s32 %v3743, %v3745
        %v3747 = vrot.slane %v3739, %v3746
        %v3749 = vunpack.c.l.s4 1934713408
        %v3750 = vunpack.c.0.s8 %v3749
        %v3751 = vlaneseq
        %v3752 = vshrl.u32 %v3751, 7
        %v3753 = vsub.s32 %v3750, %v3752
        %v3754 = vrot.slane %v3740, %v3753
        %v3755 = vcombine.high %v3731, 0
        %v3756 = vcombine.high %v3738, 0
        %v3757 = vcombine.high %v3747, 0
        %v3758 = vcombine.high %v3754, 0
        %v3759 = vcombine.high %v3455, %v1303
        %v3761 = vunpack.c.l.s4 1983009808
        %v3762 = vunpack.c.0.s8 %v3761
        %v3763 = vlaneseq
        %v3764 = vshrl.u32 %v3763, 7
        %v3765 = vsub.s32 %v3762, %v3764
        %v3766 = vrot.slane %v3455, %v3765
        %v3768 = vunpack.c.l.s4 1983009808
        %v3769 = vunpack.c.0.s8 %v3768
        %v3770 = vlaneseq
        %v3771 = vshrl.u32 %v3770, 7
        %v3772 = vsub.s32 %v3769, %v3771
        %v3773 = vrot.slane %v3759, %v3772
        %v3774 = vcombine.high %v3463, %v1303
        %v3776 = vunpack.c.l.s4 1983009808
        %v3777 = vunpack.c.0.s8 %v3776
        %v3778 = vlaneseq
        %v3779 = vshrl.u32 %v3778, 7
        %v3780 = vsub.s32 %v3777, %v3779
        %v3781 = vrot.slane %v3463, %v3780
        %v3783 = vunpack.c.l.s4 1983009808
        %v3784 = vunpack.c.0.s8 %v3783
        %v3785 = vlaneseq
        %v3786 = vshrl.u32 %v3785, 7
        %v3787 = vsub.s32 %v3784, %v3786
        %v3788 = vrot.slane %v3774, %v3787
        %v3789 = vcombine.low %v3766, %v3781
        %v3790 = vcombine.high %v3766, %v3781
        %v3792 = vunpack.c.l.s4 1934713408
        %v3793 = vunpack.c.0.s8 %v3792
        %v3794 = vlaneseq
        %v3795 = vshrl.u32 %v3794, 7
        %v3796 = vsub.s32 %v3793, %v3795
        %v3797 = vrot.slane %v3789, %v3796
        %v3799 = vunpack.c.l.s4 1934713408
        %v3800 = vunpack.c.0.s8 %v3799
        %v3801 = vlaneseq
        %v3802 = vshrl.u32 %v3801, 7
        %v3803 = vsub.s32 %v3800, %v3802
        %v3804 = vrot.slane %v3790, %v3803
        %v3805 = vcombine.low %v3773, %v3788
        %v3806 = vcombine.high %v3773, %v3788
        %v3808 = vunpack.c.l.s4 1934713408
        %v3809 = vunpack.c.0.s8 %v3808
        %v3810 = vlaneseq
        %v3811 = vshrl.u32 %v3810, 7
        %v3812 = vsub.s32 %v3809, %v3811
        %v3813 = vrot.slane %v3805, %v3812
        %v3815 = vunpack.c.l.s4 1934713408
        %v3816 = vunpack.c.0.s8 %v3815
        %v3817 = vlaneseq
        %v3818 = vshrl.u32 %v3817, 7
        %v3819 = vsub.s32 %v3816, %v3818
        %v3820 = vrot.slane %v3806, %v3819
        %v3821 = vcombine.high %v3797, 0
        %v3822 = vcombine.high %v3804, 0
        %v3823 = vcombine.high %v3813, 0
        %v3824 = vcombine.high %v3820, 0
        %v3825 = vcombine.high %v3467, %v1300
        %v3827 = vunpack.c.l.s4 1983009808
        %v3828 = vunpack.c.0.s8 %v3827
        %v3829 = vlaneseq
        %v3830 = vshrl.u32 %v3829, 7
        %v3831 = vsub.s32 %v3828, %v3830
        %v3832 = vrot.slane %v3467, %v3831
        %v3834 = vunpack.c.l.s4 1983009808
        %v3835 = vunpack.c.0.s8 %v3834
        %v3836 = vlaneseq
        %v3837 = vshrl.u32 %v3836, 7
        %v3838 = vsub.s32 %v3835, %v3837
        %v3839 = vrot.slane %v3825, %v3838
        %v3840 = vcombine.high %v3475, %v1300
        %v3842 = vunpack.c.l.s4 1983009808
        %v3843 = vunpack.c.0.s8 %v3842
        %v3844 = vlaneseq
        %v3845 = vshrl.u32 %v3844, 7
        %v3846 = vsub.s32 %v3843, %v3845
        %v3847 = vrot.slane %v3475, %v3846
        %v3849 = vunpack.c.l.s4 1983009808
        %v3850 = vunpack.c.0.s8 %v3849
        %v3851 = vlaneseq
        %v3852 = vshrl.u32 %v3851, 7
        %v3853 = vsub.s32 %v3850, %v3852
        %v3854 = vrot.slane %v3840, %v3853
        %v3855 = vcombine.low %v3832, %v3847
        %v3856 = vcombine.high %v3832, %v3847
        %v3858 = vunpack.c.l.s4 1934713408
        %v3859 = vunpack.c.0.s8 %v3858
        %v3860 = vlaneseq
        %v3861 = vshrl.u32 %v3860, 7
        %v3862 = vsub.s32 %v3859, %v3861
        %v3863 = vrot.slane %v3855, %v3862
        %v3865 = vunpack.c.l.s4 1934713408
        %v3866 = vunpack.c.0.s8 %v3865
        %v3867 = vlaneseq
        %v3868 = vshrl.u32 %v3867, 7
        %v3869 = vsub.s32 %v3866, %v3868
        %v3870 = vrot.slane %v3856, %v3869
        %v3871 = vcombine.low %v3839, %v3854
        %v3872 = vcombine.high %v3839, %v3854
        %v3874 = vunpack.c.l.s4 1934713408
        %v3875 = vunpack.c.0.s8 %v3874
        %v3876 = vlaneseq
        %v3877 = vshrl.u32 %v3876, 7
        %v3878 = vsub.s32 %v3875, %v3877
        %v3879 = vrot.slane %v3871, %v3878
        %v3881 = vunpack.c.l.s4 1934713408
        %v3882 = vunpack.c.0.s8 %v3881
        %v3883 = vlaneseq
        %v3884 = vshrl.u32 %v3883, 7
        %v3885 = vsub.s32 %v3882, %v3884
        %v3886 = vrot.slane %v3872, %v3885
        %v3887 = vcombine.high %v3863, 0
        %v3888 = vcombine.high %v3870, 0
        %v3889 = vcombine.high %v3879, 0
        %v3890 = vcombine.high %v3886, 0
        %v3891 = vcombine.high %v3471, %v1303
        %v3893 = vunpack.c.l.s4 1983009808
        %v3894 = vunpack.c.0.s8 %v3893
        %v3895 = vlaneseq
        %v3896 = vshrl.u32 %v3895, 7
        %v3897 = vsub.s32 %v3894, %v3896
        %v3898 = vrot.slane %v3471, %v3897
        %v3900 = vunpack.c.l.s4 1983009808
        %v3901 = vunpack.c.0.s8 %v3900
        %v3902 = vlaneseq
        %v3903 = vshrl.u32 %v3902, 7
        %v3904 = vsub.s32 %v3901, %v3903
        %v3905 = vrot.slane %v3891, %v3904
        %v3906 = vcombine.high %v3479, %v1303
        %v3908 = vunpack.c.l.s4 1983009808
        %v3909 = vunpack.c.0.s8 %v3908
        %v3910 = vlaneseq
        %v3911 = vshrl.u32 %v3910, 7
        %v3912 = vsub.s32 %v3909, %v3911
        %v3913 = vrot.slane %v3479, %v3912
        %v3915 = vunpack.c.l.s4 1983009808
        %v3916 = vunpack.c.0.s8 %v3915
        %v3917 = vlaneseq
        %v3918 = vshrl.u32 %v3917, 7
        %v3919 = vsub.s32 %v3916, %v3918
        %v3920 = vrot.slane %v3906, %v3919
        %v3921 = vcombine.low %v3898, %v3913
        %v3922 = vcombine.high %v3898, %v3913
        %v3924 = vunpack.c.l.s4 1934713408
        %v3925 = vunpack.c.0.s8 %v3924
        %v3926 = vlaneseq
        %v3927 = vshrl.u32 %v3926, 7
        %v3928 = vsub.s32 %v3925, %v3927
        %v3929 = vrot.slane %v3921, %v3928
        %v3931 = vunpack.c.l.s4 1934713408
        %v3932 = vunpack.c.0.s8 %v3931
        %v3933 = vlaneseq
        %v3934 = vshrl.u32 %v3933, 7
        %v3935 = vsub.s32 %v3932, %v3934
        %v3936 = vrot.slane %v3922, %v3935
        %v3937 = vcombine.low %v3905, %v3920
        %v3938 = vcombine.high %v3905, %v3920
        %v3940 = vunpack.c.l.s4 1934713408
        %v3941 = vunpack.c.0.s8 %v3940
        %v3942 = vlaneseq
        %v3943 = vshrl.u32 %v3942, 7
        %v3944 = vsub.s32 %v3941, %v3943
        %v3945 = vrot.slane %v3937, %v3944
        %v3947 = vunpack.c.l.s4 1934713408
        %v3948 = vunpack.c.0.s8 %v3947
        %v3949 = vlaneseq
        %v3950 = vshrl.u32 %v3949, 7
        %v3951 = vsub.s32 %v3948, %v3950
        %v3952 = vrot.slane %v3938, %v3951
        %v3953 = vcombine.high %v3929, 0
        %v3954 = vcombine.high %v3936, 0
        %v3955 = vcombine.high %v3945, 0
        %v3956 = vcombine.high %v3952, 0
        %v3957 = vcombine.high %v3483, %v1300
        %v3959 = vunpack.c.l.s4 1983009808
        %v3960 = vunpack.c.0.s8 %v3959
        %v3961 = vlaneseq
        %v3962 = vshrl.u32 %v3961, 7
        %v3963 = vsub.s32 %v3960, %v3962
        %v3964 = vrot.slane %v3483, %v3963
        %v3966 = vunpack.c.l.s4 1983009808
        %v3967 = vunpack.c.0.s8 %v3966
        %v3968 = vlaneseq
        %v3969 = vshrl.u32 %v3968, 7
        %v3970 = vsub.s32 %v3967, %v3969
        %v3971 = vrot.slane %v3957, %v3970
        %v3972 = vcombine.high %v3491, %v1300
        %v3974 = vunpack.c.l.s4 1983009808
        %v3975 = vunpack.c.0.s8 %v3974
        %v3976 = vlaneseq
        %v3977 = vshrl.u32 %v3976, 7
        %v3978 = vsub.s32 %v3975, %v3977
        %v3979 = vrot.slane %v3491, %v3978
        %v3981 = vunpack.c.l.s4 1983009808
        %v3982 = vunpack.c.0.s8 %v3981
        %v3983 = vlaneseq
        %v3984 = vshrl.u32 %v3983, 7
        %v3985 = vsub.s32 %v3982, %v3984
        %v3986 = vrot.slane %v3972, %v3985
        %v3987 = vcombine.low %v3964, %v3979
        %v3988 = vcombine.high %v3964, %v3979
        %v3990 = vunpack.c.l.s4 1934713408
        %v3991 = vunpack.c.0.s8 %v3990
        %v3992 = vlaneseq
        %v3993 = vshrl.u32 %v3992, 7
        %v3994 = vsub.s32 %v3991, %v3993
        %v3995 = vrot.slane %v3987, %v3994
        %v3997 = vunpack.c.l.s4 1934713408
        %v3998 = vunpack.c.0.s8 %v3997
        %v3999 = vlaneseq
        %v4000 = vshrl.u32 %v3999, 7
        %v4001 = vsub.s32 %v3998, %v4000
        %v4002 = vrot.slane %v3988, %v4001
        %v4003 = vcombine.low %v3971, %v3986
        %v4004 = vcombine.high %v3971, %v3986
        %v4006 = vunpack.c.l.s4 1934713408
        %v4007 = vunpack.c.0.s8 %v4006
        %v4008 = vlaneseq
        %v4009 = vshrl.u32 %v4008, 7
        %v4010 = vsub.s32 %v4007, %v4009
        %v4011 = vrot.slane %v4003, %v4010
        %v4013 = vunpack.c.l.s4 1934713408
        %v4014 = vunpack.c.0.s8 %v4013
        %v4015 = vlaneseq
        %v4016 = vshrl.u32 %v4015, 7
        %v4017 = vsub.s32 %v4014, %v4016
        %v4018 = vrot.slane %v4004, %v4017
        %v4019 = vcombine.high %v3995, 0
        %v4020 = vcombine.high %v4002, 0
        %v4021 = vcombine.high %v4011, 0
        %v4022 = vcombine.high %v4018, 0
        %v4023 = vcombine.high %v3487, %v1303
        %v4025 = vunpack.c.l.s4 1983009808
        %v4026 = vunpack.c.0.s8 %v4025
        %v4027 = vlaneseq
        %v4028 = vshrl.u32 %v4027, 7
        %v4029 = vsub.s32 %v4026, %v4028
        %v4030 = vrot.slane %v3487, %v4029
        %v4032 = vunpack.c.l.s4 1983009808
        %v4033 = vunpack.c.0.s8 %v4032
        %v4034 = vlaneseq
        %v4035 = vshrl.u32 %v4034, 7
        %v4036 = vsub.s32 %v4033, %v4035
        %v4037 = vrot.slane %v4023, %v4036
        %v4038 = vcombine.high %v3495, %v1303
        %v4040 = vunpack.c.l.s4 1983009808
        %v4041 = vunpack.c.0.s8 %v4040
        %v4042 = vlaneseq
        %v4043 = vshrl.u32 %v4042, 7
        %v4044 = vsub.s32 %v4041, %v4043
        %v4045 = vrot.slane %v3495, %v4044
        %v4047 = vunpack.c.l.s4 1983009808
        %v4048 = vunpack.c.0.s8 %v4047
        %v4049 = vlaneseq
        %v4050 = vshrl.u32 %v4049, 7
        %v4051 = vsub.s32 %v4048, %v4050
        %v4052 = vrot.slane %v4038, %v4051
        %v4053 = vcombine.low %v4030, %v4045
        %v4054 = vcombine.high %v4030, %v4045
        %v4056 = vunpack.c.l.s4 1934713408
        %v4057 = vunpack.c.0.s8 %v4056
        %v4058 = vlaneseq
        %v4059 = vshrl.u32 %v4058, 7
        %v4060 = vsub.s32 %v4057, %v4059
        %v4061 = vrot.slane %v4053, %v4060
        %v4063 = vunpack.c.l.s4 1934713408
        %v4064 = vunpack.c.0.s8 %v4063
        %v4065 = vlaneseq
        %v4066 = vshrl.u32 %v4065, 7
        %v4067 = vsub.s32 %v4064, %v4066
        %v4068 = vrot.slane %v4054, %v4067
        %v4069 = vcombine.low %v4037, %v4052
        %v4070 = vcombine.high %v4037, %v4052
        %v4072 = vunpack.c.l.s4 1934713408
        %v4073 = vunpack.c.0.s8 %v4072
        %v4074 = vlaneseq
        %v4075 = vshrl.u32 %v4074, 7
        %v4076 = vsub.s32 %v4073, %v4075
        %v4077 = vrot.slane %v4069, %v4076
        %v4079 = vunpack.c.l.s4 1934713408
        %v4080 = vunpack.c.0.s8 %v4079
        %v4081 = vlaneseq
        %v4082 = vshrl.u32 %v4081, 7
        %v4083 = vsub.s32 %v4080, %v4082
        %v4084 = vrot.slane %v4070, %v4083
        %v4085 = vcombine.high %v4061, 0
        %v4086 = vcombine.high %v4068, 0
        %v4087 = vcombine.high %v4077, 0
        %v4088 = vcombine.high %v4084, 0
        %v4089 = vcombine.high %v3499, %v1300
        %v4091 = vunpack.c.l.s4 1983009808
        %v4092 = vunpack.c.0.s8 %v4091
        %v4093 = vlaneseq
        %v4094 = vshrl.u32 %v4093, 7
        %v4095 = vsub.s32 %v4092, %v4094
        %v4096 = vrot.slane %v3499, %v4095
        %v4098 = vunpack.c.l.s4 1983009808
        %v4099 = vunpack.c.0.s8 %v4098
        %v4100 = vlaneseq
        %v4101 = vshrl.u32 %v4100, 7
        %v4102 = vsub.s32 %v4099, %v4101
        %v4103 = vrot.slane %v4089, %v4102
        %v4104 = vcombine.high %v3507, %v1300
        %v4106 = vunpack.c.l.s4 1983009808
        %v4107 = vunpack.c.0.s8 %v4106
        %v4108 = vlaneseq
        %v4109 = vshrl.u32 %v4108, 7
        %v4110 = vsub.s32 %v4107, %v4109
        %v4111 = vrot.slane %v3507, %v4110
        %v4113 = vunpack.c.l.s4 1983009808
        %v4114 = vunpack.c.0.s8 %v4113
        %v4115 = vlaneseq
        %v4116 = vshrl.u32 %v4115, 7
        %v4117 = vsub.s32 %v4114, %v4116
        %v4118 = vrot.slane %v4104, %v4117
        %v4119 = vcombine.low %v4096, %v4111
        %v4120 = vcombine.high %v4096, %v4111
        %v4122 = vunpack.c.l.s4 1934713408
        %v4123 = vunpack.c.0.s8 %v4122
        %v4124 = vlaneseq
        %v4125 = vshrl.u32 %v4124, 7
        %v4126 = vsub.s32 %v4123, %v4125
        %v4127 = vrot.slane %v4119, %v4126
        %v4129 = vunpack.c.l.s4 1934713408
        %v4130 = vunpack.c.0.s8 %v4129
        %v4131 = vlaneseq
        %v4132 = vshrl.u32 %v4131, 7
        %v4133 = vsub.s32 %v4130, %v4132
        %v4134 = vrot.slane %v4120, %v4133
        %v4135 = vcombine.low %v4103, %v4118
        %v4136 = vcombine.high %v4103, %v4118
        %v4138 = vunpack.c.l.s4 1934713408
        %v4139 = vunpack.c.0.s8 %v4138
        %v4140 = vlaneseq
        %v4141 = vshrl.u32 %v4140, 7
        %v4142 = vsub.s32 %v4139, %v4141
        %v4143 = vrot.slane %v4135, %v4142
        %v4145 = vunpack.c.l.s4 1934713408
        %v4146 = vunpack.c.0.s8 %v4145
        %v4147 = vlaneseq
        %v4148 = vshrl.u32 %v4147, 7
        %v4149 = vsub.s32 %v4146, %v4148
        %v4150 = vrot.slane %v4136, %v4149
        %v4151 = vcombine.high %v4127, 0
        %v4152 = vcombine.high %v4134, 0
        %v4153 = vcombine.high %v4143, 0
        %v4154 = vcombine.high %v4150, 0
        %v4155 = vcombine.high %v3503, %v1303
        %v4157 = vunpack.c.l.s4 1983009808
        %v4158 = vunpack.c.0.s8 %v4157
        %v4159 = vlaneseq
        %v4160 = vshrl.u32 %v4159, 7
        %v4161 = vsub.s32 %v4158, %v4160
        %v4162 = vrot.slane %v3503, %v4161
        %v4164 = vunpack.c.l.s4 1983009808
        %v4165 = vunpack.c.0.s8 %v4164
        %v4166 = vlaneseq
        %v4167 = vshrl.u32 %v4166, 7
        %v4168 = vsub.s32 %v4165, %v4167
        %v4169 = vrot.slane %v4155, %v4168
        %v4170 = vcombine.high %v3511, %v1303
        %v4172 = vunpack.c.l.s4 1983009808
        %v4173 = vunpack.c.0.s8 %v4172
        %v4174 = vlaneseq
        %v4175 = vshrl.u32 %v4174, 7
        %v4176 = vsub.s32 %v4173, %v4175
        %v4177 = vrot.slane %v3511, %v4176
        %v4179 = vunpack.c.l.s4 1983009808
        %v4180 = vunpack.c.0.s8 %v4179
        %v4181 = vlaneseq
        %v4182 = vshrl.u32 %v4181, 7
        %v4183 = vsub.s32 %v4180, %v4182
        %v4184 = vrot.slane %v4170, %v4183
        %v4185 = vcombine.low %v4162, %v4177
        %v4186 = vcombine.high %v4162, %v4177
        %v4188 = vunpack.c.l.s4 1934713408
        %v4189 = vunpack.c.0.s8 %v4188
        %v4190 = vlaneseq
        %v4191 = vshrl.u32 %v4190, 7
        %v4192 = vsub.s32 %v4189, %v4191
        %v4193 = vrot.slane %v4185, %v4192
        %v4195 = vunpack.c.l.s4 1934713408
        %v4196 = vunpack.c.0.s8 %v4195
        %v4197 = vlaneseq
        %v4198 = vshrl.u32 %v4197, 7
        %v4199 = vsub.s32 %v4196, %v4198
        %v4200 = vrot.slane %v4186, %v4199
        %v4201 = vcombine.low %v4169, %v4184
        %v4202 = vcombine.high %v4169, %v4184
        %v4204 = vunpack.c.l.s4 1934713408
        %v4205 = vunpack.c.0.s8 %v4204
        %v4206 = vlaneseq
        %v4207 = vshrl.u32 %v4206, 7
        %v4208 = vsub.s32 %v4205, %v4207
        %v4209 = vrot.slane %v4201, %v4208
        %v4211 = vunpack.c.l.s4 1934713408
        %v4212 = vunpack.c.0.s8 %v4211
        %v4213 = vlaneseq
        %v4214 = vshrl.u32 %v4213, 7
        %v4215 = vsub.s32 %v4212, %v4214
        %v4216 = vrot.slane %v4202, %v4215
        %v4217 = vcombine.high %v4193, 0
        %v4218 = vcombine.high %v4200, 0
        %v4219 = vcombine.high %v4209, 0
        %v4220 = vcombine.high %v4216, 0
        %v4221 = vcombine.high %v3515, %v1300
        %v4223 = vunpack.c.l.s4 1983009808
        %v4224 = vunpack.c.0.s8 %v4223
        %v4225 = vlaneseq
        %v4226 = vshrl.u32 %v4225, 7
        %v4227 = vsub.s32 %v4224, %v4226
        %v4228 = vrot.slane %v3515, %v4227
        %v4230 = vunpack.c.l.s4 1983009808
        %v4231 = vunpack.c.0.s8 %v4230
        %v4232 = vlaneseq
        %v4233 = vshrl.u32 %v4232, 7
        %v4234 = vsub.s32 %v4231, %v4233
        %v4235 = vrot.slane %v4221, %v4234
        %v4236 = vcombine.high %v3523, %v1300
        %v4238 = vunpack.c.l.s4 1983009808
        %v4239 = vunpack.c.0.s8 %v4238
        %v4240 = vlaneseq
        %v4241 = vshrl.u32 %v4240, 7
        %v4242 = vsub.s32 %v4239, %v4241
        %v4243 = vrot.slane %v3523, %v4242
        %v4245 = vunpack.c.l.s4 1983009808
        %v4246 = vunpack.c.0.s8 %v4245
        %v4247 = vlaneseq
        %v4248 = vshrl.u32 %v4247, 7
        %v4249 = vsub.s32 %v4246, %v4248
        %v4250 = vrot.slane %v4236, %v4249
        %v4251 = vcombine.low %v4228, %v4243
        %v4252 = vcombine.high %v4228, %v4243
        %v4254 = vunpack.c.l.s4 1934713408
        %v4255 = vunpack.c.0.s8 %v4254
        %v4256 = vlaneseq
        %v4257 = vshrl.u32 %v4256, 7
        %v4258 = vsub.s32 %v4255, %v4257
        %v4259 = vrot.slane %v4251, %v4258
        %v4261 = vunpack.c.l.s4 1934713408
        %v4262 = vunpack.c.0.s8 %v4261
        %v4263 = vlaneseq
        %v4264 = vshrl.u32 %v4263, 7
        %v4265 = vsub.s32 %v4262, %v4264
        %v4266 = vrot.slane %v4252, %v4265
        %v4267 = vcombine.low %v4235, %v4250
        %v4268 = vcombine.high %v4235, %v4250
        %v4270 = vunpack.c.l.s4 1934713408
        %v4271 = vunpack.c.0.s8 %v4270
        %v4272 = vlaneseq
        %v4273 = vshrl.u32 %v4272, 7
        %v4274 = vsub.s32 %v4271, %v4273
        %v4275 = vrot.slane %v4267, %v4274
        %v4277 = vunpack.c.l.s4 1934713408
        %v4278 = vunpack.c.0.s8 %v4277
        %v4279 = vlaneseq
        %v4280 = vshrl.u32 %v4279, 7
        %v4281 = vsub.s32 %v4278, %v4280
        %v4282 = vrot.slane %v4268, %v4281
        %v4283 = vcombine.high %v4259, 0
        %v4284 = vcombine.high %v4266, 0
        %v4285 = vcombine.high %v4275, 0
        %v4286 = vcombine.high %v4282, 0
        %v4287 = vcombine.high %v3519, %v1303
        %v4289 = vunpack.c.l.s4 1983009808
        %v4290 = vunpack.c.0.s8 %v4289
        %v4291 = vlaneseq
        %v4292 = vshrl.u32 %v4291, 7
        %v4293 = vsub.s32 %v4290, %v4292
        %v4294 = vrot.slane %v3519, %v4293
        %v4296 = vunpack.c.l.s4 1983009808
        %v4297 = vunpack.c.0.s8 %v4296
        %v4298 = vlaneseq
        %v4299 = vshrl.u32 %v4298, 7
        %v4300 = vsub.s32 %v4297, %v4299
        %v4301 = vrot.slane %v4287, %v4300
        %v4302 = vcombine.high %v3527, %v1303
        %v4304 = vunpack.c.l.s4 1983009808
        %v4305 = vunpack.c.0.s8 %v4304
        %v4306 = vlaneseq
        %v4307 = vshrl.u32 %v4306, 7
        %v4308 = vsub.s32 %v4305, %v4307
        %v4309 = vrot.slane %v3527, %v4308
        %v4311 = vunpack.c.l.s4 1983009808
        %v4312 = vunpack.c.0.s8 %v4311
        %v4313 = vlaneseq
        %v4314 = vshrl.u32 %v4313, 7
        %v4315 = vsub.s32 %v4312, %v4314
        %v4316 = vrot.slane %v4302, %v4315
        %v4317 = vcombine.low %v4294, %v4309
        %v4318 = vcombine.high %v4294, %v4309
        %v4320 = vunpack.c.l.s4 1934713408
        %v4321 = vunpack.c.0.s8 %v4320
        %v4322 = vlaneseq
        %v4323 = vshrl.u32 %v4322, 7
        %v4324 = vsub.s32 %v4321, %v4323
        %v4325 = vrot.slane %v4317, %v4324
        %v4327 = vunpack.c.l.s4 1934713408
        %v4328 = vunpack.c.0.s8 %v4327
        %v4329 = vlaneseq
        %v4330 = vshrl.u32 %v4329, 7
        %v4331 = vsub.s32 %v4328, %v4330
        %v4332 = vrot.slane %v4318, %v4331
        %v4333 = vcombine.low %v4301, %v4316
        %v4334 = vcombine.high %v4301, %v4316
        %v4336 = vunpack.c.l.s4 1934713408
        %v4337 = vunpack.c.0.s8 %v4336
        %v4338 = vlaneseq
        %v4339 = vshrl.u32 %v4338, 7
        %v4340 = vsub.s32 %v4337, %v4339
        %v4341 = vrot.slane %v4333, %v4340
        %v4343 = vunpack.c.l.s4 1934713408
        %v4344 = vunpack.c.0.s8 %v4343
        %v4345 = vlaneseq
        %v4346 = vshrl.u32 %v4345, 7
        %v4347 = vsub.s32 %v4344, %v4346
        %v4348 = vrot.slane %v4334, %v4347
        %v4349 = vcombine.high %v4325, 0
        %v4350 = vcombine.high %v4332, 0
        %v4351 = vcombine.high %v4341, 0
        %v4352 = vcombine.high %v4348, 0
        %v4353 = vcombine.high %v3531, %v1300
        %v4355 = vunpack.c.l.s4 1983009808
        %v4356 = vunpack.c.0.s8 %v4355
        %v4357 = vlaneseq
        %v4358 = vshrl.u32 %v4357, 7
        %v4359 = vsub.s32 %v4356, %v4358
        %v4360 = vrot.slane %v3531, %v4359
        %v4362 = vunpack.c.l.s4 1983009808
        %v4363 = vunpack.c.0.s8 %v4362
        %v4364 = vlaneseq
        %v4365 = vshrl.u32 %v4364, 7
        %v4366 = vsub.s32 %v4363, %v4365
        %v4367 = vrot.slane %v4353, %v4366
        %v4368 = vcombine.high %v3539, %v1300
        %v4370 = vunpack.c.l.s4 1983009808
        %v4371 = vunpack.c.0.s8 %v4370
        %v4372 = vlaneseq
        %v4373 = vshrl.u32 %v4372, 7
        %v4374 = vsub.s32 %v4371, %v4373
        %v4375 = vrot.slane %v3539, %v4374
        %v4377 = vunpack.c.l.s4 1983009808
        %v4378 = vunpack.c.0.s8 %v4377
        %v4379 = vlaneseq
        %v4380 = vshrl.u32 %v4379, 7
        %v4381 = vsub.s32 %v4378, %v4380
        %v4382 = vrot.slane %v4368, %v4381
        %v4383 = vcombine.low %v4360, %v4375
        %v4384 = vcombine.high %v4360, %v4375
        %v4386 = vunpack.c.l.s4 1934713408
        %v4387 = vunpack.c.0.s8 %v4386
        %v4388 = vlaneseq
        %v4389 = vshrl.u32 %v4388, 7
        %v4390 = vsub.s32 %v4387, %v4389
        %v4391 = vrot.slane %v4383, %v4390
        %v4393 = vunpack.c.l.s4 1934713408
        %v4394 = vunpack.c.0.s8 %v4393
        %v4395 = vlaneseq
        %v4396 = vshrl.u32 %v4395, 7
        %v4397 = vsub.s32 %v4394, %v4396
        %v4398 = vrot.slane %v4384, %v4397
        %v4399 = vcombine.low %v4367, %v4382
        %v4400 = vcombine.high %v4367, %v4382
        %v4402 = vunpack.c.l.s4 1934713408
        %v4403 = vunpack.c.0.s8 %v4402
        %v4404 = vlaneseq
        %v4405 = vshrl.u32 %v4404, 7
        %v4406 = vsub.s32 %v4403, %v4405
        %v4407 = vrot.slane %v4399, %v4406
        %v4409 = vunpack.c.l.s4 1934713408
        %v4410 = vunpack.c.0.s8 %v4409
        %v4411 = vlaneseq
        %v4412 = vshrl.u32 %v4411, 7
        %v4413 = vsub.s32 %v4410, %v4412
        %v4414 = vrot.slane %v4400, %v4413
        %v4415 = vcombine.high %v4391, 0
        %v4416 = vcombine.high %v4398, 0
        %v4417 = vcombine.high %v4407, 0
        %v4418 = vcombine.high %v4414, 0
        %v4419 = vcombine.high %v3535, %v1303
        %v4421 = vunpack.c.l.s4 1983009808
        %v4422 = vunpack.c.0.s8 %v4421
        %v4423 = vlaneseq
        %v4424 = vshrl.u32 %v4423, 7
        %v4425 = vsub.s32 %v4422, %v4424
        %v4426 = vrot.slane %v3535, %v4425
        %v4428 = vunpack.c.l.s4 1983009808
        %v4429 = vunpack.c.0.s8 %v4428
        %v4430 = vlaneseq
        %v4431 = vshrl.u32 %v4430, 7
        %v4432 = vsub.s32 %v4429, %v4431
        %v4433 = vrot.slane %v4419, %v4432
        %v4434 = vcombine.high %v3543, %v1303
        %v4436 = vunpack.c.l.s4 1983009808
        %v4437 = vunpack.c.0.s8 %v4436
        %v4438 = vlaneseq
        %v4439 = vshrl.u32 %v4438, 7
        %v4440 = vsub.s32 %v4437, %v4439
        %v4441 = vrot.slane %v3543, %v4440
        %v4443 = vunpack.c.l.s4 1983009808
        %v4444 = vunpack.c.0.s8 %v4443
        %v4445 = vlaneseq
        %v4446 = vshrl.u32 %v4445, 7
        %v4447 = vsub.s32 %v4444, %v4446
        %v4448 = vrot.slane %v4434, %v4447
        %v4449 = vcombine.low %v4426, %v4441
        %v4450 = vcombine.high %v4426, %v4441
        %v4452 = vunpack.c.l.s4 1934713408
        %v4453 = vunpack.c.0.s8 %v4452
        %v4454 = vlaneseq
        %v4455 = vshrl.u32 %v4454, 7
        %v4456 = vsub.s32 %v4453, %v4455
        %v4457 = vrot.slane %v4449, %v4456
        %v4459 = vunpack.c.l.s4 1934713408
        %v4460 = vunpack.c.0.s8 %v4459
        %v4461 = vlaneseq
        %v4462 = vshrl.u32 %v4461, 7
        %v4463 = vsub.s32 %v4460, %v4462
        %v4464 = vrot.slane %v4450, %v4463
        %v4465 = vcombine.low %v4433, %v4448
        %v4466 = vcombine.high %v4433, %v4448
        %v4468 = vunpack.c.l.s4 1934713408
        %v4469 = vunpack.c.0.s8 %v4468
        %v4470 = vlaneseq
        %v4471 = vshrl.u32 %v4470, 7
        %v4472 = vsub.s32 %v4469, %v4471
        %v4473 = vrot.slane %v4465, %v4472
        %v4475 = vunpack.c.l.s4 1934713408
        %v4476 = vunpack.c.0.s8 %v4475
        %v4477 = vlaneseq
        %v4478 = vshrl.u32 %v4477, 7
        %v4479 = vsub.s32 %v4476, %v4478
        %v4480 = vrot.slane %v4466, %v4479
        %v4481 = vcombine.high %v4457, 0
        %v4482 = vcombine.high %v4464, 0
        %v4483 = vcombine.high %v4473, 0
        %v4484 = vcombine.high %v4480, 0
        %v4485 = vcombine.high %v3547, %v1300
        %v4487 = vunpack.c.l.s4 1983009808
        %v4488 = vunpack.c.0.s8 %v4487
        %v4489 = vlaneseq
        %v4490 = vshrl.u32 %v4489, 7
        %v4491 = vsub.s32 %v4488, %v4490
        %v4492 = vrot.slane %v3547, %v4491
        %v4494 = vunpack.c.l.s4 1983009808
        %v4495 = vunpack.c.0.s8 %v4494
        %v4496 = vlaneseq
        %v4497 = vshrl.u32 %v4496, 7
        %v4498 = vsub.s32 %v4495, %v4497
        %v4499 = vrot.slane %v4485, %v4498
        %v4500 = vcombine.high %v3555, %v1300
        %v4502 = vunpack.c.l.s4 1983009808
        %v4503 = vunpack.c.0.s8 %v4502
        %v4504 = vlaneseq
        %v4505 = vshrl.u32 %v4504, 7
        %v4506 = vsub.s32 %v4503, %v4505
        %v4507 = vrot.slane %v3555, %v4506
        %v4509 = vunpack.c.l.s4 1983009808
        %v4510 = vunpack.c.0.s8 %v4509
        %v4511 = vlaneseq
        %v4512 = vshrl.u32 %v4511, 7
        %v4513 = vsub.s32 %v4510, %v4512
        %v4514 = vrot.slane %v4500, %v4513
        %v4515 = vcombine.low %v4492, %v4507
        %v4516 = vcombine.high %v4492, %v4507
        %v4518 = vunpack.c.l.s4 1934713408
        %v4519 = vunpack.c.0.s8 %v4518
        %v4520 = vlaneseq
        %v4521 = vshrl.u32 %v4520, 7
        %v4522 = vsub.s32 %v4519, %v4521
        %v4523 = vrot.slane %v4515, %v4522
        %v4525 = vunpack.c.l.s4 1934713408
        %v4526 = vunpack.c.0.s8 %v4525
        %v4527 = vlaneseq
        %v4528 = vshrl.u32 %v4527, 7
        %v4529 = vsub.s32 %v4526, %v4528
        %v4530 = vrot.slane %v4516, %v4529
        %v4531 = vcombine.low %v4499, %v4514
        %v4532 = vcombine.high %v4499, %v4514
        %v4534 = vunpack.c.l.s4 1934713408
        %v4535 = vunpack.c.0.s8 %v4534
        %v4536 = vlaneseq
        %v4537 = vshrl.u32 %v4536, 7
        %v4538 = vsub.s32 %v4535, %v4537
        %v4539 = vrot.slane %v4531, %v4538
        %v4541 = vunpack.c.l.s4 1934713408
        %v4542 = vunpack.c.0.s8 %v4541
        %v4543 = vlaneseq
        %v4544 = vshrl.u32 %v4543, 7
        %v4545 = vsub.s32 %v4542, %v4544
        %v4546 = vrot.slane %v4532, %v4545
        %v4547 = vcombine.high %v4523, 0
        %v4548 = vcombine.high %v4530, 0
        %v4549 = vcombine.high %v4539, 0
        %v4550 = vcombine.high %v4546, 0
        %v4551 = vcombine.high %v3551, %v1303
        %v4553 = vunpack.c.l.s4 1983009808
        %v4554 = vunpack.c.0.s8 %v4553
        %v4555 = vlaneseq
        %v4556 = vshrl.u32 %v4555, 7
        %v4557 = vsub.s32 %v4554, %v4556
        %v4558 = vrot.slane %v3551, %v4557
        %v4560 = vunpack.c.l.s4 1983009808
        %v4561 = vunpack.c.0.s8 %v4560
        %v4562 = vlaneseq
        %v4563 = vshrl.u32 %v4562, 7
        %v4564 = vsub.s32 %v4561, %v4563
        %v4565 = vrot.slane %v4551, %v4564
        %v4566 = vcombine.high %v3559, %v1303
        %v4568 = vunpack.c.l.s4 1983009808
        %v4569 = vunpack.c.0.s8 %v4568
        %v4570 = vlaneseq
        %v4571 = vshrl.u32 %v4570, 7
        %v4572 = vsub.s32 %v4569, %v4571
        %v4573 = vrot.slane %v3559, %v4572
        %v4575 = vunpack.c.l.s4 1983009808
        %v4576 = vunpack.c.0.s8 %v4575
        %v4577 = vlaneseq
        %v4578 = vshrl.u32 %v4577, 7
        %v4579 = vsub.s32 %v4576, %v4578
        %v4580 = vrot.slane %v4566, %v4579
        %v4581 = vcombine.low %v4558, %v4573
        %v4582 = vcombine.high %v4558, %v4573
        %v4584 = vunpack.c.l.s4 1934713408
        %v4585 = vunpack.c.0.s8 %v4584
        %v4586 = vlaneseq
        %v4587 = vshrl.u32 %v4586, 7
        %v4588 = vsub.s32 %v4585, %v4587
        %v4589 = vrot.slane %v4581, %v4588
        %v4591 = vunpack.c.l.s4 1934713408
        %v4592 = vunpack.c.0.s8 %v4591
        %v4593 = vlaneseq
        %v4594 = vshrl.u32 %v4593, 7
        %v4595 = vsub.s32 %v4592, %v4594
        %v4596 = vrot.slane %v4582, %v4595
        %v4597 = vcombine.low %v4565, %v4580
        %v4598 = vcombine.high %v4565, %v4580
        %v4600 = vunpack.c.l.s4 1934713408
        %v4601 = vunpack.c.0.s8 %v4600
        %v4602 = vlaneseq
        %v4603 = vshrl.u32 %v4602, 7
        %v4604 = vsub.s32 %v4601, %v4603
        %v4605 = vrot.slane %v4597, %v4604
        %v4607 = vunpack.c.l.s4 1934713408
        %v4608 = vunpack.c.0.s8 %v4607
        %v4609 = vlaneseq
        %v4610 = vshrl.u32 %v4609, 7
        %v4611 = vsub.s32 %v4608, %v4610
        %v4612 = vrot.slane %v4598, %v4611
        %v4613 = vcombine.high %v4589, 0
        %v4614 = vcombine.high %v4596, 0
        %v4615 = vcombine.high %v4605, 0
        %v4616 = vcombine.high %v4612, 0
        %v4617 = vcombine.low %v3599, %v3606
        %v4619 = vunpack.c.l.s4 1983009808
        %v4620 = vunpack.c.0.s8 %v4619
        %v4621 = vlaneseq
        %v4622 = vshrl.u32 %v4621, 7
        %v4623 = vsub.s32 %v4620, %v4622
        %v4624 = vrot.slane %v4617, %v4623
        %v4625 = vcombine.low %v3623, %v3624
        %v4627 = vunpack.c.l.s4 1983009808
        %v4628 = vunpack.c.0.s8 %v4627
        %v4629 = vlaneseq
        %v4630 = vshrl.u32 %v4629, 7
        %v4631 = vsub.s32 %v4628, %v4630
        %v4632 = vrot.slane %v4625, %v4631
        %v4633 = vcombine.low %v3615, %v3622
        %v4635 = vunpack.c.l.s4 1983009808
        %v4636 = vunpack.c.0.s8 %v4635
        %v4637 = vlaneseq
        %v4638 = vshrl.u32 %v4637, 7
        %v4639 = vsub.s32 %v4636, %v4638
        %v4640 = vrot.slane %v4633, %v4639
        %v4641 = vcombine.low %v3625, %v3626
        %v4643 = vunpack.c.l.s4 1983009808
        %v4644 = vunpack.c.0.s8 %v4643
        %v4645 = vlaneseq
        %v4646 = vshrl.u32 %v4645, 7
        %v4647 = vsub.s32 %v4644, %v4646
        %v4648 = vrot.slane %v4641, %v4647
        %v4649 = vcombine.low %v4624, %v4632
        %v4651 = vunpack.c.l.s4 1934713408
        %v4652 = vunpack.c.0.s8 %v4651
        %v4653 = vlaneseq
        %v4654 = vshrl.u32 %v4653, 7
        %v4655 = vsub.s32 %v4652, %v4654
        %v4656 = vrot.slane %v4649, %v4655
        %v4657 = vcombine.low %v4640, %v4648
        %v4659 = vunpack.c.l.s4 1934713408
        %v4660 = vunpack.c.0.s8 %v4659
        %v4661 = vlaneseq
        %v4662 = vshrl.u32 %v4661, 7
        %v4663 = vsub.s32 %v4660, %v4662
        %v4664 = vrot.slane %v4657, %v4663
        %v4665 = vcombine.low %v4656, %v4664
        %v4666 = vcombine.high %v4656, %v4664
        %v4667 = vcombine.low %v3665, %v3672
        %v4669 = vunpack.c.l.s4 1983009808
        %v4670 = vunpack.c.0.s8 %v4669
        %v4671 = vlaneseq
        %v4672 = vshrl.u32 %v4671, 7
        %v4673 = vsub.s32 %v4670, %v4672
        %v4674 = vrot.slane %v4667, %v4673
        %v4675 = vcombine.low %v3689, %v3690
        %v4677 = vunpack.c.l.s4 1983009808
        %v4678 = vunpack.c.0.s8 %v4677
        %v4679 = vlaneseq
        %v4680 = vshrl.u32 %v4679, 7
        %v4681 = vsub.s32 %v4678, %v4680
        %v4682 = vrot.slane %v4675, %v4681
        %v4683 = vcombine.low %v3681, %v3688
        %v4685 = vunpack.c.l.s4 1983009808
        %v4686 = vunpack.c.0.s8 %v4685
        %v4687 = vlaneseq
        %v4688 = vshrl.u32 %v4687, 7
        %v4689 = vsub.s32 %v4686, %v4688
        %v4690 = vrot.slane %v4683, %v4689
        %v4691 = vcombine.low %v3691, %v3692
        %v4693 = vunpack.c.l.s4 1983009808
        %v4694 = vunpack.c.0.s8 %v4693
        %v4695 = vlaneseq
        %v4696 = vshrl.u32 %v4695, 7
        %v4697 = vsub.s32 %v4694, %v4696
        %v4698 = vrot.slane %v4691, %v4697
        %v4699 = vcombine.low %v4674, %v4682
        %v4701 = vunpack.c.l.s4 1934713408
        %v4702 = vunpack.c.0.s8 %v4701
        %v4703 = vlaneseq
        %v4704 = vshrl.u32 %v4703, 7
        %v4705 = vsub.s32 %v4702, %v4704
        %v4706 = vrot.slane %v4699, %v4705
        %v4707 = vcombine.low %v4690, %v4698
        %v4709 = vunpack.c.l.s4 1934713408
        %v4710 = vunpack.c.0.s8 %v4709
        %v4711 = vlaneseq
        %v4712 = vshrl.u32 %v4711, 7
        %v4713 = vsub.s32 %v4710, %v4712
        %v4714 = vrot.slane %v4707, %v4713
        %v4715 = vcombine.low %v4706, %v4714
        %v4716 = vcombine.high %v4706, %v4714
        %v4717 = vcombine.low %v3731, %v3738
        %v4719 = vunpack.c.l.s4 1983009808
        %v4720 = vunpack.c.0.s8 %v4719
        %v4721 = vlaneseq
        %v4722 = vshrl.u32 %v4721, 7
        %v4723 = vsub.s32 %v4720, %v4722
        %v4724 = vrot.slane %v4717, %v4723
        %v4725 = vcombine.low %v3755, %v3756
        %v4727 = vunpack.c.l.s4 1983009808
        %v4728 = vunpack.c.0.s8 %v4727
        %v4729 = vlaneseq
        %v4730 = vshrl.u32 %v4729, 7
        %v4731 = vsub.s32 %v4728, %v4730
        %v4732 = vrot.slane %v4725, %v4731
        %v4733 = vcombine.low %v3747, %v3754
        %v4735 = vunpack.c.l.s4 1983009808
        %v4736 = vunpack.c.0.s8 %v4735
        %v4737 = vlaneseq
        %v4738 = vshrl.u32 %v4737, 7
        %v4739 = vsub.s32 %v4736, %v4738
        %v4740 = vrot.slane %v4733, %v4739
        %v4741 = vcombine.low %v3757, %v3758
        %v4743 = vunpack.c.l.s4 1983009808
        %v4744 = vunpack.c.0.s8 %v4743
        %v4745 = vlaneseq
        %v4746 = vshrl.u32 %v4745, 7
        %v4747 = vsub.s32 %v4744, %v4746
        %v4748 = vrot.slane %v4741, %v4747
        %v4749 = vcombine.low %v4724, %v4732
        %v4751 = vunpack.c.l.s4 1934713408
        %v4752 = vunpack.c.0.s8 %v4751
        %v4753 = vlaneseq
        %v4754 = vshrl.u32 %v4753, 7
        %v4755 = vsub.s32 %v4752, %v4754
        %v4756 = vrot.slane %v4749, %v4755
        %v4757 = vcombine.low %v4740, %v4748
        %v4759 = vunpack.c.l.s4 1934713408
        %v4760 = vunpack.c.0.s8 %v4759
        %v4761 = vlaneseq
        %v4762 = vshrl.u32 %v4761, 7
        %v4763 = vsub.s32 %v4760, %v4762
        %v4764 = vrot.slane %v4757, %v4763
        %v4765 = vcombine.low %v4756, %v4764
        %v4766 = vcombine.high %v4756, %v4764
        %v4767 = vcombine.low %v3797, %v3804
        %v4769 = vunpack.c.l.s4 1983009808
        %v4770 = vunpack.c.0.s8 %v4769
        %v4771 = vlaneseq
        %v4772 = vshrl.u32 %v4771, 7
        %v4773 = vsub.s32 %v4770, %v4772
        %v4774 = vrot.slane %v4767, %v4773
        %v4775 = vcombine.low %v3821, %v3822
        %v4777 = vunpack.c.l.s4 1983009808
        %v4778 = vunpack.c.0.s8 %v4777
        %v4779 = vlaneseq
        %v4780 = vshrl.u32 %v4779, 7
        %v4781 = vsub.s32 %v4778, %v4780
        %v4782 = vrot.slane %v4775, %v4781
        %v4783 = vcombine.low %v3813, %v3820
        %v4785 = vunpack.c.l.s4 1983009808
        %v4786 = vunpack.c.0.s8 %v4785
        %v4787 = vlaneseq
        %v4788 = vshrl.u32 %v4787, 7
        %v4789 = vsub.s32 %v4786, %v4788
        %v4790 = vrot.slane %v4783, %v4789
        %v4791 = vcombine.low %v3823, %v3824
        %v4793 = vunpack.c.l.s4 1983009808
        %v4794 = vunpack.c.0.s8 %v4793
        %v4795 = vlaneseq
        %v4796 = vshrl.u32 %v4795, 7
        %v4797 = vsub.s32 %v4794, %v4796
        %v4798 = vrot.slane %v4791, %v4797
        %v4799 = vcombine.low %v4774, %v4782
        %v4801 = vunpack.c.l.s4 1934713408
        %v4802 = vunpack.c.0.s8 %v4801
        %v4803 = vlaneseq
        %v4804 = vshrl.u32 %v4803, 7
        %v4805 = vsub.s32 %v4802, %v4804
        %v4806 = vrot.slane %v4799, %v4805
        %v4807 = vcombine.low %v4790, %v4798
        %v4809 = vunpack.c.l.s4 1934713408
        %v4810 = vunpack.c.0.s8 %v4809
        %v4811 = vlaneseq
        %v4812 = vshrl.u32 %v4811, 7
        %v4813 = vsub.s32 %v4810, %v4812
        %v4814 = vrot.slane %v4807, %v4813
        %v4815 = vcombine.low %v4806, %v4814
        %v4816 = vcombine.high %v4806, %v4814
        %v4817 = vcombine.low %v3863, %v3870
        %v4819 = vunpack.c.l.s4 1983009808
        %v4820 = vunpack.c.0.s8 %v4819
        %v4821 = vlaneseq
        %v4822 = vshrl.u32 %v4821, 7
        %v4823 = vsub.s32 %v4820, %v4822
        %v4824 = vrot.slane %v4817, %v4823
        %v4825 = vcombine.low %v3887, %v3888
        %v4827 = vunpack.c.l.s4 1983009808
        %v4828 = vunpack.c.0.s8 %v4827
        %v4829 = vlaneseq
        %v4830 = vshrl.u32 %v4829, 7
        %v4831 = vsub.s32 %v4828, %v4830
        %v4832 = vrot.slane %v4825, %v4831
        %v4833 = vcombine.low %v3879, %v3886
        %v4835 = vunpack.c.l.s4 1983009808
        %v4836 = vunpack.c.0.s8 %v4835
        %v4837 = vlaneseq
        %v4838 = vshrl.u32 %v4837, 7
        %v4839 = vsub.s32 %v4836, %v4838
        %v4840 = vrot.slane %v4833, %v4839
        %v4841 = vcombine.low %v3889, %v3890
        %v4843 = vunpack.c.l.s4 1983009808
        %v4844 = vunpack.c.0.s8 %v4843
        %v4845 = vlaneseq
        %v4846 = vshrl.u32 %v4845, 7
        %v4847 = vsub.s32 %v4844, %v4846
        %v4848 = vrot.slane %v4841, %v4847
        %v4849 = vcombine.low %v4824, %v4832
        %v4851 = vunpack.c.l.s4 1934713408
        %v4852 = vunpack.c.0.s8 %v4851
        %v4853 = vlaneseq
        %v4854 = vshrl.u32 %v4853, 7
        %v4855 = vsub.s32 %v4852, %v4854
        %v4856 = vrot.slane %v4849, %v4855
        %v4857 = vcombine.low %v4840, %v4848
        %v4859 = vunpack.c.l.s4 1934713408
        %v4860 = vunpack.c.0.s8 %v4859
        %v4861 = vlaneseq
        %v4862 = vshrl.u32 %v4861, 7
        %v4863 = vsub.s32 %v4860, %v4862
        %v4864 = vrot.slane %v4857, %v4863
        %v4865 = vcombine.low %v4856, %v4864
        %v4866 = vcombine.high %v4856, %v4864
        %v4867 = vcombine.low %v3929, %v3936
        %v4869 = vunpack.c.l.s4 1983009808
        %v4870 = vunpack.c.0.s8 %v4869
        %v4871 = vlaneseq
        %v4872 = vshrl.u32 %v4871, 7
        %v4873 = vsub.s32 %v4870, %v4872
        %v4874 = vrot.slane %v4867, %v4873
        %v4875 = vcombine.low %v3953, %v3954
        %v4877 = vunpack.c.l.s4 1983009808
        %v4878 = vunpack.c.0.s8 %v4877
        %v4879 = vlaneseq
        %v4880 = vshrl.u32 %v4879, 7
        %v4881 = vsub.s32 %v4878, %v4880
        %v4882 = vrot.slane %v4875, %v4881
        %v4883 = vcombine.low %v3945, %v3952
        %v4885 = vunpack.c.l.s4 1983009808
        %v4886 = vunpack.c.0.s8 %v4885
        %v4887 = vlaneseq
        %v4888 = vshrl.u32 %v4887, 7
        %v4889 = vsub.s32 %v4886, %v4888
        %v4890 = vrot.slane %v4883, %v4889
        %v4891 = vcombine.low %v3955, %v3956
        %v4893 = vunpack.c.l.s4 1983009808
        %v4894 = vunpack.c.0.s8 %v4893
        %v4895 = vlaneseq
        %v4896 = vshrl.u32 %v4895, 7
        %v4897 = vsub.s32 %v4894, %v4896
        %v4898 = vrot.slane %v4891, %v4897
        %v4899 = vcombine.low %v4874, %v4882
        %v4901 = vunpack.c.l.s4 1934713408
        %v4902 = vunpack.c.0.s8 %v4901
        %v4903 = vlaneseq
        %v4904 = vshrl.u32 %v4903, 7
        %v4905 = vsub.s32 %v4902, %v4904
        %v4906 = vrot.slane %v4899, %v4905
        %v4907 = vcombine.low %v4890, %v4898
        %v4909 = vunpack.c.l.s4 1934713408
        %v4910 = vunpack.c.0.s8 %v4909
        %v4911 = vlaneseq
        %v4912 = vshrl.u32 %v4911, 7
        %v4913 = vsub.s32 %v4910, %v4912
        %v4914 = vrot.slane %v4907, %v4913
        %v4915 = vcombine.low %v4906, %v4914
        %v4916 = vcombine.high %v4906, %v4914
        %v4917 = vcombine.low %v3995, %v4002
        %v4919 = vunpack.c.l.s4 1983009808
        %v4920 = vunpack.c.0.s8 %v4919
        %v4921 = vlaneseq
        %v4922 = vshrl.u32 %v4921, 7
        %v4923 = vsub.s32 %v4920, %v4922
        %v4924 = vrot.slane %v4917, %v4923
        %v4925 = vcombine.low %v4019, %v4020
        %v4927 = vunpack.c.l.s4 1983009808
        %v4928 = vunpack.c.0.s8 %v4927
        %v4929 = vlaneseq
        %v4930 = vshrl.u32 %v4929, 7
        %v4931 = vsub.s32 %v4928, %v4930
        %v4932 = vrot.slane %v4925, %v4931
        %v4933 = vcombine.low %v4011, %v4018
        %v4935 = vunpack.c.l.s4 1983009808
        %v4936 = vunpack.c.0.s8 %v4935
        %v4937 = vlaneseq
        %v4938 = vshrl.u32 %v4937, 7
        %v4939 = vsub.s32 %v4936, %v4938
        %v4940 = vrot.slane %v4933, %v4939
        %v4941 = vcombine.low %v4021, %v4022
        %v4943 = vunpack.c.l.s4 1983009808
        %v4944 = vunpack.c.0.s8 %v4943
        %v4945 = vlaneseq
        %v4946 = vshrl.u32 %v4945, 7
        %v4947 = vsub.s32 %v4944, %v4946
        %v4948 = vrot.slane %v4941, %v4947
        %v4949 = vcombine.low %v4924, %v4932
        %v4951 = vunpack.c.l.s4 1934713408
        %v4952 = vunpack.c.0.s8 %v4951
        %v4953 = vlaneseq
        %v4954 = vshrl.u32 %v4953, 7
        %v4955 = vsub.s32 %v4952, %v4954
        %v4956 = vrot.slane %v4949, %v4955
        %v4957 = vcombine.low %v4940, %v4948
        %v4959 = vunpack.c.l.s4 1934713408
        %v4960 = vunpack.c.0.s8 %v4959
        %v4961 = vlaneseq
        %v4962 = vshrl.u32 %v4961, 7
        %v4963 = vsub.s32 %v4960, %v4962
        %v4964 = vrot.slane %v4957, %v4963
        %v4965 = vcombine.low %v4956, %v4964
        %v4966 = vcombine.high %v4956, %v4964
        %v4967 = vcombine.low %v4061, %v4068
        %v4969 = vunpack.c.l.s4 1983009808
        %v4970 = vunpack.c.0.s8 %v4969
        %v4971 = vlaneseq
        %v4972 = vshrl.u32 %v4971, 7
        %v4973 = vsub.s32 %v4970, %v4972
        %v4974 = vrot.slane %v4967, %v4973
        %v4975 = vcombine.low %v4085, %v4086
        %v4977 = vunpack.c.l.s4 1983009808
        %v4978 = vunpack.c.0.s8 %v4977
        %v4979 = vlaneseq
        %v4980 = vshrl.u32 %v4979, 7
        %v4981 = vsub.s32 %v4978, %v4980
        %v4982 = vrot.slane %v4975, %v4981
        %v4983 = vcombine.low %v4077, %v4084
        %v4985 = vunpack.c.l.s4 1983009808
        %v4986 = vunpack.c.0.s8 %v4985
        %v4987 = vlaneseq
        %v4988 = vshrl.u32 %v4987, 7
        %v4989 = vsub.s32 %v4986, %v4988
        %v4990 = vrot.slane %v4983, %v4989
        %v4991 = vcombine.low %v4087, %v4088
        %v4993 = vunpack.c.l.s4 1983009808
        %v4994 = vunpack.c.0.s8 %v4993
        %v4995 = vlaneseq
        %v4996 = vshrl.u32 %v4995, 7
        %v4997 = vsub.s32 %v4994, %v4996
        %v4998 = vrot.slane %v4991, %v4997
        %v4999 = vcombine.low %v4974, %v4982
        %v5001 = vunpack.c.l.s4 1934713408
        %v5002 = vunpack.c.0.s8 %v5001
        %v5003 = vlaneseq
        %v5004 = vshrl.u32 %v5003, 7
        %v5005 = vsub.s32 %v5002, %v5004
        %v5006 = vrot.slane %v4999, %v5005
        %v5007 = vcombine.low %v4990, %v4998
        %v5009 = vunpack.c.l.s4 1934713408
        %v5010 = vunpack.c.0.s8 %v5009
        %v5011 = vlaneseq
        %v5012 = vshrl.u32 %v5011, 7
        %v5013 = vsub.s32 %v5010, %v5012
        %v5014 = vrot.slane %v5007, %v5013
        %v5015 = vcombine.low %v5006, %v5014
        %v5016 = vcombine.high %v5006, %v5014
        %v5017 = vcombine.low %v4127, %v4134
        %v5019 = vunpack.c.l.s4 1983009808
        %v5020 = vunpack.c.0.s8 %v5019
        %v5021 = vlaneseq
        %v5022 = vshrl.u32 %v5021, 7
        %v5023 = vsub.s32 %v5020, %v5022
        %v5024 = vrot.slane %v5017, %v5023
        %v5025 = vcombine.low %v4151, %v4152
        %v5027 = vunpack.c.l.s4 1983009808
        %v5028 = vunpack.c.0.s8 %v5027
        %v5029 = vlaneseq
        %v5030 = vshrl.u32 %v5029, 7
        %v5031 = vsub.s32 %v5028, %v5030
        %v5032 = vrot.slane %v5025, %v5031
        %v5033 = vcombine.low %v4143, %v4150
        %v5035 = vunpack.c.l.s4 1983009808
        %v5036 = vunpack.c.0.s8 %v5035
        %v5037 = vlaneseq
        %v5038 = vshrl.u32 %v5037, 7
        %v5039 = vsub.s32 %v5036, %v5038
        %v5040 = vrot.slane %v5033, %v5039
        %v5041 = vcombine.low %v4153, %v4154
        %v5043 = vunpack.c.l.s4 1983009808
        %v5044 = vunpack.c.0.s8 %v5043
        %v5045 = vlaneseq
        %v5046 = vshrl.u32 %v5045, 7
        %v5047 = vsub.s32 %v5044, %v5046
        %v5048 = vrot.slane %v5041, %v5047
        %v5049 = vcombine.low %v5024, %v5032
        %v5051 = vunpack.c.l.s4 1934713408
        %v5052 = vunpack.c.0.s8 %v5051
        %v5053 = vlaneseq
        %v5054 = vshrl.u32 %v5053, 7
        %v5055 = vsub.s32 %v5052, %v5054
        %v5056 = vrot.slane %v5049, %v5055
        %v5057 = vcombine.low %v5040, %v5048
        %v5059 = vunpack.c.l.s4 1934713408
        %v5060 = vunpack.c.0.s8 %v5059
        %v5061 = vlaneseq
        %v5062 = vshrl.u32 %v5061, 7
        %v5063 = vsub.s32 %v5060, %v5062
        %v5064 = vrot.slane %v5057, %v5063
        %v5065 = vcombine.low %v5056, %v5064
        %v5066 = vcombine.high %v5056, %v5064
        %v5067 = vcombine.low %v4193, %v4200
        %v5069 = vunpack.c.l.s4 1983009808
        %v5070 = vunpack.c.0.s8 %v5069
        %v5071 = vlaneseq
        %v5072 = vshrl.u32 %v5071, 7
        %v5073 = vsub.s32 %v5070, %v5072
        %v5074 = vrot.slane %v5067, %v5073
        %v5075 = vcombine.low %v4217, %v4218
        %v5077 = vunpack.c.l.s4 1983009808
        %v5078 = vunpack.c.0.s8 %v5077
        %v5079 = vlaneseq
        %v5080 = vshrl.u32 %v5079, 7
        %v5081 = vsub.s32 %v5078, %v5080
        %v5082 = vrot.slane %v5075, %v5081
        %v5083 = vcombine.low %v4209, %v4216
        %v5085 = vunpack.c.l.s4 1983009808
        %v5086 = vunpack.c.0.s8 %v5085
        %v5087 = vlaneseq
        %v5088 = vshrl.u32 %v5087, 7
        %v5089 = vsub.s32 %v5086, %v5088
        %v5090 = vrot.slane %v5083, %v5089
        %v5091 = vcombine.low %v4219, %v4220
        %v5093 = vunpack.c.l.s4 1983009808
        %v5094 = vunpack.c.0.s8 %v5093
        %v5095 = vlaneseq
        %v5096 = vshrl.u32 %v5095, 7
        %v5097 = vsub.s32 %v5094, %v5096
        %v5098 = vrot.slane %v5091, %v5097
        %v5099 = vcombine.low %v5074, %v5082
        %v5101 = vunpack.c.l.s4 1934713408
        %v5102 = vunpack.c.0.s8 %v5101
        %v5103 = vlaneseq
        %v5104 = vshrl.u32 %v5103, 7
        %v5105 = vsub.s32 %v5102, %v5104
        %v5106 = vrot.slane %v5099, %v5105
        %v5107 = vcombine.low %v5090, %v5098
        %v5109 = vunpack.c.l.s4 1934713408
        %v5110 = vunpack.c.0.s8 %v5109
        %v5111 = vlaneseq
        %v5112 = vshrl.u32 %v5111, 7
        %v5113 = vsub.s32 %v5110, %v5112
        %v5114 = vrot.slane %v5107, %v5113
        %v5115 = vcombine.low %v5106, %v5114
        %v5116 = vcombine.high %v5106, %v5114
        %v5117 = vcombine.low %v4259, %v4266
        %v5119 = vunpack.c.l.s4 1983009808
        %v5120 = vunpack.c.0.s8 %v5119
        %v5121 = vlaneseq
        %v5122 = vshrl.u32 %v5121, 7
        %v5123 = vsub.s32 %v5120, %v5122
        %v5124 = vrot.slane %v5117, %v5123
        %v5125 = vcombine.low %v4283, %v4284
        %v5127 = vunpack.c.l.s4 1983009808
        %v5128 = vunpack.c.0.s8 %v5127
        %v5129 = vlaneseq
        %v5130 = vshrl.u32 %v5129, 7
        %v5131 = vsub.s32 %v5128, %v5130
        %v5132 = vrot.slane %v5125, %v5131
        %v5133 = vcombine.low %v4275, %v4282
        %v5135 = vunpack.c.l.s4 1983009808
        %v5136 = vunpack.c.0.s8 %v5135
        %v5137 = vlaneseq
        %v5138 = vshrl.u32 %v5137, 7
        %v5139 = vsub.s32 %v5136, %v5138
        %v5140 = vrot.slane %v5133, %v5139
        %v5141 = vcombine.low %v4285, %v4286
        %v5143 = vunpack.c.l.s4 1983009808
        %v5144 = vunpack.c.0.s8 %v5143
        %v5145 = vlaneseq
        %v5146 = vshrl.u32 %v5145, 7
        %v5147 = vsub.s32 %v5144, %v5146
        %v5148 = vrot.slane %v5141, %v5147
        %v5149 = vcombine.low %v5124, %v5132
        %v5151 = vunpack.c.l.s4 1934713408
        %v5152 = vunpack.c.0.s8 %v5151
        %v5153 = vlaneseq
        %v5154 = vshrl.u32 %v5153, 7
        %v5155 = vsub.s32 %v5152, %v5154
        %v5156 = vrot.slane %v5149, %v5155
        %v5157 = vcombine.low %v5140, %v5148
        %v5159 = vunpack.c.l.s4 1934713408
        %v5160 = vunpack.c.0.s8 %v5159
        %v5161 = vlaneseq
        %v5162 = vshrl.u32 %v5161, 7
        %v5163 = vsub.s32 %v5160, %v5162
        %v5164 = vrot.slane %v5157, %v5163
        %v5165 = vcombine.low %v5156, %v5164
        %v5166 = vcombine.high %v5156, %v5164
        %v5167 = vcombine.low %v4325, %v4332
        %v5169 = vunpack.c.l.s4 1983009808
        %v5170 = vunpack.c.0.s8 %v5169
        %v5171 = vlaneseq
        %v5172 = vshrl.u32 %v5171, 7
        %v5173 = vsub.s32 %v5170, %v5172
        %v5174 = vrot.slane %v5167, %v5173
        %v5175 = vcombine.low %v4349, %v4350
        %v5177 = vunpack.c.l.s4 1983009808
        %v5178 = vunpack.c.0.s8 %v5177
        %v5179 = vlaneseq
        %v5180 = vshrl.u32 %v5179, 7
        %v5181 = vsub.s32 %v5178, %v5180
        %v5182 = vrot.slane %v5175, %v5181
        %v5183 = vcombine.low %v4341, %v4348
        %v5185 = vunpack.c.l.s4 1983009808
        %v5186 = vunpack.c.0.s8 %v5185
        %v5187 = vlaneseq
        %v5188 = vshrl.u32 %v5187, 7
        %v5189 = vsub.s32 %v5186, %v5188
        %v5190 = vrot.slane %v5183, %v5189
        %v5191 = vcombine.low %v4351, %v4352
        %v5193 = vunpack.c.l.s4 1983009808
        %v5194 = vunpack.c.0.s8 %v5193
        %v5195 = vlaneseq
        %v5196 = vshrl.u32 %v5195, 7
        %v5197 = vsub.s32 %v5194, %v5196
        %v5198 = vrot.slane %v5191, %v5197
        %v5199 = vcombine.low %v5174, %v5182
        %v5201 = vunpack.c.l.s4 1934713408
        %v5202 = vunpack.c.0.s8 %v5201
        %v5203 = vlaneseq
        %v5204 = vshrl.u32 %v5203, 7
        %v5205 = vsub.s32 %v5202, %v5204
        %v5206 = vrot.slane %v5199, %v5205
        %v5207 = vcombine.low %v5190, %v5198
        %v5209 = vunpack.c.l.s4 1934713408
        %v5210 = vunpack.c.0.s8 %v5209
        %v5211 = vlaneseq
        %v5212 = vshrl.u32 %v5211, 7
        %v5213 = vsub.s32 %v5210, %v5212
        %v5214 = vrot.slane %v5207, %v5213
        %v5215 = vcombine.low %v5206, %v5214
        %v5216 = vcombine.high %v5206, %v5214
        %v5217 = vcombine.low %v4391, %v4398
        %v5219 = vunpack.c.l.s4 1983009808
        %v5220 = vunpack.c.0.s8 %v5219
        %v5221 = vlaneseq
        %v5222 = vshrl.u32 %v5221, 7
        %v5223 = vsub.s32 %v5220, %v5222
        %v5224 = vrot.slane %v5217, %v5223
        %v5225 = vcombine.low %v4415, %v4416
        %v5227 = vunpack.c.l.s4 1983009808
        %v5228 = vunpack.c.0.s8 %v5227
        %v5229 = vlaneseq
        %v5230 = vshrl.u32 %v5229, 7
        %v5231 = vsub.s32 %v5228, %v5230
        %v5232 = vrot.slane %v5225, %v5231
        %v5233 = vcombine.low %v4407, %v4414
        %v5235 = vunpack.c.l.s4 1983009808
        %v5236 = vunpack.c.0.s8 %v5235
        %v5237 = vlaneseq
        %v5238 = vshrl.u32 %v5237, 7
        %v5239 = vsub.s32 %v5236, %v5238
        %v5240 = vrot.slane %v5233, %v5239
        %v5241 = vcombine.low %v4417, %v4418
        %v5243 = vunpack.c.l.s4 1983009808
        %v5244 = vunpack.c.0.s8 %v5243
        %v5245 = vlaneseq
        %v5246 = vshrl.u32 %v5245, 7
        %v5247 = vsub.s32 %v5244, %v5246
        %v5248 = vrot.slane %v5241, %v5247
        %v5249 = vcombine.low %v5224, %v5232
        %v5251 = vunpack.c.l.s4 1934713408
        %v5252 = vunpack.c.0.s8 %v5251
        %v5253 = vlaneseq
        %v5254 = vshrl.u32 %v5253, 7
        %v5255 = vsub.s32 %v5252, %v5254
        %v5256 = vrot.slane %v5249, %v5255
        %v5257 = vcombine.low %v5240, %v5248
        %v5259 = vunpack.c.l.s4 1934713408
        %v5260 = vunpack.c.0.s8 %v5259
        %v5261 = vlaneseq
        %v5262 = vshrl.u32 %v5261, 7
        %v5263 = vsub.s32 %v5260, %v5262
        %v5264 = vrot.slane %v5257, %v5263
        %v5265 = vcombine.low %v5256, %v5264
        %v5266 = vcombine.high %v5256, %v5264
        %v5267 = vcombine.low %v4457, %v4464
        %v5269 = vunpack.c.l.s4 1983009808
        %v5270 = vunpack.c.0.s8 %v5269
        %v5271 = vlaneseq
        %v5272 = vshrl.u32 %v5271, 7
        %v5273 = vsub.s32 %v5270, %v5272
        %v5274 = vrot.slane %v5267, %v5273
        %v5275 = vcombine.low %v4481, %v4482
        %v5277 = vunpack.c.l.s4 1983009808
        %v5278 = vunpack.c.0.s8 %v5277
        %v5279 = vlaneseq
        %v5280 = vshrl.u32 %v5279, 7
        %v5281 = vsub.s32 %v5278, %v5280
        %v5282 = vrot.slane %v5275, %v5281
        %v5283 = vcombine.low %v4473, %v4480
        %v5285 = vunpack.c.l.s4 1983009808
        %v5286 = vunpack.c.0.s8 %v5285
        %v5287 = vlaneseq
        %v5288 = vshrl.u32 %v5287, 7
        %v5289 = vsub.s32 %v5286, %v5288
        %v5290 = vrot.slane %v5283, %v5289
        %v5291 = vcombine.low %v4483, %v4484
        %v5293 = vunpack.c.l.s4 1983009808
        %v5294 = vunpack.c.0.s8 %v5293
        %v5295 = vlaneseq
        %v5296 = vshrl.u32 %v5295, 7
        %v5297 = vsub.s32 %v5294, %v5296
        %v5298 = vrot.slane %v5291, %v5297
        %v5299 = vcombine.low %v5274, %v5282
        %v5301 = vunpack.c.l.s4 1934713408
        %v5302 = vunpack.c.0.s8 %v5301
        %v5303 = vlaneseq
        %v5304 = vshrl.u32 %v5303, 7
        %v5305 = vsub.s32 %v5302, %v5304
        %v5306 = vrot.slane %v5299, %v5305
        %v5307 = vcombine.low %v5290, %v5298
        %v5309 = vunpack.c.l.s4 1934713408
        %v5310 = vunpack.c.0.s8 %v5309
        %v5311 = vlaneseq
        %v5312 = vshrl.u32 %v5311, 7
        %v5313 = vsub.s32 %v5310, %v5312
        %v5314 = vrot.slane %v5307, %v5313
        %v5315 = vcombine.low %v5306, %v5314
        %v5316 = vcombine.high %v5306, %v5314
        %v5317 = vcombine.low %v4523, %v4530
        %v5319 = vunpack.c.l.s4 1983009808
        %v5320 = vunpack.c.0.s8 %v5319
        %v5321 = vlaneseq
        %v5322 = vshrl.u32 %v5321, 7
        %v5323 = vsub.s32 %v5320, %v5322
        %v5324 = vrot.slane %v5317, %v5323
        %v5325 = vcombine.low %v4547, %v4548
        %v5327 = vunpack.c.l.s4 1983009808
        %v5328 = vunpack.c.0.s8 %v5327
        %v5329 = vlaneseq
        %v5330 = vshrl.u32 %v5329, 7
        %v5331 = vsub.s32 %v5328, %v5330
        %v5332 = vrot.slane %v5325, %v5331
        %v5333 = vcombine.low %v4539, %v4546
        %v5335 = vunpack.c.l.s4 1983009808
        %v5336 = vunpack.c.0.s8 %v5335
        %v5337 = vlaneseq
        %v5338 = vshrl.u32 %v5337, 7
        %v5339 = vsub.s32 %v5336, %v5338
        %v5340 = vrot.slane %v5333, %v5339
        %v5341 = vcombine.low %v4549, %v4550
        %v5343 = vunpack.c.l.s4 1983009808
        %v5344 = vunpack.c.0.s8 %v5343
        %v5345 = vlaneseq
        %v5346 = vshrl.u32 %v5345, 7
        %v5347 = vsub.s32 %v5344, %v5346
        %v5348 = vrot.slane %v5341, %v5347
        %v5349 = vcombine.low %v5324, %v5332
        %v5351 = vunpack.c.l.s4 1934713408
        %v5352 = vunpack.c.0.s8 %v5351
        %v5353 = vlaneseq
        %v5354 = vshrl.u32 %v5353, 7
        %v5355 = vsub.s32 %v5352, %v5354
        %v5356 = vrot.slane %v5349, %v5355
        %v5357 = vcombine.low %v5340, %v5348
        %v5359 = vunpack.c.l.s4 1934713408
        %v5360 = vunpack.c.0.s8 %v5359
        %v5361 = vlaneseq
        %v5362 = vshrl.u32 %v5361, 7
        %v5363 = vsub.s32 %v5360, %v5362
        %v5364 = vrot.slane %v5357, %v5363
        %v5365 = vcombine.low %v5356, %v5364
        %v5366 = vcombine.high %v5356, %v5364
        %v5367 = vcombine.low %v4589, %v4596
        %v5369 = vunpack.c.l.s4 1983009808
        %v5370 = vunpack.c.0.s8 %v5369
        %v5371 = vlaneseq
        %v5372 = vshrl.u32 %v5371, 7
        %v5373 = vsub.s32 %v5370, %v5372
        %v5374 = vrot.slane %v5367, %v5373
        %v5375 = vcombine.low %v4613, %v4614
        %v5377 = vunpack.c.l.s4 1983009808
        %v5378 = vunpack.c.0.s8 %v5377
        %v5379 = vlaneseq
        %v5380 = vshrl.u32 %v5379, 7
        %v5381 = vsub.s32 %v5378, %v5380
        %v5382 = vrot.slane %v5375, %v5381
        %v5383 = vcombine.low %v4605, %v4612
        %v5385 = vunpack.c.l.s4 1983009808
        %v5386 = vunpack.c.0.s8 %v5385
        %v5387 = vlaneseq
        %v5388 = vshrl.u32 %v5387, 7
        %v5389 = vsub.s32 %v5386, %v5388
        %v5390 = vrot.slane %v5383, %v5389
        %v5391 = vcombine.low %v4615, %v4616
        %v5393 = vunpack.c.l.s4 1983009808
        %v5394 = vunpack.c.0.s8 %v5393
        %v5395 = vlaneseq
        %v5396 = vshrl.u32 %v5395, 7
        %v5397 = vsub.s32 %v5394, %v5396
        %v5398 = vrot.slane %v5391, %v5397
        %v5399 = vcombine.low %v5374, %v5382
        %v5401 = vunpack.c.l.s4 1934713408
        %v5402 = vunpack.c.0.s8 %v5401
        %v5403 = vlaneseq
        %v5404 = vshrl.u32 %v5403, 7
        %v5405 = vsub.s32 %v5402, %v5404
        %v5406 = vrot.slane %v5399, %v5405
        %v5407 = vcombine.low %v5390, %v5398
        %v5409 = vunpack.c.l.s4 1934713408
        %v5410 = vunpack.c.0.s8 %v5409
        %v5411 = vlaneseq
        %v5412 = vshrl.u32 %v5411, 7
        %v5413 = vsub.s32 %v5410, %v5412
        %v5414 = vrot.slane %v5407, %v5413
        %v5415 = vcombine.low %v5406, %v5414
        %v5416 = vcombine.high %v5406, %v5414
        %v5419 = vpack.i.b16 %v4715, %v4665
        %v5421 = vshrl.u32 %v4665, 16
        %v5422 = vshrl.u32 %v4715, 16
        %v5423 = vpack.i.b16 %v5422, %v5421
        %v5427 = vpack.i.b16 %v4716, %v4666
        %v5429 = vshrl.u32 %v4666, 16
        %v5430 = vshrl.u32 %v4716, 16
        %v5431 = vpack.i.b16 %v5430, %v5429
        %v5435 = vpack.i.b16 %v4815, %v4765
        %v5437 = vshrl.u32 %v4765, 16
        %v5438 = vshrl.u32 %v4815, 16
        %v5439 = vpack.i.b16 %v5438, %v5437
        %v5443 = vpack.i.b16 %v4816, %v4766
        %v5445 = vshrl.u32 %v4766, 16
        %v5446 = vshrl.u32 %v4816, 16
        %v5447 = vpack.i.b16 %v5446, %v5445
        %v5451 = vpack.i.b16 %v4915, %v4865
        %v5453 = vshrl.u32 %v4865, 16
        %v5454 = vshrl.u32 %v4915, 16
        %v5455 = vpack.i.b16 %v5454, %v5453
        %v5459 = vpack.i.b16 %v4916, %v4866
        %v5461 = vshrl.u32 %v4866, 16
        %v5462 = vshrl.u32 %v4916, 16
        %v5463 = vpack.i.b16 %v5462, %v5461
        %v5467 = vpack.i.b16 %v5015, %v4965
        %v5469 = vshrl.u32 %v4965, 16
        %v5470 = vshrl.u32 %v5015, 16
        %v5471 = vpack.i.b16 %v5470, %v5469
        %v5475 = vpack.i.b16 %v5016, %v4966
        %v5477 = vshrl.u32 %v4966, 16
        %v5478 = vshrl.u32 %v5016, 16
        %v5479 = vpack.i.b16 %v5478, %v5477
        %v5483 = vpack.i.b16 %v5115, %v5065
        %v5485 = vshrl.u32 %v5065, 16
        %v5486 = vshrl.u32 %v5115, 16
        %v5487 = vpack.i.b16 %v5486, %v5485
        %v5491 = vpack.i.b16 %v5116, %v5066
        %v5493 = vshrl.u32 %v5066, 16
        %v5494 = vshrl.u32 %v5116, 16
        %v5495 = vpack.i.b16 %v5494, %v5493
        %v5499 = vpack.i.b16 %v5215, %v5165
        %v5501 = vshrl.u32 %v5165, 16
        %v5502 = vshrl.u32 %v5215, 16
        %v5503 = vpack.i.b16 %v5502, %v5501
        %v5507 = vpack.i.b16 %v5216, %v5166
        %v5509 = vshrl.u32 %v5166, 16
        %v5510 = vshrl.u32 %v5216, 16
        %v5511 = vpack.i.b16 %v5510, %v5509
        %v5515 = vpack.i.b16 %v5315, %v5265
        %v5517 = vshrl.u32 %v5265, 16
        %v5518 = vshrl.u32 %v5315, 16
        %v5519 = vpack.i.b16 %v5518, %v5517
        %v5523 = vpack.i.b16 %v5316, %v5266
        %v5525 = vshrl.u32 %v5266, 16
        %v5526 = vshrl.u32 %v5316, 16
        %v5527 = vpack.i.b16 %v5526, %v5525
        %v5531 = vpack.i.b16 %v5415, %v5365
        %v5533 = vshrl.u32 %v5365, 16
        %v5534 = vshrl.u32 %v5415, 16
        %v5535 = vpack.i.b16 %v5534, %v5533
        %v5539 = vpack.i.b16 %v5416, %v5366
        %v5541 = vshrl.u32 %v5366, 16
        %v5542 = vshrl.u32 %v5416, 16
        %v5543 = vpack.i.b16 %v5542, %v5541
        %vm5545 = vcmask 261120
        %v5547 = vsel %vm5545, %v1209, 0
        %v5550 = vsel %vm5545, %v3275, 0
        %v5553 = vsel %vm5545, %v3287, 0
        %v5556 = vsel %vm5545, %v3299, 0
        %v5559 = vsel %vm5545, %v3311, 0
        %v5562 = vsel %vm5545, %v3323, 0
        %v5565 = vsel %vm5545, %v3335, 0
        %v5568 = vsel %vm5545, %v3347, 0
        %v5571 = vsel %vm5545, %v3359, 0
        %5573 = vmatprep.subr.bf16.mxu0 0
        %5574 = vmatpush1.bf16.xpose.msra.mxu0 %v5550
        %5575 = vmatprep.subr.bf16.mxu0 0
        %5576 = vmatpush1.bf16.xpose.msra.mxu0 %v5553
        %5577 = vmatprep.subr.bf16.mxu0 0
        %5578 = vmatpush1.bf16.xpose.msra.mxu0 %v5556
        %5579 = vmatprep.subr.bf16.mxu0 0
        %5580 = vmatpush1.bf16.xpose.msra.mxu0 %v5559
        %5581 = vmatprep.subr.bf16.mxu0 0
        %5582 = vmatpush1.bf16.xpose.msra.mxu0 %v5562
        %5583 = vmatprep.subr.bf16.mxu0 0
        %5584 = vmatpush1.bf16.xpose.msra.mxu0 %v5565
        %5585 = vmatprep.subr.bf16.mxu0 0
        %5586 = vmatpush1.bf16.xpose.msra.mxu0 %v5568
        %5587 = vmatprep.subr.bf16.mxu0 0
        %5588 = vmatpush1.bf16.xpose.msra.mxu0 %v5571
        %5589 = vmatprep.subr.bf16.mxu0 0
        %5590 = vmatpush1.bf16.xpose.msra.mxu0 0
        %5591 = vmatprep.subr.bf16.mxu0 0
        %5592 = vmatpush1.bf16.xpose.msra.mxu0 0
        %5593 = vmatprep.subr.bf16.mxu0 0
        %5594 = vmatpush1.bf16.xpose.msra.mxu0 0
        %5595 = vmatprep.subr.bf16.mxu0 0
        %5596 = vmatpush1.bf16.xpose.msra.mxu0 0
        %5597 = vmatprep.subr.bf16.mxu0 0
        %5598 = vmatpush1.bf16.xpose.msra.mxu0 0
        %5599 = vmatprep.subr.bf16.mxu0 0
        %5600 = vmatpush1.bf16.xpose.msra.mxu0 0
        %5601 = vmatprep.subr.bf16.mxu0 0
        %5602 = vmatpush1.bf16.xpose.msra.mxu0 0
        %5603 = vmatprep.subr.bf16.mxu0 0
        %5604 = vmatpush1.bf16.xpose.msra.mxu0 0
        %5605 = vmatprep.mubr.bf16.mxu0 0
        %5606 = vmatmul.mubr.bf16.gmra.mrb[0].mxu0 %v5547
        %v5607 = vpop.f32.mrb[0].mxu0
        %v5608 = vadd.f32 0.0, %v5607
        %v5609 = vpop.f32.mrb[0].mxu0
        %v5610 = vpop.f32.mrb[0].mxu0
        %v5611 = vpop.f32.mrb[0].mxu0
        %5612 = vdwg.mxu0
        %v5614 = vsel %vm5545, %v1212, 0
        %v5617 = vsel %vm5545, %v3278, 0
        %v5620 = vsel %vm5545, %v3290, 0
        %v5623 = vsel %vm5545, %v3302, 0
        %v5626 = vsel %vm5545, %v3314, 0
        %v5629 = vsel %vm5545, %v3326, 0
        %v5632 = vsel %vm5545, %v3338, 0
        %v5635 = vsel %vm5545, %v3350, 0
        %v5638 = vsel %vm5545, %v3362, 0
        %5640 = vmatprep.subr.bf16.mxu0 0
        %5641 = vmatpush1.bf16.xpose.msra.mxu0 %v5617
        %5642 = vmatprep.subr.bf16.mxu0 0
        %5643 = vmatpush1.bf16.xpose.msra.mxu0 %v5620
        %5644 = vmatprep.subr.bf16.mxu0 0
        %5645 = vmatpush1.bf16.xpose.msra.mxu0 %v5623
        %5646 = vmatprep.subr.bf16.mxu0 0
        %5647 = vmatpush1.bf16.xpose.msra.mxu0 %v5626
        %5648 = vmatprep.subr.bf16.mxu0 0
        %5649 = vmatpush1.bf16.xpose.msra.mxu0 %v5629
        %5650 = vmatprep.subr.bf16.mxu0 0
        %5651 = vmatpush1.bf16.xpose.msra.mxu0 %v5632
        %5652 = vmatprep.subr.bf16.mxu0 0
        %5653 = vmatpush1.bf16.xpose.msra.mxu0 %v5635
        %5654 = vmatprep.subr.bf16.mxu0 0
        %5655 = vmatpush1.bf16.xpose.msra.mxu0 %v5638
        %5656 = vmatprep.subr.bf16.mxu0 0
        %5657 = vmatpush1.bf16.xpose.msra.mxu0 0
        %5658 = vmatprep.subr.bf16.mxu0 0
        %5659 = vmatpush1.bf16.xpose.msra.mxu0 0
        %5660 = vmatprep.subr.bf16.mxu0 0
        %5661 = vmatpush1.bf16.xpose.msra.mxu0 0
        %5662 = vmatprep.subr.bf16.mxu0 0
        %5663 = vmatpush1.bf16.xpose.msra.mxu0 0
        %5664 = vmatprep.subr.bf16.mxu0 0
        %5665 = vmatpush1.bf16.xpose.msra.mxu0 0
        %5666 = vmatprep.subr.bf16.mxu0 0
        %5667 = vmatpush1.bf16.xpose.msra.mxu0 0
        %5668 = vmatprep.subr.bf16.mxu0 0
        %5669 = vmatpush1.bf16.xpose.msra.mxu0 0
        %5670 = vmatprep.subr.bf16.mxu0 0
        %5671 = vmatpush1.bf16.xpose.msra.mxu0 0
        %5672 = vmatprep.mubr.bf16.mxu0 0
        %5673 = vmatmul.mubr.bf16.gmra.mrb[0].mxu0 %v5614
        %v5674 = vpop.f32.mrb[0].mxu0
        %v5675 = vadd.f32 0.0, %v5674
        %v5676 = vpop.f32.mrb[0].mxu0
        %v5677 = vpop.f32.mrb[0].mxu0
        %v5678 = vpop.f32.mrb[0].mxu0
        %5679 = vdwg.mxu0
        %v5681 = vsel %vm5545, %v1215, 0
        %v5684 = vsel %vm5545, %v3281, 0
        %v5687 = vsel %vm5545, %v3293, 0
        %v5690 = vsel %vm5545, %v3305, 0
        %v5693 = vsel %vm5545, %v3317, 0
        %v5696 = vsel %vm5545, %v3329, 0
        %v5699 = vsel %vm5545, %v3341, 0
        %v5702 = vsel %vm5545, %v3353, 0
        %v5705 = vsel %vm5545, %v3365, 0
        %5707 = vmatprep.subr.bf16.mxu0 0
        %5708 = vmatpush1.bf16.xpose.msra.mxu0 %v5684
        %5709 = vmatprep.subr.bf16.mxu0 0
        %5710 = vmatpush1.bf16.xpose.msra.mxu0 %v5687
        %5711 = vmatprep.subr.bf16.mxu0 0
        %5712 = vmatpush1.bf16.xpose.msra.mxu0 %v5690
        %5713 = vmatprep.subr.bf16.mxu0 0
        %5714 = vmatpush1.bf16.xpose.msra.mxu0 %v5693
        %5715 = vmatprep.subr.bf16.mxu0 0
        %5716 = vmatpush1.bf16.xpose.msra.mxu0 %v5696
        %5717 = vmatprep.subr.bf16.mxu0 0
        %5718 = vmatpush1.bf16.xpose.msra.mxu0 %v5699
        %5719 = vmatprep.subr.bf16.mxu0 0
        %5720 = vmatpush1.bf16.xpose.msra.mxu0 %v5702
        %5721 = vmatprep.subr.bf16.mxu0 0
        %5722 = vmatpush1.bf16.xpose.msra.mxu0 %v5705
        %5723 = vmatprep.subr.bf16.mxu0 0
        %5724 = vmatpush1.bf16.xpose.msra.mxu0 0
        %5725 = vmatprep.subr.bf16.mxu0 0
        %5726 = vmatpush1.bf16.xpose.msra.mxu0 0
        %5727 = vmatprep.subr.bf16.mxu0 0
        %5728 = vmatpush1.bf16.xpose.msra.mxu0 0
        %5729 = vmatprep.subr.bf16.mxu0 0
        %5730 = vmatpush1.bf16.xpose.msra.mxu0 0
        %5731 = vmatprep.subr.bf16.mxu0 0
        %5732 = vmatpush1.bf16.xpose.msra.mxu0 0
        %5733 = vmatprep.subr.bf16.mxu0 0
        %5734 = vmatpush1.bf16.xpose.msra.mxu0 0
        %5735 = vmatprep.subr.bf16.mxu0 0
        %5736 = vmatpush1.bf16.xpose.msra.mxu0 0
        %5737 = vmatprep.subr.bf16.mxu0 0
        %5738 = vmatpush1.bf16.xpose.msra.mxu0 0
        %5739 = vmatprep.mubr.bf16.mxu0 0
        %5740 = vmatmul.mubr.bf16.gmra.mrb[0].mxu0 %v5681
        %v5741 = vpop.f32.mrb[0].mxu0
        %v5742 = vadd.f32 0.0, %v5741
        %v5743 = vpop.f32.mrb[0].mxu0
        %v5744 = vpop.f32.mrb[0].mxu0
        %v5745 = vpop.f32.mrb[0].mxu0
        %5746 = vdwg.mxu0
        %v5748 = vsel %vm5545, %v1218, 0
        %v5751 = vsel %vm5545, %v3284, 0
        %v5754 = vsel %vm5545, %v3296, 0
        %v5757 = vsel %vm5545, %v3308, 0
        %v5760 = vsel %vm5545, %v3320, 0
        %v5763 = vsel %vm5545, %v3332, 0
        %v5766 = vsel %vm5545, %v3344, 0
        %v5769 = vsel %vm5545, %v3356, 0
        %v5772 = vsel %vm5545, %v3368, 0
        %5774 = vmatprep.subr.bf16.mxu0 0
        %5775 = vmatpush1.bf16.xpose.msra.mxu0 %v5751
        %5776 = vmatprep.subr.bf16.mxu0 0
        %5777 = vmatpush1.bf16.xpose.msra.mxu0 %v5754
        %5778 = vmatprep.subr.bf16.mxu0 0
        %5779 = vmatpush1.bf16.xpose.msra.mxu0 %v5757
        %5780 = vmatprep.subr.bf16.mxu0 0
        %5781 = vmatpush1.bf16.xpose.msra.mxu0 %v5760
        %5782 = vmatprep.subr.bf16.mxu0 0
        %5783 = vmatpush1.bf16.xpose.msra.mxu0 %v5763
        %5784 = vmatprep.subr.bf16.mxu0 0
        %5785 = vmatpush1.bf16.xpose.msra.mxu0 %v5766
        %5786 = vmatprep.subr.bf16.mxu0 0
        %5787 = vmatpush1.bf16.xpose.msra.mxu0 %v5769
        %5788 = vmatprep.subr.bf16.mxu0 0
        %5789 = vmatpush1.bf16.xpose.msra.mxu0 %v5772
        %5790 = vmatprep.subr.bf16.mxu0 0
        %5791 = vmatpush1.bf16.xpose.msra.mxu0 0
        %5792 = vmatprep.subr.bf16.mxu0 0
        %5793 = vmatpush1.bf16.xpose.msra.mxu0 0
        %5794 = vmatprep.subr.bf16.mxu0 0
        %5795 = vmatpush1.bf16.xpose.msra.mxu0 0
        %5796 = vmatprep.subr.bf16.mxu0 0
        %5797 = vmatpush1.bf16.xpose.msra.mxu0 0
        %5798 = vmatprep.subr.bf16.mxu0 0
        %5799 = vmatpush1.bf16.xpose.msra.mxu0 0
        %5800 = vmatprep.subr.bf16.mxu0 0
        %5801 = vmatpush1.bf16.xpose.msra.mxu0 0
        %5802 = vmatprep.subr.bf16.mxu0 0
        %5803 = vmatpush1.bf16.xpose.msra.mxu0 0
        %5804 = vmatprep.subr.bf16.mxu0 0
        %5805 = vmatpush1.bf16.xpose.msra.mxu0 0
        %5806 = vmatprep.mubr.bf16.mxu0 0
        %5807 = vmatmul.mubr.bf16.gmra.mrb[0].mxu0 %v5748
        %v5808 = vpop.f32.mrb[0].mxu0
        %v5809 = vadd.f32 0.0, %v5808
        %v5810 = vpop.f32.mrb[0].mxu0
        %v5811 = vpop.f32.mrb[0].mxu0
        %v5812 = vpop.f32.mrb[0].mxu0
        %5813 = vdwg.mxu0
        %v5815 = vlaneseq
        %v5816 = vshrl.u32 %v5815, 7
        %v5817 = vsub.s32 0, %v5816
        %v5818 = vrot.slane %v708, %v5817
        %v5820 = vadd.f32 %v5608, %v5818
        %v5821 = vadd.f32 %v5675, %v5818
        %v5822 = vadd.f32 %v5742, %v5818
        %v5823 = vadd.f32 %v5809, %v5818
        %5824 = vmax.xlane.f32.xlu0 %v5820
        %v5825 = vpop.xlane.xlu0 %5824
        %5826 = vmax.xlane.f32.xlu0 %v5821
        %v5827 = vpop.xlane.xlu0 %5826
        %5828 = vmax.xlane.f32.xlu0 %v5822
        %v5829 = vpop.xlane.xlu0 %5828
        %5830 = vmax.xlane.f32.xlu0 %v5823
        %v5831 = vpop.xlane.xlu0 %5830
        %v5832 = vsub.f32 %v5820, %v5825
        %v5833 = vsub.f32 %v5821, %v5827
        %v5834 = vsub.f32 %v5822, %v5829
        %v5835 = vsub.f32 %v5823, %v5831
        %v5836 = vmul.f32 %v5832, 1.442695
        %v5837 = vpow.pop %v5836
        %v5838 = vmul.f32 %v5833, 1.442695
        %v5839 = vpow.pop %v5838
        %v5840 = vmul.f32 %v5834, 1.442695
        %v5841 = vpow.pop %v5840
        %v5842 = vmul.f32 %v5835, 1.442695
        %v5843 = vpow.pop %v5842
        %5844 = vadd.xlane.f32.xlu0 %v5837
        %v5845 = vpop.xlane.xlu0 %5844
        %5846 = vadd.xlane.f32.xlu0 %v5839
        %v5847 = vpop.xlane.xlu0 %5846
        %5848 = vadd.xlane.f32.xlu0 %v5841
        %v5849 = vpop.xlane.xlu0 %5848
        %5850 = vadd.xlane.f32.xlu0 %v5843
        %v5851 = vpop.xlane.xlu0 %5850
        %v5852 = vrcp.pop %v5845
        %v5853 = vrcp.pop %v5847
        %v5854 = vrcp.pop %v5849
        %v5855 = vrcp.pop %v5851
        %v5856 = vmul.f32 %v5837, %v5852
        %v5857 = vmul.f32 %v5839, %v5853
        %v5858 = vmul.f32 %v5841, %v5854
        %v5859 = vmul.f32 %v5843, %v5855
        %v5860 = vpack.c.bf16 %v5856, %v5856
        %v5861 = vpack.c.bf16 %v5857, %v5857
        %v5862 = vpack.c.bf16 %v5858, %v5858
        %v5863 = vpack.c.bf16 %v5859, %v5859
        %5864 = vmatprep.subr.bf16.mxu0 0
        %5865 = vmatpush1.bf16.msra.mxu0 %v5419
        %5866 = vmatprep.subr.bf16.mxu0 0
        %5867 = vmatpush1.bf16.msra.mxu0 %v5435
        %5868 = vmatprep.subr.bf16.mxu0 0
        %5869 = vmatpush1.bf16.msra.mxu0 %v5451
        %5870 = vmatprep.subr.bf16.mxu0 0
        %5871 = vmatpush1.bf16.msra.mxu0 %v5467
        %5872 = vmatprep.subr.bf16.mxu0 0
        %5873 = vmatpush1.bf16.msra.mxu0 %v5483
        %5874 = vmatprep.subr.bf16.mxu0 0
        %5875 = vmatpush1.bf16.msra.mxu0 %v5499
        %5876 = vmatprep.subr.bf16.mxu0 0
        %5877 = vmatpush1.bf16.msra.mxu0 %v5515
        %5878 = vmatprep.subr.bf16.mxu0 0
        %5879 = vmatpush1.bf16.msra.mxu0 %v5531
        %5880 = vmatprep.subr.bf16.mxu0 0
        %5881 = vmatpush1.bf16.msra.mxu0 0
        %5882 = vmatprep.subr.bf16.mxu0 0
        %5883 = vmatpush1.bf16.msra.mxu0 0
        %5884 = vmatprep.subr.bf16.mxu0 0
        %5885 = vmatpush1.bf16.msra.mxu0 0
        %5886 = vmatprep.subr.bf16.mxu0 0
        %5887 = vmatpush1.bf16.msra.mxu0 0
        %5888 = vmatprep.subr.bf16.mxu0 0
        %5889 = vmatpush1.bf16.msra.mxu0 0
        %5890 = vmatprep.subr.bf16.mxu0 0
        %5891 = vmatpush1.bf16.msra.mxu0 0
        %5892 = vmatprep.subr.bf16.mxu0 0
        %5893 = vmatpush1.bf16.msra.mxu0 0
        %5894 = vmatprep.subr.bf16.mxu0 0
        %5895 = vmatpush1.bf16.msra.mxu0 0
        %5896 = vmatprep.mubr.bf16.mxu0 0
        %5897 = vmatmul.mubr.bf16.gmra.mrb[0].mxu0 %v5860
        %v5898 = vpop.f32.mrb[0].mxu0
        %v5899 = vadd.f32 0.0, %v5898
        %v5900 = vpop.f32.mrb[0].mxu0
        %v5901 = vpop.f32.mrb[0].mxu0
        %v5902 = vpop.f32.mrb[0].mxu0
        %5903 = vdwg.mxu0
        %5904 = vmatprep.subr.bf16.mxu0 0
        %5905 = vmatpush1.bf16.msra.mxu0 %v5423
        %5906 = vmatprep.subr.bf16.mxu0 0
        %5907 = vmatpush1.bf16.msra.mxu0 %v5439
        %5908 = vmatprep.subr.bf16.mxu0 0
        %5909 = vmatpush1.bf16.msra.mxu0 %v5455
        %5910 = vmatprep.subr.bf16.mxu0 0
        %5911 = vmatpush1.bf16.msra.mxu0 %v5471
        %5912 = vmatprep.subr.bf16.mxu0 0
        %5913 = vmatpush1.bf16.msra.mxu0 %v5487
        %5914 = vmatprep.subr.bf16.mxu0 0
        %5915 = vmatpush1.bf16.msra.mxu0 %v5503
        %5916 = vmatprep.subr.bf16.mxu0 0
        %5917 = vmatpush1.bf16.msra.mxu0 %v5519
        %5918 = vmatprep.subr.bf16.mxu0 0
        %5919 = vmatpush1.bf16.msra.mxu0 %v5535
        %5920 = vmatprep.subr.bf16.mxu0 0
        %5921 = vmatpush1.bf16.msra.mxu0 0
        %5922 = vmatprep.subr.bf16.mxu0 0
        %5923 = vmatpush1.bf16.msra.mxu0 0
        %5924 = vmatprep.subr.bf16.mxu0 0
        %5925 = vmatpush1.bf16.msra.mxu0 0
        %5926 = vmatprep.subr.bf16.mxu0 0
        %5927 = vmatpush1.bf16.msra.mxu0 0
        %5928 = vmatprep.subr.bf16.mxu0 0
        %5929 = vmatpush1.bf16.msra.mxu0 0
        %5930 = vmatprep.subr.bf16.mxu0 0
        %5931 = vmatpush1.bf16.msra.mxu0 0
        %5932 = vmatprep.subr.bf16.mxu0 0
        %5933 = vmatpush1.bf16.msra.mxu0 0
        %5934 = vmatprep.subr.bf16.mxu0 0
        %5935 = vmatpush1.bf16.msra.mxu0 0
        %5936 = vmatprep.mubr.bf16.mxu0 0
        %5937 = vmatmul.mubr.bf16.gmra.mrb[0].mxu0 %v5861
        %v5938 = vpop.f32.mrb[0].mxu0
        %v5939 = vadd.f32 0.0, %v5938
        %v5940 = vpop.f32.mrb[0].mxu0
        %v5941 = vpop.f32.mrb[0].mxu0
        %v5942 = vpop.f32.mrb[0].mxu0
        %5943 = vdwg.mxu0
        %5944 = vmatprep.subr.bf16.mxu0 0
        %5945 = vmatpush1.bf16.msra.mxu0 %v5427
        %5946 = vmatprep.subr.bf16.mxu0 0
        %5947 = vmatpush1.bf16.msra.mxu0 %v5443
        %5948 = vmatprep.subr.bf16.mxu0 0
        %5949 = vmatpush1.bf16.msra.mxu0 %v5459
        %5950 = vmatprep.subr.bf16.mxu0 0
        %5951 = vmatpush1.bf16.msra.mxu0 %v5475
        %5952 = vmatprep.subr.bf16.mxu0 0
        %5953 = vmatpush1.bf16.msra.mxu0 %v5491
        %5954 = vmatprep.subr.bf16.mxu0 0
        %5955 = vmatpush1.bf16.msra.mxu0 %v5507
        %5956 = vmatprep.subr.bf16.mxu0 0
        %5957 = vmatpush1.bf16.msra.mxu0 %v5523
        %5958 = vmatprep.subr.bf16.mxu0 0
        %5959 = vmatpush1.bf16.msra.mxu0 %v5539
        %5960 = vmatprep.subr.bf16.mxu0 0
        %5961 = vmatpush1.bf16.msra.mxu0 0
        %5962 = vmatprep.subr.bf16.mxu0 0
        %5963 = vmatpush1.bf16.msra.mxu0 0
        %5964 = vmatprep.subr.bf16.mxu0 0
        %5965 = vmatpush1.bf16.msra.mxu0 0
        %5966 = vmatprep.subr.bf16.mxu0 0
        %5967 = vmatpush1.bf16.msra.mxu0 0
        %5968 = vmatprep.subr.bf16.mxu0 0
        %5969 = vmatpush1.bf16.msra.mxu0 0
        %5970 = vmatprep.subr.bf16.mxu0 0
        %5971 = vmatpush1.bf16.msra.mxu0 0
        %5972 = vmatprep.subr.bf16.mxu0 0
        %5973 = vmatpush1.bf16.msra.mxu0 0
        %5974 = vmatprep.subr.bf16.mxu0 0
        %5975 = vmatpush1.bf16.msra.mxu0 0
        %5976 = vmatprep.mubr.bf16.mxu0 0
        %5977 = vmatmul.mubr.bf16.gmra.mrb[0].mxu0 %v5862
        %v5978 = vpop.f32.mrb[0].mxu0
        %v5979 = vadd.f32 0.0, %v5978
        %v5980 = vpop.f32.mrb[0].mxu0
        %v5981 = vpop.f32.mrb[0].mxu0
        %v5982 = vpop.f32.mrb[0].mxu0
        %5983 = vdwg.mxu0
        %5984 = vmatprep.subr.bf16.mxu0 0
        %5985 = vmatpush1.bf16.msra.mxu0 %v5431
        %5986 = vmatprep.subr.bf16.mxu0 0
        %5987 = vmatpush1.bf16.msra.mxu0 %v5447
        %5988 = vmatprep.subr.bf16.mxu0 0
        %5989 = vmatpush1.bf16.msra.mxu0 %v5463
        %5990 = vmatprep.subr.bf16.mxu0 0
        %5991 = vmatpush1.bf16.msra.mxu0 %v5479
        %5992 = vmatprep.subr.bf16.mxu0 0
        %5993 = vmatpush1.bf16.msra.mxu0 %v5495
        %5994 = vmatprep.subr.bf16.mxu0 0
        %5995 = vmatpush1.bf16.msra.mxu0 %v5511
        %5996 = vmatprep.subr.bf16.mxu0 0
        %5997 = vmatpush1.bf16.msra.mxu0 %v5527
        %5998 = vmatprep.subr.bf16.mxu0 0
        %5999 = vmatpush1.bf16.msra.mxu0 %v5543
        %6000 = vmatprep.subr.bf16.mxu0 0
        %6001 = vmatpush1.bf16.msra.mxu0 0
        %6002 = vmatprep.subr.bf16.mxu0 0
        %6003 = vmatpush1.bf16.msra.mxu0 0
        %6004 = vmatprep.subr.bf16.mxu0 0
        %6005 = vmatpush1.bf16.msra.mxu0 0
        %6006 = vmatprep.subr.bf16.mxu0 0
        %6007 = vmatpush1.bf16.msra.mxu0 0
        %6008 = vmatprep.subr.bf16.mxu0 0
        %6009 = vmatpush1.bf16.msra.mxu0 0
        %6010 = vmatprep.subr.bf16.mxu0 0
        %6011 = vmatpush1.bf16.msra.mxu0 0
        %6012 = vmatprep.subr.bf16.mxu0 0
        %6013 = vmatpush1.bf16.msra.mxu0 0
        %6014 = vmatprep.subr.bf16.mxu0 0
        %6015 = vmatpush1.bf16.msra.mxu0 0
        %6016 = vmatprep.mubr.bf16.mxu0 0
        %6017 = vmatmul.mubr.bf16.gmra.mrb[0].mxu0 %v5863
        %v6018 = vpop.f32.mrb[0].mxu0
        %v6019 = vadd.f32 0.0, %v6018
        %v6020 = vpop.f32.mrb[0].mxu0
        %v6021 = vpop.f32.mrb[0].mxu0
        %v6022 = vpop.f32.mrb[0].mxu0
        %6023 = vdwg.mxu0
        %v6024 = vcombine.low %v5899, %v5979
        %v6025 = vcombine.high %v5899, %v5979
        %v6027 = vunpack.c.l.s4 1983009808
        %v6028 = vunpack.c.0.s8 %v6027
        %v6029 = vlaneseq
        %v6030 = vshrl.u32 %v6029, 7
        %v6031 = vsub.s32 %v6028, %v6030
        %v6032 = vrot.slane %v6024, %v6031
        %v6034 = vunpack.c.l.s4 1983009808
        %v6035 = vunpack.c.0.s8 %v6034
        %v6036 = vlaneseq
        %v6037 = vshrl.u32 %v6036, 7
        %v6038 = vsub.s32 %v6035, %v6037
        %v6039 = vrot.slane %v6025, %v6038
        %v6040 = vcombine.low %v5939, %v6019
        %v6041 = vcombine.high %v5939, %v6019
        %v6043 = vunpack.c.l.s4 1983009808
        %v6044 = vunpack.c.0.s8 %v6043
        %v6045 = vlaneseq
        %v6046 = vshrl.u32 %v6045, 7
        %v6047 = vsub.s32 %v6044, %v6046
        %v6048 = vrot.slane %v6040, %v6047
        %v6050 = vunpack.c.l.s4 1983009808
        %v6051 = vunpack.c.0.s8 %v6050
        %v6052 = vlaneseq
        %v6053 = vshrl.u32 %v6052, 7
        %v6054 = vsub.s32 %v6051, %v6053
        %v6055 = vrot.slane %v6041, %v6054
        %v6056 = vcombine.low %v6032, %v6048
        %v6057 = vcombine.high %v6032, %v6048
        %v6059 = vunpack.c.l.s4 1934713408
        %v6060 = vunpack.c.0.s8 %v6059
        %v6061 = vlaneseq
        %v6062 = vshrl.u32 %v6061, 7
        %v6063 = vsub.s32 %v6060, %v6062
        %v6064 = vrot.slane %v6056, %v6063
        %v6066 = vunpack.c.l.s4 1934713408
        %v6067 = vunpack.c.0.s8 %v6066
        %v6068 = vlaneseq
        %v6069 = vshrl.u32 %v6068, 7
        %v6070 = vsub.s32 %v6067, %v6069
        %v6071 = vrot.slane %v6057, %v6070
        %v6072 = vcombine.low %v6039, %v6055
        %v6073 = vcombine.high %v6039, %v6055
        %v6075 = vunpack.c.l.s4 1934713408
        %v6076 = vunpack.c.0.s8 %v6075
        %v6077 = vlaneseq
        %v6078 = vshrl.u32 %v6077, 7
        %v6079 = vsub.s32 %v6076, %v6078
        %v6080 = vrot.slane %v6072, %v6079
        %v6082 = vunpack.c.l.s4 1934713408
        %v6083 = vunpack.c.0.s8 %v6082
        %v6084 = vlaneseq
        %v6085 = vshrl.u32 %v6084, 7
        %v6086 = vsub.s32 %v6083, %v6085
        %v6087 = vrot.slane %v6073, %v6086
        %v6088 = vcombine.high %v6064, 0.0
        %v6089 = vcombine.high %v6071, 0.0
        %v6090 = vcombine.high %v6080, 0.0
        %v6091 = vcombine.high %v6087, 0.0
        %v6092 = vcombine.low %v6064, %v6071
        %v6094 = vunpack.c.l.s4 1983009808
        %v6095 = vunpack.c.0.s8 %v6094
        %v6096 = vlaneseq
        %v6097 = vshrl.u32 %v6096, 7
        %v6098 = vsub.s32 %v6095, %v6097
        %v6099 = vrot.slane %v6092, %v6098
        %v6100 = vcombine.low %v6088, %v6089
        %v6102 = vunpack.c.l.s4 1983009808
        %v6103 = vunpack.c.0.s8 %v6102
        %v6104 = vlaneseq
        %v6105 = vshrl.u32 %v6104, 7
        %v6106 = vsub.s32 %v6103, %v6105
        %v6107 = vrot.slane %v6100, %v6106
        %v6108 = vcombine.low %v6080, %v6087
        %v6110 = vunpack.c.l.s4 1983009808
        %v6111 = vunpack.c.0.s8 %v6110
        %v6112 = vlaneseq
        %v6113 = vshrl.u32 %v6112, 7
        %v6114 = vsub.s32 %v6111, %v6113
        %v6115 = vrot.slane %v6108, %v6114
        %v6116 = vcombine.low %v6090, %v6091
        %v6118 = vunpack.c.l.s4 1983009808
        %v6119 = vunpack.c.0.s8 %v6118
        %v6120 = vlaneseq
        %v6121 = vshrl.u32 %v6120, 7
        %v6122 = vsub.s32 %v6119, %v6121
        %v6123 = vrot.slane %v6116, %v6122
        %v6124 = vcombine.low %v6099, %v6107
        %v6125 = vcombine.high %v6099, %v6107
        %v6127 = vunpack.c.l.s4 1934713408
        %v6128 = vunpack.c.0.s8 %v6127
        %v6129 = vlaneseq
        %v6130 = vshrl.u32 %v6129, 7
        %v6131 = vsub.s32 %v6128, %v6130
        %v6132 = vrot.slane %v6124, %v6131
        %v6134 = vunpack.c.l.s4 1934713408
        %v6135 = vunpack.c.0.s8 %v6134
        %v6136 = vlaneseq
        %v6137 = vshrl.u32 %v6136, 7
        %v6138 = vsub.s32 %v6135, %v6137
        %v6139 = vrot.slane %v6125, %v6138
        %v6140 = vcombine.low %v6115, %v6123
        %v6141 = vcombine.high %v6115, %v6123
        %v6143 = vunpack.c.l.s4 1934713408
        %v6144 = vunpack.c.0.s8 %v6143
        %v6145 = vlaneseq
        %v6146 = vshrl.u32 %v6145, 7
        %v6147 = vsub.s32 %v6144, %v6146
        %v6148 = vrot.slane %v6140, %v6147
        %v6150 = vunpack.c.l.s4 1934713408
        %v6151 = vunpack.c.0.s8 %v6150
        %v6152 = vlaneseq
        %v6153 = vshrl.u32 %v6152, 7
        %v6154 = vsub.s32 %v6151, %v6153
        %v6155 = vrot.slane %v6141, %v6154
        %v6156 = vcombine.low %v6132, %v6148
        %v6157 = vcombine.high %v6132, %v6148
        %v6158 = vcombine.low %v6139, %v6155
        %v6159 = vcombine.high %v6139, %v6155
        %6161 = vrot.lane.b32.xlu0 %v6157, 32
        %v6162 = vpop.permute.xlu0 %6161
        %6165 = vrot.lane.b32.xlu0 %v6158, 64
        %v6166 = vpop.permute.xlu0 %6165
        %6169 = vrot.lane.b32.xlu0 %v6159, 96
        %v6170 = vpop.permute.xlu0 %6169
        %v6172 = vsel %vm5545, %v6156, %v6162
        %vm6173 = vcmask 523264
        %v6174 = vsel %vm6173, %v6172, %v6166
        %vm6175 = vcmask 785408
        %v6176 = vsel %vm6175, %v6174, %v6170
        %v6177 = vpack.c.bf16 %v6176, %v6176
        %v6178 = vld [vmem:[#allocation10] sm:$0xf]
        %v6179 = vld [vmem:[#allocation10 + $0x4] sm:$0xf]
        %v6180 = vld [vmem:[#allocation10 + $0x8] sm:$0xf]
        %v6181 = vld [vmem:[#allocation10 + $0xc] sm:$0xf]
        %v6182 = vld [vmem:[#allocation10 + $0x10] sm:$0xf]
        %v6183 = vld [vmem:[#allocation10 + $0x14] sm:$0xf]
        %v6184 = vld [vmem:[#allocation10 + $0x18] sm:$0xf]
        %v6185 = vld [vmem:[#allocation10 + $0x1c] sm:$0xf]
        %v6186 = vld [vmem:[#allocation10 + $0x20] sm:$0xf]
        %v6187 = vld [vmem:[#allocation10 + $0x24] sm:$0xf]
        %v6188 = vld [vmem:[#allocation10 + $0x28] sm:$0xf]
        %v6189 = vld [vmem:[#allocation10 + $0x2c] sm:$0xf]
        %v6190 = vld [vmem:[#allocation10 + $0x30] sm:$0xf]
        %v6191 = vld [vmem:[#allocation10 + $0x34] sm:$0xf]
        %v6192 = vld [vmem:[#allocation10 + $0x38] sm:$0xf]
        %v6193 = vld [vmem:[#allocation10 + $0x3c] sm:$0xf]
        %v6194 = vld [vmem:[%s8] sm:$0x1]
        %v6196 = vlaneseq
        %v6197 = vshrl.u32 %v6196, 7
        %v6198 = vsub.s32 0, %v6197
        %v6199 = vrot.slane %v6194, %v6198
        %v6217 = vunpack.c.l.b16 %v6178
        %v6218 = vunpack.c.l.b16 %v6179
        %v6219 = vunpack.c.l.b16 %v6180
        %v6220 = vunpack.c.l.b16 %v6181
        %v6221 = vunpack.c.l.b16 %v6182
        %v6222 = vunpack.c.l.b16 %v6183
        %v6223 = vunpack.c.l.b16 %v6184
        %v6224 = vunpack.c.l.b16 %v6185
        %v6225 = vunpack.c.l.b16 %v6186
        %v6226 = vunpack.c.l.b16 %v6187
        %v6227 = vunpack.c.l.b16 %v6188
        %v6228 = vunpack.c.l.b16 %v6189
        %v6229 = vunpack.c.l.b16 %v6190
        %v6230 = vunpack.c.l.b16 %v6191
        %v6231 = vunpack.c.l.b16 %v6192
        %v6232 = vunpack.c.l.b16 %v6193
        %v6233 = vpack.c.b16 %v6218, %v6217
        %v6234 = vpack.c.b16 %v6220, %v6219
        %v6235 = vpack.c.b16 %v6222, %v6221
        %v6236 = vpack.c.b16 %v6224, %v6223
        %v6237 = vpack.c.b16 %v6226, %v6225
        %v6238 = vpack.c.b16 %v6228, %v6227
        %v6239 = vpack.c.b16 %v6230, %v6229
        %v6240 = vpack.c.b16 %v6232, %v6231
        %6249 = vmatprep.subr.bf16.mxu0 0
        %6250 = vmatpush1.bf16.msra.mxu0 %v6233
        %6251 = vmatprep.subr.bf16.mxu0 0
        %6252 = vmatpush1.bf16.msra.mxu0 %v6234
        %6253 = vmatprep.subr.bf16.mxu0 0
        %6254 = vmatpush1.bf16.msra.mxu0 %v6235
        %6255 = vmatprep.subr.bf16.mxu0 0
        %6256 = vmatpush1.bf16.msra.mxu0 %v6236
        %6257 = vmatprep.subr.bf16.mxu0 0
        %6258 = vmatpush1.bf16.msra.mxu0 %v6237
        %6259 = vmatprep.subr.bf16.mxu0 0
        %6260 = vmatpush1.bf16.msra.mxu0 %v6238
        %6261 = vmatprep.subr.bf16.mxu0 0
        %6262 = vmatpush1.bf16.msra.mxu0 %v6239
        %6263 = vmatprep.subr.bf16.mxu0 0
        %6264 = vmatpush1.bf16.msra.mxu0 %v6240
        %6265 = vmatprep.subr.bf16.mxu0 0
        %6266 = vmatpush1.bf16.msra.mxu0 0
        %6267 = vmatprep.subr.bf16.mxu0 0
        %6268 = vmatpush1.bf16.msra.mxu0 0
        %6269 = vmatprep.subr.bf16.mxu0 0
        %6270 = vmatpush1.bf16.msra.mxu0 0
        %6271 = vmatprep.subr.bf16.mxu0 0
        %6272 = vmatpush1.bf16.msra.mxu0 0
        %6273 = vmatprep.subr.bf16.mxu0 0
        %6274 = vmatpush1.bf16.msra.mxu0 0
        %6275 = vmatprep.subr.bf16.mxu0 0
        %6276 = vmatpush1.bf16.msra.mxu0 0
        %6277 = vmatprep.subr.bf16.mxu0 0
        %6278 = vmatpush1.bf16.msra.mxu0 0
        %6279 = vmatprep.subr.bf16.mxu0 0
        %6280 = vmatpush1.bf16.msra.mxu0 0
        %6281 = vmatprep.mubr.bf16.mxu0 0
        %6282 = vmatmul.mubr.bf16.gmra.mrb[0].mxu0 %v6177
        %v6283 = vpop.f32.mrb[0].mxu0
        %v6284 = vadd.f32 %v6199, %v6283
        %v6285 = vpop.f32.mrb[0].mxu0
        %v6286 = vpop.f32.mrb[0].mxu0
        %v6287 = vpop.f32.mrb[0].mxu0
        %6288 = vdwg.mxu0
        %v6289 = vadd.f32 %v691, %v6284
        %v6290 = vld [vmem:[%s9] sm:$0x1]
        %v6291 = vld [vmem:[%s10] sm:$0x1]
        %6292 = vadd.xlane.f32.xlu0 %v6289
        %v6293 = vpop.xlane.xlu0 %6292
        %v6294 = vrcp.pop 128.0
        %v6295 = vmul.f32 %v6293, %v6294
        %v6296 = vsub.f32 %v6289, %v6295
        %v6297 = vmul.f32 %v6296, %v6296
        %6298 = vadd.xlane.f32.xlu0 %v6297
        %v6299 = vpop.xlane.xlu0 %6298
        %v6300 = vmul.f32 %v6299, %v6294
        %v6301 = vadd.f32 %v6300, 1e-05
        %v6302 = vrsqrt.pop %v6301
        %v6303 = vmul.f32 %v6296, %v6302
        %v6305 = vlaneseq
        %v6306 = vshrl.u32 %v6305, 7
        %v6307 = vsub.s32 0, %v6306
        %v6308 = vrot.slane %v6290, %v6307
        %v6310 = vmul.f32 %v6303, %v6308
        %v6312 = vlaneseq
        %v6313 = vshrl.u32 %v6312, 7
        %v6314 = vsub.s32 0, %v6313
        %v6315 = vrot.slane %v6291, %v6314
        %v6317 = vadd.f32 %v6310, %v6315
        %v6318 = vpack.c.bf16 %v6317, %v6317
        %v6319 = vld [vmem:[#allocation11] sm:$0xff]
        %v6320 = vld [vmem:[#allocation11 + $0x8] sm:$0xff]
        %v6321 = vld [vmem:[#allocation11 + $0x10] sm:$0xff]
        %v6322 = vld [vmem:[#allocation11 + $0x18] sm:$0xff]
        %v6323 = vld [vmem:[#allocation11 + $0x20] sm:$0xff]
        %v6324 = vld [vmem:[#allocation11 + $0x28] sm:$0xff]
        %v6325 = vld [vmem:[#allocation11 + $0x30] sm:$0xff]
        %v6326 = vld [vmem:[#allocation11 + $0x38] sm:$0xff]
        %v6327 = vld [vmem:[#allocation11 + $0x40] sm:$0xff]
        %v6328 = vld [vmem:[#allocation11 + $0x48] sm:$0xff]
        %v6329 = vld [vmem:[#allocation11 + $0x50] sm:$0xff]
        %v6330 = vld [vmem:[#allocation11 + $0x58] sm:$0xff]
        %v6331 = vld [vmem:[#allocation11 + $0x60] sm:$0xff]
        %v6332 = vld [vmem:[#allocation11 + $0x68] sm:$0xff]
        %v6333 = vld [vmem:[#allocation11 + $0x70] sm:$0xff]
        %v6334 = vld [vmem:[#allocation11 + $0x78] sm:$0xff]
        %v6335 = vld [vmem:[%s14] sm:$0x3]
        %v6337 = vlaneseq
        %v6338 = vshrl.u32 %v6337, 7
        %v6339 = vsub.s32 0, %v6338
        %v6340 = vrot.slane %v6335, %v6339
        %v6341 = vlaneseq
        %v6342 = vshrl.u32 %v6341, 7
        %v6343 = vsub.s32 1, %v6342
        %v6344 = vrot.slane %v6335, %v6343
        %v6363 = vunpack.c.l.b16 %v6319
        %v6364 = vunpack.c.h.b16 %v6319
        %v6365 = vunpack.c.l.b16 %v6320
        %v6366 = vunpack.c.h.b16 %v6320
        %v6367 = vunpack.c.l.b16 %v6321
        %v6368 = vunpack.c.h.b16 %v6321
        %v6369 = vunpack.c.l.b16 %v6322
        %v6370 = vunpack.c.h.b16 %v6322
        %v6371 = vunpack.c.l.b16 %v6323
        %v6372 = vunpack.c.h.b16 %v6323
        %v6373 = vunpack.c.l.b16 %v6324
        %v6374 = vunpack.c.h.b16 %v6324
        %v6375 = vunpack.c.l.b16 %v6325
        %v6376 = vunpack.c.h.b16 %v6325
        %v6377 = vunpack.c.l.b16 %v6326
        %v6378 = vunpack.c.h.b16 %v6326
        %v6379 = vunpack.c.l.b16 %v6327
        %v6380 = vunpack.c.h.b16 %v6327
        %v6381 = vunpack.c.l.b16 %v6328
        %v6382 = vunpack.c.h.b16 %v6328
        %v6383 = vunpack.c.l.b16 %v6329
        %v6384 = vunpack.c.h.b16 %v6329
        %v6385 = vunpack.c.l.b16 %v6330
        %v6386 = vunpack.c.h.b16 %v6330
        %v6387 = vunpack.c.l.b16 %v6331
        %v6388 = vunpack.c.h.b16 %v6331
        %v6389 = vunpack.c.l.b16 %v6332
        %v6390 = vunpack.c.h.b16 %v6332
        %v6391 = vunpack.c.l.b16 %v6333
        %v6392 = vunpack.c.h.b16 %v6333
        %v6393 = vunpack.c.l.b16 %v6334
        %v6394 = vunpack.c.h.b16 %v6334
        %v6395 = vpack.c.b16 %v6365, %v6363
        %v6396 = vpack.c.b16 %v6366, %v6364
        %v6397 = vpack.c.b16 %v6369, %v6367
        %v6398 = vpack.c.b16 %v6370, %v6368
        %v6399 = vpack.c.b16 %v6373, %v6371
        %v6400 = vpack.c.b16 %v6374, %v6372
        %v6401 = vpack.c.b16 %v6377, %v6375
        %v6402 = vpack.c.b16 %v6378, %v6376
        %v6403 = vpack.c.b16 %v6381, %v6379
        %v6404 = vpack.c.b16 %v6382, %v6380
        %v6405 = vpack.c.b16 %v6385, %v6383
        %v6406 = vpack.c.b16 %v6386, %v6384
        %v6407 = vpack.c.b16 %v6389, %v6387
        %v6408 = vpack.c.b16 %v6390, %v6388
        %v6409 = vpack.c.b16 %v6393, %v6391
        %v6410 = vpack.c.b16 %v6394, %v6392
        %6427 = vmatprep.subr.bf16.mxu0 %v6396
        %6428 = vmatpush1.bf16.msra.mxu0 %v6395
        %6429 = vmatprep.subr.bf16.mxu0 %v6398
        %6430 = vmatpush1.bf16.msra.mxu0 %v6397
        %6431 = vmatprep.subr.bf16.mxu0 %v6400
        %6432 = vmatpush1.bf16.msra.mxu0 %v6399
        %6433 = vmatprep.subr.bf16.mxu0 %v6402
        %6434 = vmatpush1.bf16.msra.mxu0 %v6401
        %6435 = vmatprep.subr.bf16.mxu0 %v6404
        %6436 = vmatpush1.bf16.msra.mxu0 %v6403
        %6437 = vmatprep.subr.bf16.mxu0 %v6406
        %6438 = vmatpush1.bf16.msra.mxu0 %v6405
        %6439 = vmatprep.subr.bf16.mxu0 %v6408
        %6440 = vmatpush1.bf16.msra.mxu0 %v6407
        %6441 = vmatprep.subr.bf16.mxu0 %v6410
        %6442 = vmatpush1.bf16.msra.mxu0 %v6409
        %6443 = vmatprep.subr.bf16.mxu0 0
        %6444 = vmatpush1.bf16.msra.mxu0 0
        %6445 = vmatprep.subr.bf16.mxu0 0
        %6446 = vmatpush1.bf16.msra.mxu0 0
        %6447 = vmatprep.subr.bf16.mxu0 0
        %6448 = vmatpush1.bf16.msra.mxu0 0
        %6449 = vmatprep.subr.bf16.mxu0 0
        %6450 = vmatpush1.bf16.msra.mxu0 0
        %6451 = vmatprep.subr.bf16.mxu0 0
        %6452 = vmatpush1.bf16.msra.mxu0 0
        %6453 = vmatprep.subr.bf16.mxu0 0
        %6454 = vmatpush1.bf16.msra.mxu0 0
        %6455 = vmatprep.subr.bf16.mxu0 0
        %6456 = vmatpush1.bf16.msra.mxu0 0
        %6457 = vmatprep.subr.bf16.mxu0 0
        %6458 = vmatpush1.bf16.msra.mxu0 0
        %6459 = vmatprep.mubr.bf16.mxu0 0
        %6460 = vmatmul.mubr.bf16.gmra.mrb[0].mxu0 %v6318
        %v6461 = vpop.f32.mrb[0].mxu0
        %v6462 = vadd.f32 %v6340, %v6461
        %v6463 = vpop.f32.mrb[0].mxu0
        %v6464 = vadd.f32 %v6344, %v6463
        %v6465 = vpop.f32.mrb[0].mxu0
        %v6466 = vpop.f32.mrb[0].mxu0
        %6467 = vdwg.mxu0
        %v6468 = vmax.f32 %v6462, 0.0
        %v6469 = vmax.f32 %v6464, 0.0
        %v6470 = vpack.c.bf16 %v6468, %v6468
        %v6471 = vpack.c.bf16 %v6469, %v6469
        %v6472 = vld [vmem:[#allocation13] sm:$0xf]
        %v6473 = vld [vmem:[#allocation13 + $0x4] sm:$0xf]
        %v6474 = vld [vmem:[#allocation13 + $0x8] sm:$0xf]
        %v6475 = vld [vmem:[#allocation13 + $0xc] sm:$0xf]
        %v6476 = vld [vmem:[#allocation13 + $0x10] sm:$0xf]
        %v6477 = vld [vmem:[#allocation13 + $0x14] sm:$0xf]
        %v6478 = vld [vmem:[#allocation13 + $0x18] sm:$0xf]
        %v6479 = vld [vmem:[#allocation13 + $0x1c] sm:$0xf]
        %v6480 = vld [vmem:[#allocation13 + $0x20] sm:$0xf]
        %v6481 = vld [vmem:[#allocation13 + $0x24] sm:$0xf]
        %v6482 = vld [vmem:[#allocation13 + $0x28] sm:$0xf]
        %v6483 = vld [vmem:[#allocation13 + $0x2c] sm:$0xf]
        %v6484 = vld [vmem:[#allocation13 + $0x30] sm:$0xf]
        %v6485 = vld [vmem:[#allocation13 + $0x34] sm:$0xf]
        %v6486 = vld [vmem:[#allocation13 + $0x38] sm:$0xf]
        %v6487 = vld [vmem:[#allocation13 + $0x3c] sm:$0xf]
        %v6488 = vld [vmem:[#allocation13 + $0x40] sm:$0xf]
        %v6489 = vld [vmem:[#allocation13 + $0x44] sm:$0xf]
        %v6490 = vld [vmem:[#allocation13 + $0x48] sm:$0xf]
        %v6491 = vld [vmem:[#allocation13 + $0x4c] sm:$0xf]
        %v6492 = vld [vmem:[#allocation13 + $0x50] sm:$0xf]
        %v6493 = vld [vmem:[#allocation13 + $0x54] sm:$0xf]
        %v6494 = vld [vmem:[#allocation13 + $0x58] sm:$0xf]
        %v6495 = vld [vmem:[#allocation13 + $0x5c] sm:$0xf]
        %v6496 = vld [vmem:[#allocation13 + $0x60] sm:$0xf]
        %v6497 = vld [vmem:[#allocation13 + $0x64] sm:$0xf]
        %v6498 = vld [vmem:[#allocation13 + $0x68] sm:$0xf]
        %v6499 = vld [vmem:[#allocation13 + $0x6c] sm:$0xf]
        %v6500 = vld [vmem:[#allocation13 + $0x70] sm:$0xf]
        %v6501 = vld [vmem:[#allocation13 + $0x74] sm:$0xf]
        %v6502 = vld [vmem:[#allocation13 + $0x78] sm:$0xf]
        %v6503 = vld [vmem:[#allocation13 + $0x7c] sm:$0xf]
        %v6504 = vld [vmem:[%s16] sm:$0x1]
        %v6506 = vlaneseq
        %v6507 = vshrl.u32 %v6506, 7
        %v6508 = vsub.s32 0, %v6507
        %v6509 = vrot.slane %v6504, %v6508
        %v6543 = vunpack.c.l.b16 %v6472
        %v6544 = vunpack.c.l.b16 %v6473
        %v6545 = vunpack.c.l.b16 %v6474
        %v6546 = vunpack.c.l.b16 %v6475
        %v6547 = vunpack.c.l.b16 %v6476
        %v6548 = vunpack.c.l.b16 %v6477
        %v6549 = vunpack.c.l.b16 %v6478
        %v6550 = vunpack.c.l.b16 %v6479
        %v6551 = vunpack.c.l.b16 %v6480
        %v6552 = vunpack.c.l.b16 %v6481
        %v6553 = vunpack.c.l.b16 %v6482
        %v6554 = vunpack.c.l.b16 %v6483
        %v6555 = vunpack.c.l.b16 %v6484
        %v6556 = vunpack.c.l.b16 %v6485
        %v6557 = vunpack.c.l.b16 %v6486
        %v6558 = vunpack.c.l.b16 %v6487
        %v6559 = vunpack.c.l.b16 %v6488
        %v6560 = vunpack.c.l.b16 %v6489
        %v6561 = vunpack.c.l.b16 %v6490
        %v6562 = vunpack.c.l.b16 %v6491
        %v6563 = vunpack.c.l.b16 %v6492
        %v6564 = vunpack.c.l.b16 %v6493
        %v6565 = vunpack.c.l.b16 %v6494
        %v6566 = vunpack.c.l.b16 %v6495
        %v6567 = vunpack.c.l.b16 %v6496
        %v6568 = vunpack.c.l.b16 %v6497
        %v6569 = vunpack.c.l.b16 %v6498
        %v6570 = vunpack.c.l.b16 %v6499
        %v6571 = vunpack.c.l.b16 %v6500
        %v6572 = vunpack.c.l.b16 %v6501
        %v6573 = vunpack.c.l.b16 %v6502
        %v6574 = vunpack.c.l.b16 %v6503
        %v6575 = vpack.c.b16 %v6544, %v6543
        %v6576 = vpack.c.b16 %v6546, %v6545
        %v6577 = vpack.c.b16 %v6548, %v6547
        %v6578 = vpack.c.b16 %v6550, %v6549
        %v6579 = vpack.c.b16 %v6552, %v6551
        %v6580 = vpack.c.b16 %v6554, %v6553
        %v6581 = vpack.c.b16 %v6556, %v6555
        %v6582 = vpack.c.b16 %v6558, %v6557
        %v6583 = vpack.c.b16 %v6560, %v6559
        %v6584 = vpack.c.b16 %v6562, %v6561
        %v6585 = vpack.c.b16 %v6564, %v6563
        %v6586 = vpack.c.b16 %v6566, %v6565
        %v6587 = vpack.c.b16 %v6568, %v6567
        %v6588 = vpack.c.b16 %v6570, %v6569
        %v6589 = vpack.c.b16 %v6572, %v6571
        %v6590 = vpack.c.b16 %v6574, %v6573
        %6607 = vmatprep.subr.bf16.mxu0 0
        %6608 = vmatpush1.bf16.msra.mxu0 %v6575
        %6609 = vmatprep.subr.bf16.mxu0 0
        %6610 = vmatpush1.bf16.msra.mxu0 %v6576
        %6611 = vmatprep.subr.bf16.mxu0 0
        %6612 = vmatpush1.bf16.msra.mxu0 %v6577
        %6613 = vmatprep.subr.bf16.mxu0 0
        %6614 = vmatpush1.bf16.msra.mxu0 %v6578
        %6615 = vmatprep.subr.bf16.mxu0 0
        %6616 = vmatpush1.bf16.msra.mxu0 %v6579
        %6617 = vmatprep.subr.bf16.mxu0 0
        %6618 = vmatpush1.bf16.msra.mxu0 %v6580
        %6619 = vmatprep.subr.bf16.mxu0 0
        %6620 = vmatpush1.bf16.msra.mxu0 %v6581
        %6621 = vmatprep.subr.bf16.mxu0 0
        %6622 = vmatpush1.bf16.msra.mxu0 %v6582
        %6623 = vmatprep.subr.bf16.mxu0 0
        %6624 = vmatpush1.bf16.msra.mxu0 %v6583
        %6625 = vmatprep.subr.bf16.mxu0 0
        %6626 = vmatpush1.bf16.msra.mxu0 %v6584
        %6627 = vmatprep.subr.bf16.mxu0 0
        %6628 = vmatpush1.bf16.msra.mxu0 %v6585
        %6629 = vmatprep.subr.bf16.mxu0 0
        %6630 = vmatpush1.bf16.msra.mxu0 %v6586
        %6631 = vmatprep.subr.bf16.mxu0 0
        %6632 = vmatpush1.bf16.msra.mxu0 %v6587
        %6633 = vmatprep.subr.bf16.mxu0 0
        %6634 = vmatpush1.bf16.msra.mxu0 %v6588
        %6635 = vmatprep.subr.bf16.mxu0 0
        %6636 = vmatpush1.bf16.msra.mxu0 %v6589
        %6637 = vmatprep.subr.bf16.mxu0 0
        %6638 = vmatpush1.bf16.msra.mxu0 %v6590
        %6639 = vmatprep.mubr.bf16.mxu0 %v6471
        %6640 = vmatmul.mubr.bf16.gmra.mrb[0].mxu0 %v6470
        %v6641 = vpop.f32.mrb[0].mxu0
        %v6642 = vadd.f32 %v6509, %v6641
        %v6643 = vpop.f32.mrb[0].mxu0
        %v6644 = vpop.f32.mrb[0].mxu0
        %v6645 = vpop.f32.mrb[0].mxu0
        %6646 = vdwg.mxu0
        %v6647 = vadd.f32 %v6317, %v6642
        %v6648 = vld [vmem:[%s11] sm:$0x1]
        %v6649 = vld [vmem:[%s12] sm:$0x1]
        %6650 = vadd.xlane.f32.xlu0 %v6647
        %v6651 = vpop.xlane.xlu0 %6650
        %v6652 = vmul.f32 %v6651, %v6294
        %v6653 = vsub.f32 %v6647, %v6652
        %v6654 = vmul.f32 %v6653, %v6653
        %6655 = vadd.xlane.f32.xlu0 %v6654
        %v6656 = vpop.xlane.xlu0 %6655
        %v6657 = vmul.f32 %v6656, %v6294
        %v6658 = vadd.f32 %v6657, 1e-05
        %v6659 = vrsqrt.pop %v6658
        %v6660 = vmul.f32 %v6653, %v6659
        %v6662 = vlaneseq
        %v6663 = vshrl.u32 %v6662, 7
        %v6664 = vsub.s32 0, %v6663
        %v6665 = vrot.slane %v6648, %v6664
        %v6667 = vmul.f32 %v6660, %v6665
        %v6669 = vlaneseq
        %v6670 = vshrl.u32 %v6669, 7
        %v6671 = vsub.s32 0, %v6670
        %v6672 = vrot.slane %v6649, %v6671
        %v6674 = vadd.f32 %v6667, %v6672
        %6675 = vst [vmem:[%s686] sm:$0xff] %v6674
        %s6676 = sand.u32 %s419, 1
        %s6677 = scalar_lea.sflag [#allocation4], %s6676
        %s6678 = sand.u32 %s419, 1
        %s6679 = smul.addr %s6678, 8
        %s6680 = scalar_lea.vmem [#allocation14], %s6679
        // Predicated region
        $region117: #{tpu_custom_call.1} parent=87 // pred_check
          %p6681 = pneg %p429
        $region118: #{tpu_custom_call.1} parent=87 // pred_check_branch
          %6683 = sbr.rel (%p6681) target = $region120
        $region119: #{tpu_custom_call.1} parent=87 // pred_region
          %s6685 = ssub.s32 128, 128
          %6686 = vsyncadd %s6677, %s6685
          %s6687 = smul.addr %s39, 128
          %s6688 = scalar_lea.hbm %s17, %s6687
          %s6690 = sshll.u32 %s6680, 4
          %s6691 = int_to_ptr.vmem [resolvable:$true] %s6690
          %6693 = dma.vmem_to_hbm [thread:$0]  %s6691, 128, %s6688, %s6677
        $region120: #{tpu_custom_call.1} parent=87 // pred_fallthru
          _
      $region88: #{tpu_custom_call.1} parent=5 // pred_fallthru
        _
      %p6694 = scmp.le.s32.totalorder 2, %s34
      // Predicated region
      $region121: #{tpu_custom_call.1} parent=5 // pred_check
        %p6695 = pneg %p6694
      $region122: #{tpu_custom_call.1} parent=5 // pred_check_branch
        %6697 = sbr.rel (%p6695) target = $region124
      $region123: #{tpu_custom_call.1} parent=5 // pred_region
        %s6698 = ssub.s32 %s34, 2
        // Predicated region
        $region125: #{tpu_custom_call.1} parent=123 // pred_check
          %p6699 = pneg %p435
        $region126: #{tpu_custom_call.1} parent=123 // pred_check_branch
          %6701 = sbr.rel (%p6699) target = $region128
        $region127: #{tpu_custom_call.1} parent=123 // pred_region
          %s6702 = sand.u32 %s420, 1
          %s6703 = scalar_lea.sflag [#allocation4], %s6702
          %s6704 = sand.u32 %s420, 1
          %s6705 = smul.addr %s6704, 8
          %s6706 = scalar_lea.vmem [#allocation14], %s6705
          %6707 = dma.done %s6703, 128
        $region128: #{tpu_custom_call.1} parent=123 // pred_fallthru
          _
      $region124: #{tpu_custom_call.1} parent=5 // pred_fallthru
        _
    $region6: #{tpu_custom_call.1} parent=1 // loop_footer
      %s38 = sadd.s32 1, %s34
    $region7: #{tpu_custom_call.1} parent=1 // loop_footer_branch
      %33 = sbr.rel target = $region3
    $region8: #{tpu_custom_call.1} parent=1 // loop_exit
      _
    %6708 = vsyncpa [#allocation3], 1
    %s6709 = scalar_lea.sflag [#allocation3], 1
    %6710 = vsyncpa %s6709, 1
    %6711 = vsyncpa [#allocation6], 1
    %s6712 = scalar_lea.sflag [#allocation6], 1
    %6713 = vsyncpa %s6712, 1
    %6714 = vsyncpa [#allocation9], 1
    %6715 = vsyncpa [#allocation12], 1
    %6716 = vsyncpa [#allocation4], 1
    %s6717 = scalar_lea.sflag [#allocation4], 1
    %6718 = vsyncpa %s6717, 1

</llo_original>
